<compile_context>
chip_gen: v5e
topology: v5e:2x2
jax: 0.10.0
libtpu: 0.0.40
codegen_flags: <defaults>
</compile_context>

<pallas_src>
import math

import jax
import jax.numpy as jnp
from jax import lax
from jax.experimental import pallas as pl
from jax.experimental.pallas import tpu as pltpu

# Safe on v5e/v6e (128 MiB phys) and v7x (64 MiB phys); per-step buffers of
# this kernel are ~1-2 MiB at the tested sizes.
_VMEM_LIMIT = 32 * 1024 * 1024
_COMPUTE_DTYPE = jnp.bfloat16


def _pick_tile(dim, target, mult):
    """Largest tile <= target that is a multiple of `mult` and divides dim."""
    t = min(target, dim)
    t -= t % mult
    while t >= mult:
        if dim % t == 0:
            return t
        t -= mult
    return dim  # full-extent block is always legal


# ------------------------------ projections -------------------------------- #

def _linear_kernel(x_ref, w_ref, o_ref, acc_ref):
    @pl.when(pl.program_id(2) == 0)
    def _init():
        acc_ref[...] = jnp.zeros_like(acc_ref)

    # bf16 MXU operands, f32 accumulation.
    acc_ref[...] += jnp.dot(x_ref[...].astype(w_ref.dtype), w_ref[...],
                            preferred_element_type=jnp.float32)

    @pl.when(pl.program_id(2) == pl.num_programs(2) - 1)
    def _store():
        o_ref[...] = acc_ref[...].astype(o_ref.dtype)


def pallas_linear(x, w, *, out_dtype=None, tm=256, tn=256, tk=512):
    """y = x @ w as a tiled, pipelined MXU matmul with fp32 VMEM accumulator."""
    M, K = x.shape
    K2, N = w.shape
    assert K == K2
    out_dtype = out_dtype or x.dtype
    tm = _pick_tile(M, tm, 8)      # v5e prefers smaller tn; 256 fills v6e/v7x MXU
    tn = _pick_tile(N, tn, 128)
    tk = _pick_tile(K, tk, 128)
    grid = (M // tm, N // tn, K // tk)
    return pl.pallas_call(
        _linear_kernel,
        out_shape=jax.ShapeDtypeStruct((M, N), out_dtype),
        grid=grid,
        in_specs=[pl.BlockSpec((tm, tk), lambda i, j, k: (i, k)),
                  pl.BlockSpec((tk, tn), lambda i, j, k: (k, j))],
        out_specs=pl.BlockSpec((tm, tn), lambda i, j, k: (i, j)),
        scratch_shapes=[pltpu.VMEM((tm, tn), jnp.float32)],
        compiler_params=pltpu.CompilerParams(
            dimension_semantics=("parallel", "parallel", "arbitrary"),
            vmem_limit_bytes=_VMEM_LIMIT),
    )(x, w)


# ------------------- banded attention + fused output proj ------------------ #

def _attn_out_kernel(q_ref, k_ref, v_ref, pe_ref, bias_ref, wo_ref,
                     o_ref, acc_ref):
    qi = pl.program_id(1)                  # query tile
    h = pl.program_id(2)                   # head (reduction axis for out-proj)
    tq, d = q_ref.shape[1], q_ref.shape[2]
    lt = pe_ref.shape[2]                   # slab width = TQ + span

    @pl.when(h == 0)
    def _init():
        acc_ref[...] = jnp.zeros_like(acc_ref)

    q = q_ref[0]                                           # (TQ, D)  bf16
    r0 = pl.multiple_of(qi * tq, 8)                        # slab row offset
    c0 = pl.multiple_of(h * d, 128)                        # head column offset
    ks = k_ref[0, pl.ds(r0, lt), pl.ds(c0, d)]             # (LT, D)  bf16
    vs = v_ref[0, pl.ds(r0, lt), pl.ds(c0, d)]             # (LT, D)  bf16
    pe = pe_ref[0]                                         # (D, LT)  bf16

    # Content scores in absolute slab coordinates          (TQ, LT)  [MXU]
    cont = lax.dot_general(q, ks, (((1,), (1,)), ((), ())),
                           preferred_element_type=jnp.float32)
    # Positional scores, relative coords in columns [0, S)  (TQ, LT) [MXU]
    pos = jnp.dot(q, pe, preferred_element_type=jnp.float32)
    # Scatter relative -> absolute coords: row i rotated right by i so that
    # pos[i, s] lands on column i + s (one strided XLU roll; wrapped junk in
    # columns >= S lands outside the band and is removed by the bias mask).
    pos = pltpu.roll(pos, 0, 1, stride=1, stride_axis=0)

    # Precomputed band bias: 0 inside [i, i+span), -1e30 outside.
    scores = cont + pos + bias_ref[...]
    m = jnp.max(scores, axis=-1, keepdims=True)
    e = jnp.exp(scores - m)                                # masked -> underflow 0
    denom = jnp.sum(e, axis=-1, keepdims=True)
    w = e * pl.reciprocal(denom, approx=True)              # EUP vrcp

    # TODO(synk): dropout omitted (p = 0 / eval mode); adaptive span disabled.
    head_out = jnp.dot(w.astype(vs.dtype), vs,
                       preferred_element_type=jnp.float32)  # (TQ, D)  [MXU]

    # Fused output projection: accumulate head contribution into (TQ, H).
    wo = wo_ref[pl.ds(c0, d), :]                            # (D, H)   bf16
    acc_ref[...] += jnp.dot(head_out.astype(wo.dtype), wo,
                            preferred_element_type=jnp.float32)

    @pl.when(h == pl.num_programs(2) - 1)
    def _store():
        o_ref[0] = acc_ref[...].astype(o_ref.dtype)


def pallas_attention_outproj(q, k, v, key_pe, w_oT, *, head_dim, tq, out_dtype):
    """Banded attention + output projection.

    q: (B, M, H); k, v: (B, L, H) with L = M + span; key_pe: (1, D, span);
    w_oT: (H, H).  Heads are lane-axis slices selected in-kernel; output is
    written directly in (B, M, H) layout with lane-dense 256-wide stores.
    """
    B, M, H = q.shape
    L = k.shape[1]
    D = head_dim
    S = key_pe.shape[2]
    K = H // D
    assert H % D == 0 and L == M + S
    assert D % 128 == 0, "head_dim must be lane aligned (multiple of 128)"
    assert tq % 8 == 0 and M % tq == 0, (M, tq)
    lt = tq + S

    cdt = _COMPUTE_DTYPE
    q = q.astype(cdt)
    k = k.astype(cdt)
    v = v.astype(cdt)
    w_oT = w_oT.astype(cdt)
    # Zero-pad key_pe to the slab width once so q @ pe lands in columns [0, S).
    pe = jnp.pad(key_pe.astype(cdt), ((0, 0), (0, 0), (0, lt - S)))
    # Hoisted band mask as an additive bias tile (identical for every tile).
    row = jnp.arange(tq, dtype=jnp.int32)[:, None]
    col = jnp.arange(lt, dtype=jnp.int32)[None, :]
    rel = col - row
    band_bias = jnp.where((rel >= 0) & (rel < S), 0.0, -1e30).astype(jnp.float32)

    # Grid: batch (even leading parallel axis -> balanced on v7x's 2 TCs),
    # query tile (parallel), head (innermost reduction for the fused out-proj).
    grid = (B, M // tq, K)
    # k/v blocks are the full (L, H) sequence per batch -> DMA'd once per b.
    # TODO(synk): for very large L*H, switch k/v to memory_space=pl.ANY with a
    # manual (TQ+S, D) slab double-buffer to stay inside v7x's 64 MiB VMEM.
    in_specs = [
        pl.BlockSpec((1, tq, D), lambda b, qi, h: (b, qi, h)),   # q
        pl.BlockSpec((1, L, H), lambda b, qi, h: (b, 0, 0)),     # k (resident)
        pl.BlockSpec((1, L, H), lambda b, qi, h: (b, 0, 0)),     # v (resident)
        pl.BlockSpec((1, D, lt), lambda b, qi, h: (0, 0, 0)),    # key_pe
        pl.BlockSpec((tq, lt), lambda b, qi, h: (0, 0)),         # band bias
        pl.BlockSpec((H, H), lambda b, qi, h: (0, 0)),           # W_o^T
    ]
    out_spec = pl.BlockSpec((1, tq, H), lambda b, qi, h: (b, qi, 0))

    return pl.pallas_call(
        _attn_out_kernel,
        out_shape=jax.ShapeDtypeStruct((B, M, H), out_dtype),
        grid=grid,
        in_specs=in_specs,
        out_specs=out_spec,
        scratch_shapes=[pltpu.VMEM((tq, H), jnp.float32)],
        compiler_params=pltpu.CompilerParams(
            dimension_semantics=("parallel", "parallel", "arbitrary"),
            vmem_limit_bytes=_VMEM_LIMIT),
    )(q, k, v, pe, band_bias, w_oT)


def _pick_query_tile(M, S, max_tq=128):
    """Sublane-aligned tile dividing M; prefer lane-aligned slab width TQ+S."""
    start = min(max_tq, M)
    start -= start % 8
    cands = [t for t in range(start, 7, -8) if M % t == 0]
    if not cands:
        raise ValueError(f"no valid query tile for M={M}")
    for t in cands:
        if (t + S) % 128 == 0:
            return t
    return cands[0]


# ------------------------------ module wrapper ------------------------------ #

class MultiHeadSeqAttentionPallas:
    def __init__(self, hidden_size, nb_heads, attn_span, key):
        assert hidden_size % nb_heads == 0
        self.H = hidden_size
        self.K = nb_heads
        self.D = hidden_size // nb_heads
        self.S = attn_span
        k1, k2, k3, k4 = jax.random.split(key, 4)
        init = lambda kk: (jax.random.normal(
            kk, (hidden_size, hidden_size), jnp.float32) * 0.05)
        # f32 master weights (PyTorch nn.Linear layout is (out, in); y = x @ W.T)
        self.W_q, self.W_k, self.W_v, self.W_o = init(k1), init(k2), init(k3), init(k4)
        # bf16 kernel copies; 1/sqrt(D) folded into W_q once at init.
        scale = 1.0 / math.sqrt(self.D)
        self.W_qT_k = (self.W_q.T * scale).astype(_COMPUTE_DTYPE)
        self.W_kT_k = self.W_k.T.astype(_COMPUTE_DTYPE)
        self.W_vT_k = self.W_v.T.astype(_COMPUTE_DTYPE)
        self.W_oT_k = self.W_o.T.astype(_COMPUTE_DTYPE)

    def __call__(self, query, key, value, key_pe):
        B, M, H = query.shape
        L = key.shape[1]
        cdt = _COMPUTE_DTYPE
        # TODO(synk): when key is value, stack W_k^T|W_v^T into (H, 2H) and do a
        # single fused projection call; kept separate here since key != value.
        q = pallas_linear(query.reshape(B * M, H), self.W_qT_k,
                          out_dtype=cdt).reshape(B, M, H)
        k = pallas_linear(key.reshape(B * L, H), self.W_kT_k,
                          out_dtype=cdt).reshape(B, L, H)
        v = pallas_linear(value.reshape(B * L, H), self.W_vT_k,
                          out_dtype=cdt).reshape(B, L, H)
        tq = _pick_query_tile(M, self.S)
        out = pallas_attention_outproj(q, k, v, key_pe, self.W_oT_k,
                                       head_dim=self.D, tq=tq,
                                       out_dtype=query.dtype)
        return out


# --------------------- pure-JAX reference (PyTorch path) -------------------- #

def _skew_ref(X, pad_value):
    B, M, L = X.shape
    X = jnp.pad(X, ((0, 0), (0, 0), (0, M + 1)), constant_values=pad_value)
    X = X.reshape(B, -1)[:, :-M]
    return X.reshape(B, M, M + L)


def _unskew_ref(X):
    B, M, L = X.shape
    Lr = L - M
    X = X.reshape(B, -1)
    X = jnp.pad(X, ((0, 0), (0, M)))
    X = X.reshape(B, M, L + 1)
    return X[:, :, :Lr]


def reference_forward(mod, query, key, value, key_pe):
    hi = lax.Precision.HIGHEST
    B, M, H = query.shape
    K, D = mod.K, mod.D
    q = jnp.matmul(query, mod.W_q.T, precision=hi)
    k = jnp.matmul(key, mod.W_k.T, precision=hi)
    v = jnp.matmul(value, mod.W_v.T, precision=hi)

    def hr(x):
        B_, T, _ = x.shape
        return x.reshape(B_, T, K, D).transpose(0, 2, 1, 3).reshape(B_ * K, T, D)

    q, k, v = hr(q), hr(k), hr(v)
    attn_cont = jnp.matmul(q, jnp.swapaxes(k, -1, -2), precision=hi)
    attn_cont = _unskew_ref(attn_cont)
    attn_pos = jnp.matmul(q, key_pe, precision=hi)
    attn = (attn_cont + attn_pos) / math.sqrt(D)
    attn = jax.nn.softmax(attn, axis=-1)
    attn_sk = _skew_ref(attn, 0.0)
    out = jnp.matmul(attn_sk, v, precision=hi)
    out = out.reshape(B, K, M, D).transpose(0, 2, 1, 3).reshape(B, M, H)
    return jnp.matmul(out, mod.W_o.T, precision=hi)


# ----------------------------------- main ----------------------------------- #

if __name__ == "__main__":
    B = 2
    H = 256            # hidden size
    NB_HEADS = 2       # -> head_dim D = 128 (lane aligned)
    M = 256            # query length (4 query tiles of 64)
    SPAN = 64          # attention span
    D = H // NB_HEADS
    L = M + SPAN       # key/value length = query length + span

    root = jax.random.PRNGKey(0)
    kq, kk, kv, kpe, kw = jax.random.split(root, 5)
    query = jax.random.normal(kq, (B, M, H), jnp.float32)
    key = jax.random.normal(kk, (B, L, H), jnp.float32)
    value = jax.random.normal(kv, (B, L, H), jnp.float32)
    key_pe = jax.random.normal(kpe, (1, D, SPAN), jnp.float32) * 0.5

    mod = MultiHeadSeqAttentionPallas(H, NB_HEADS, SPAN, kw)
    fwd = jax.jit(lambda q_, k_, v_, pe_: mod(q_, k_, v_, pe_))
    out = jax.block_until_ready(fwd(query, key, value, key_pe))
    assert out.shape == (B, M, H)

    ref = reference_forward(mod, query, key, value, key_pe)
    num = jnp.linalg.norm((out - ref).astype(jnp.float32))
    den = jnp.linalg.norm(ref.astype(jnp.float32))
    rel_err = float(num / den)
    # tolerance absorbs bf16 MXU operands + approx reciprocal vs f32 reference
    assert rel_err < 5e-2, rel_err
    print("KERNEL_OK")
</pallas_src>

<mosaic_0001>
module attributes {stable_mosaic.version = 11 : i64} {
  func.func @_linear_kernel(%arg0: i32, %arg1: i32, %arg2: i32, %arg3: memref<256x256xf32, #tpu.memory_space<vmem>>, %arg4: memref<256x256xbf16, #tpu.memory_space<vmem>>, %arg5: memref<256x256xbf16, #tpu.memory_space<vmem>>, %arg6: memref<256x256xf32, #tpu.memory_space<vmem>>) attributes {dimension_semantics = [#tpu.dimension_semantics<parallel>, #tpu.dimension_semantics<parallel>, #tpu.dimension_semantics<arbitrary>], iteration_bounds = array<i64: 2, 1, 1>, scalar_prefetch = 0 : i64, scratch_operands = 1 : i64, tpu.core_type = #tpu.core_type<tc>, window_params = [{transform_indices = @transform_0, window_bounds = array<i64: 256, 256>}, {transform_indices = @transform_1, window_bounds = array<i64: 256, 256>}, {transform_indices = @transform_2, window_bounds = array<i64: 256, 256>}]} {
    %c0_i32 = arith.constant 0 : i32
    %0 = arith.cmpi eq, %arg2, %c0_i32 : i32
    %1 = arith.extui %0 : i1 to i32
    %c0_i32_0 = arith.constant 0 : i32
    %2 = arith.cmpi ne, %1, %c0_i32_0 : i32
    scf.if %2 {
      %cst_10 = arith.constant 0.000000e+00 : f32
      %13 = vector.broadcast %cst_10 : f32 to vector<256x256xf32>
      %c0_11 = arith.constant 0 : index
      %c0_12 = arith.constant 0 : index
      %14 = vector.load %arg6[%c0_11, %c0_12] : memref<256x256xf32, #tpu.memory_space<vmem>>, vector<256x256xf32>
      tpu.vector_store %arg6[%c0_11, %c0_12], %13 {strides = array<i32>} : memref<256x256xf32, #tpu.memory_space<vmem>>, vector<256x256xf32>,
    } else {
    }
    %c0 = arith.constant 0 : index
    %c0_1 = arith.constant 0 : index
    %3 = vector.load %arg6[%c0, %c0_1] : memref<256x256xf32, #tpu.memory_space<vmem>>, vector<256x256xf32>
    %c0_2 = arith.constant 0 : index
    %c0_3 = arith.constant 0 : index
    %4 = vector.load %arg3[%c0_2, %c0_3] : memref<256x256xf32, #tpu.memory_space<vmem>>, vector<256x256xf32>
    %5 = arith.truncf %4 : vector<256x256xf32> to vector<256x256xbf16>
    %c0_4 = arith.constant 0 : index
    %c0_5 = arith.constant 0 : index
    %6 = vector.load %arg4[%c0_4, %c0_5] : memref<256x256xbf16, #tpu.memory_space<vmem>>, vector<256x256xbf16>
    %cst = arith.constant dense<0.000000e+00> : vector<256x256xf32>
    %7 = tpu.matmul %5, %6, %cst {dimension_numbers = #tpu.dot_dimension_numbers<[1], [0], [0], [1], [0, 0, 1, 1], [], []>} : vector<256x256xbf16>, vector<256x256xbf16>, vector<256x256xf32> -> vector<256x256xf32>
    %8 = arith.addf %3, %7 : vector<256x256xf32>
    %c0_6 = arith.constant 0 : index
    %c0_7 = arith.constant 0 : index
    %9 = vector.load %arg6[%c0_6, %c0_7] : memref<256x256xf32, #tpu.memory_space<vmem>>, vector<256x256xf32>
    tpu.vector_store %arg6[%c0_6, %c0_7], %8 {strides = array<i32>} : memref<256x256xf32, #tpu.memory_space<vmem>>, vector<256x256xf32>,
    %c0_i32_8 = arith.constant 0 : i32
    %10 = arith.cmpi eq, %arg2, %c0_i32_8 : i32
    %11 = arith.extui %10 : i1 to i32
    %c0_i32_9 = arith.constant 0 : i32
    %12 = arith.cmpi ne, %11, %c0_i32_9 : i32
    scf.if %12 {
      %c0_10 = arith.constant 0 : index
      %c0_11 = arith.constant 0 : index
      %13 = vector.load %arg6[%c0_10, %c0_11] : memref<256x256xf32, #tpu.memory_space<vmem>>, vector<256x256xf32>
      %14 = arith.truncf %13 : vector<256x256xf32> to vector<256x256xbf16>
      %c0_12 = arith.constant 0 : index
      %c0_13 = arith.constant 0 : index
      %15 = vector.load %arg5[%c0_12, %c0_13] : memref<256x256xbf16, #tpu.memory_space<vmem>>, vector<256x256xbf16>
      tpu.vector_store %arg5[%c0_12, %c0_13], %14 {strides = array<i32>} : memref<256x256xbf16, #tpu.memory_space<vmem>>, vector<256x256xbf16>,
    } else {
    }
    return
  }
  func.func @transform_0(%arg0: i32, %arg1: i32, %arg2: i32) -> (i32, i32) {
    %c0_i32 = arith.constant 0 : i32
    return %arg0, %arg2 : i32, i32
  }
  func.func @transform_1(%arg0: i32, %arg1: i32, %arg2: i32) -> (i32, i32) {
    %c0_i32 = arith.constant 0 : i32
    return %arg2, %arg1 : i32, i32
  }
  func.func @transform_2(%arg0: i32, %arg1: i32, %arg2: i32) -> (i32, i32) {
    %c0_i32 = arith.constant 0 : i32
    return %arg0, %arg1 : i32, i32
  }
}

module attributes {stable_mosaic.version = 11 : i64} {
  func.func @_linear_kernel(%arg0: i32, %arg1: i32, %arg2: i32, %arg3: memref<160x256xf32, #tpu.memory_space<vmem>>, %arg4: memref<256x256xbf16, #tpu.memory_space<vmem>>, %arg5: memref<160x256xbf16, #tpu.memory_space<vmem>>, %arg6: memref<160x256xf32, #tpu.memory_space<vmem>>) attributes {dimension_semantics = [#tpu.dimension_semantics<parallel>, #tpu.dimension_semantics<parallel>, #tpu.dimension_semantics<arbitrary>], iteration_bounds = array<i64: 4, 1, 1>, scalar_prefetch = 0 : i64, scratch_operands = 1 : i64, tpu.core_type = #tpu.core_type<tc>, window_params = [{transform_indices = @transform_0, window_bounds = array<i64: 160, 256>}, {transform_indices = @transform_1, window_bounds = array<i64: 256, 256>}, {transform_indices = @transform_2, window_bounds = array<i64: 160, 256>}]} {
    %c0_i32 = arith.constant 0 : i32
    %0 = arith.cmpi eq, %arg2, %c0_i32 : i32
    %1 = arith.extui %0 : i1 to i32
    %c0_i32_0 = arith.constant 0 : i32
    %2 = arith.cmpi ne, %1, %c0_i32_0 : i32
    scf.if %2 {
      %cst_10 = arith.constant 0.000000e+00 : f32
      %13 = vector.broadcast %cst_10 : f32 to vector<160x256xf32>
      %c0_11 = arith.constant 0 : index
      %c0_12 = arith.constant 0 : index
      %14 = vector.load %arg6[%c0_11, %c0_12] : memref<160x256xf32, #tpu.memory_space<vmem>>, vector<160x256xf32>
      tpu.vector_store %arg6[%c0_11, %c0_12], %13 {strides = array<i32>} : memref<160x256xf32, #tpu.memory_space<vmem>>, vector<160x256xf32>,
    } else {
    }
    %c0 = arith.constant 0 : index
    %c0_1 = arith.constant 0 : index
    %3 = vector.load %arg6[%c0, %c0_1] : memref<160x256xf32, #tpu.memory_space<vmem>>, vector<160x256xf32>
    %c0_2 = arith.constant 0 : index
    %c0_3 = arith.constant 0 : index
    %4 = vector.load %arg3[%c0_2, %c0_3] : memref<160x256xf32, #tpu.memory_space<vmem>>, vector<160x256xf32>
    %5 = arith.truncf %4 : vector<160x256xf32> to vector<160x256xbf16>
    %c0_4 = arith.constant 0 : index
    %c0_5 = arith.constant 0 : index
    %6 = vector.load %arg4[%c0_4, %c0_5] : memref<256x256xbf16, #tpu.memory_space<vmem>>, vector<256x256xbf16>
    %cst = arith.constant dense<0.000000e+00> : vector<160x256xf32>
    %7 = tpu.matmul %5, %6, %cst {dimension_numbers = #tpu.dot_dimension_numbers<[1], [0], [0], [1], [0, 0, 1, 1], [], []>} : vector<160x256xbf16>, vector<256x256xbf16>, vector<160x256xf32> -> vector<160x256xf32>
    %8 = arith.addf %3, %7 : vector<160x256xf32>
    %c0_6 = arith.constant 0 : index
    %c0_7 = arith.constant 0 : index
    %9 = vector.load %arg6[%c0_6, %c0_7] : memref<160x256xf32, #tpu.memory_space<vmem>>, vector<160x256xf32>
    tpu.vector_store %arg6[%c0_6, %c0_7], %8 {strides = array<i32>} : memref<160x256xf32, #tpu.memory_space<vmem>>, vector<160x256xf32>,
    %c0_i32_8 = arith.constant 0 : i32
    %10 = arith.cmpi eq, %arg2, %c0_i32_8 : i32
    %11 = arith.extui %10 : i1 to i32
    %c0_i32_9 = arith.constant 0 : i32
    %12 = arith.cmpi ne, %11, %c0_i32_9 : i32
    scf.if %12 {
      %c0_10 = arith.constant 0 : index
      %c0_11 = arith.constant 0 : index
      %13 = vector.load %arg6[%c0_10, %c0_11] : memref<160x256xf32, #tpu.memory_space<vmem>>, vector<160x256xf32>
      %14 = arith.truncf %13 : vector<160x256xf32> to vector<160x256xbf16>
      %c0_12 = arith.constant 0 : index
      %c0_13 = arith.constant 0 : index
      %15 = vector.load %arg5[%c0_12, %c0_13] : memref<160x256xbf16, #tpu.memory_space<vmem>>, vector<160x256xbf16>
      tpu.vector_store %arg5[%c0_12, %c0_13], %14 {strides = array<i32>} : memref<160x256xbf16, #tpu.memory_space<vmem>>, vector<160x256xbf16>,
    } else {
    }
    return
  }
  func.func @transform_0(%arg0: i32, %arg1: i32, %arg2: i32) -> (i32, i32) {
    %c0_i32 = arith.constant 0 : i32
    return %arg0, %arg2 : i32, i32
  }
  func.func @transform_1(%arg0: i32, %arg1: i32, %arg2: i32) -> (i32, i32) {
    %c0_i32 = arith.constant 0 : i32
    return %arg2, %arg1 : i32, i32
  }
  func.func @transform_2(%arg0: i32, %arg1: i32, %arg2: i32) -> (i32, i32) {
    %c0_i32 = arith.constant 0 : i32
    return %arg0, %arg1 : i32, i32
  }
}

module attributes {stable_mosaic.version = 11 : i64} {
  func.func @_attn_out_kernel(%arg0: i32, %arg1: i32, %arg2: i32, %arg3: memref<1x64x128xbf16, #tpu.memory_space<vmem>>, %arg4: memref<1x320x256xbf16, #tpu.memory_space<vmem>>, %arg5: memref<1x320x256xbf16, #tpu.memory_space<vmem>>, %arg6: memref<1x128x128xbf16, #tpu.memory_space<vmem>>, %arg7: memref<64x128xf32, #tpu.memory_space<vmem>>, %arg8: memref<256x256xbf16, #tpu.memory_space<vmem>>, %arg9: memref<1x64x256xf32, #tpu.memory_space<vmem>>, %arg10: memref<64x256xf32, #tpu.memory_space<vmem>>) attributes {dimension_semantics = [#tpu.dimension_semantics<parallel>, #tpu.dimension_semantics<parallel>, #tpu.dimension_semantics<arbitrary>], iteration_bounds = array<i64: 2, 4, 2>, scalar_prefetch = 0 : i64, scratch_operands = 1 : i64, tpu.core_type = #tpu.core_type<tc>, window_params = [{transform_indices = @transform_0, window_bounds = array<i64: 1, 64, 128>}, {transform_indices = @transform_1, window_bounds = array<i64: 1, 320, 256>}, {transform_indices = @transform_2, window_bounds = array<i64: 1, 320, 256>}, {pipeline_mode = #tpu.pipeline_mode<synchronous>, transform_indices = @transform_3, window_bounds = array<i64: 1, 128, 128>}, {pipeline_mode = #tpu.pipeline_mode<synchronous>, transform_indices = @transform_4, window_bounds = array<i64: 64, 128>}, {pipeline_mode = #tpu.pipeline_mode<synchronous>, transform_indices = @transform_5, window_bounds = array<i64: 256, 256>}, {transform_indices = @transform_6, window_bounds = array<i64: 1, 64, 256>}]} {
    %c0_i32 = arith.constant 0 : i32
    %0 = arith.cmpi eq, %arg2, %c0_i32 : i32
    %1 = arith.extui %0 : i1 to i32
    %c0_i32_0 = arith.constant 0 : i32
    %2 = arith.cmpi ne, %1, %c0_i32_0 : i32
    scf.if %2 {
      %cst_22 = arith.constant 0.000000e+00 : f32
      %47 = vector.broadcast %cst_22 : f32 to vector<64x256xf32>
      %c0_23 = arith.constant 0 : index
      %c0_24 = arith.constant 0 : index
      %48 = vector.load %arg10[%c0_23, %c0_24] : memref<64x256xf32, #tpu.memory_space<vmem>>, vector<64x256xf32>
      tpu.vector_store %arg10[%c0_23, %c0_24], %47 {strides = array<i32>} : memref<64x256xf32, #tpu.memory_space<vmem>>, vector<64x256xf32>,
    } else {
    }
    %c0 = arith.constant 0 : index
    %c0_1 = arith.constant 0 : index
    %c0_2 = arith.constant 0 : index
    %3 = vector.load %arg3[%c0, %c0_1, %c0_2] : memref<1x64x128xbf16, #tpu.memory_space<vmem>>, vector<1x64x128xbf16>
    %4 = vector.shape_cast %3 : vector<1x64x128xbf16> to vector<64x128xbf16>
    %c64_i32 = arith.constant 64 : i32
    %5 = arith.muli %arg1, %c64_i32 : i32
    %6 = tpu.assume_multiple %5, 8 : i32
    %c128_i32 = arith.constant 128 : i32
    %7 = arith.muli %arg2, %c128_i32 : i32
    %8 = tpu.assume_multiple %7, 128 : i32
    %c0_3 = arith.constant 0 : index
    %9 = arith.index_cast %6 : i32 to index
    %10 = arith.index_cast %8 : i32 to index
    %11 = vector.load %arg4[%c0_3, %9, %10] : memref<1x320x256xbf16, #tpu.memory_space<vmem>>, vector<1x128x128xbf16>
    %12 = vector.shape_cast %11 : vector<1x128x128xbf16> to vector<128x128xbf16>
    %c0_4 = arith.constant 0 : index
    %13 = arith.index_cast %6 : i32 to index
    %14 = arith.index_cast %8 : i32 to index
    %15 = vector.load %arg5[%c0_4, %13, %14] : memref<1x320x256xbf16, #tpu.memory_space<vmem>>, vector<1x128x128xbf16>
    %16 = vector.shape_cast %15 : vector<1x128x128xbf16> to vector<128x128xbf16>
    %c0_5 = arith.constant 0 : index
    %c0_6 = arith.constant 0 : index
    %c0_7 = arith.constant 0 : index
    %17 = vector.load %arg6[%c0_5, %c0_6, %c0_7] : memref<1x128x128xbf16, #tpu.memory_space<vmem>>, vector<1x128x128xbf16>
    %18 = vector.shape_cast %17 : vector<1x128x128xbf16> to vector<128x128xbf16>
    %cst = arith.constant dense<0.000000e+00> : vector<64x128xf32>
    %19 = tpu.matmul %4, %12, %cst {dimension_numbers = #tpu.dot_dimension_numbers<[1], [1], [0], [0], [0, 0, 1, 0], [], []>} : vector<64x128xbf16>, vector<128x128xbf16>, vector<64x128xf32> -> vector<64x128xf32>
    %cst_8 = arith.constant dense<0.000000e+00> : vector<64x128xf32>
    %20 = tpu.matmul %4, %18, %cst_8 {dimension_numbers = #tpu.dot_dimension_numbers<[1], [0], [0], [1], [0, 0, 1, 1], [], []>} : vector<64x128xbf16>, vector<128x128xbf16>, vector<64x128xf32> -> vector<64x128xf32>
    %c0_i32_9 = arith.constant 0 : i32
    %21 = tpu.dynamic_rotate %20 by %c0_i32_9 dim 1 {stride = 1 : si32, stride_dimension = 0 : si32} : vector<64x128xf32>, i32 -> vector<64x128xf32>
    %22 = arith.addf %19, %21 : vector<64x128xf32>
    %c0_10 = arith.constant 0 : index
    %c0_11 = arith.constant 0 : index
    %23 = vector.load %arg7[%c0_10, %c0_11] : memref<64x128xf32, #tpu.memory_space<vmem>>, vector<64x128xf32>
    %24 = arith.addf %22, %23 : vector<64x128xf32>
    %cst_12 = arith.constant dense<0xFF800000> : vector<64xf32>
    %25 = vector.multi_reduction <maximumf>, %24, %cst_12 [1] : vector<64x128xf32> to vector<64xf32>
    %26 = vector.shape_cast %25 : vector<64xf32> to vector<64x1xf32>
    %27 = vector.broadcast %26 : vector<64x1xf32> to vector<64x128xf32>
    %28 = arith.subf %24, %27 : vector<64x128xf32>
    %29 = math.exp %28 : vector<64x128xf32>
    %cst_13 = arith.constant dense<0.000000e+00> : vector<64xf32>
    %30 = vector.multi_reduction <add>, %29, %cst_13 [1] : vector<64x128xf32> to vector<64xf32>
    %31 = vector.shape_cast %30 : vector<64xf32> to vector<64x1xf32>
    %32 = tpu.reciprocal %31 {approx = true} : vector<64x1xf32> -> vector<64x1xf32>
    %33 = vector.broadcast %32 : vector<64x1xf32> to vector<64x128xf32>
    %34 = arith.mulf %29, %33 : vector<64x128xf32>
    %35 = arith.truncf %34 : vector<64x128xf32> to vector<64x128xbf16>
    %cst_14 = arith.constant dense<0.000000e+00> : vector<64x128xf32>
    %36 = tpu.matmul %35, %16, %cst_14 {dimension_numbers = #tpu.dot_dimension_numbers<[1], [0], [0], [1], [0, 0, 1, 1], [], []>} : vector<64x128xbf16>, vector<128x128xbf16>, vector<64x128xf32> -> vector<64x128xf32>
    %37 = arith.index_cast %8 : i32 to index
    %c0_15 = arith.constant 0 : index
    %38 = vector.load %arg8[%37, %c0_15] : memref<256x256xbf16, #tpu.memory_space<vmem>>, vector<128x256xbf16>
    %c0_16 = arith.constant 0 : index
    %c0_17 = arith.constant 0 : index
    %39 = vector.load %arg10[%c0_16, %c0_17] : memref<64x256xf32, #tpu.memory_space<vmem>>, vector<64x256xf32>
    %40 = arith.truncf %36 : vector<64x128xf32> to vector<64x128xbf16>
    %cst_18 = arith.constant dense<0.000000e+00> : vector<64x256xf32>
    %41 = tpu.matmul %40, %38, %cst_18 {dimension_numbers = #tpu.dot_dimension_numbers<[1], [0], [0], [1], [0, 0, 1, 1], [], []>} : vector<64x128xbf16>, vector<128x256xbf16>, vector<64x256xf32> -> vector<64x256xf32>
    %42 = arith.addf %39, %41 : vector<64x256xf32>
    %c0_19 = arith.constant 0 : index
    %c0_20 = arith.constant 0 : index
    %43 = vector.load %arg10[%c0_19, %c0_20] : memref<64x256xf32, #tpu.memory_space<vmem>>, vector<64x256xf32>
    tpu.vector_store %arg10[%c0_19, %c0_20], %42 {strides = array<i32>} : memref<64x256xf32, #tpu.memory_space<vmem>>, vector<64x256xf32>,
    %c1_i32 = arith.constant 1 : i32
    %44 = arith.cmpi eq, %arg2, %c1_i32 : i32
    %45 = arith.extui %44 : i1 to i32
    %c0_i32_21 = arith.constant 0 : i32
    %46 = arith.cmpi ne, %45, %c0_i32_21 : i32
    scf.if %46 {
      %c0_22 = arith.constant 0 : index
      %c0_23 = arith.constant 0 : index
      %47 = vector.load %arg10[%c0_22, %c0_23] : memref<64x256xf32, #tpu.memory_space<vmem>>, vector<64x256xf32>
      %c0_24 = arith.constant 0 : index
      %c0_25 = arith.constant 0 : index
      %c0_26 = arith.constant 0 : index
      %48 = vector.load %arg9[%c0_24, %c0_25, %c0_26] : memref<1x64x256xf32, #tpu.memory_space<vmem>>, vector<1x64x256xf32>
      %49 = vector.shape_cast %48 : vector<1x64x256xf32> to vector<64x256xf32>
      %50 = vector.shape_cast %47 : vector<64x256xf32> to vector<1x64x256xf32>
      tpu.vector_store %arg9[%c0_24, %c0_25, %c0_26], %50 {strides = array<i32>} : memref<1x64x256xf32, #tpu.memory_space<vmem>>, vector<1x64x256xf32>,
    } else {
    }
    return
  }
  func.func @transform_0(%arg0: i32, %arg1: i32, %arg2: i32) -> (i32, i32, i32) {
    %c0_i32 = arith.constant 0 : i32
    return %arg0, %arg1, %arg2 : i32, i32, i32
  }
  func.func @transform_1(%arg0: i32, %arg1: i32, %arg2: i32) -> (i32, i32, i32) {
    %c0_i32 = arith.constant 0 : i32
    %c0_i32_0 = arith.constant 0 : i32
    %c0_i32_1 = arith.constant 0 : i32
    return %arg0, %c0_i32, %c0_i32_0 : i32, i32, i32
  }
  func.func @transform_2(%arg0: i32, %arg1: i32, %arg2: i32) -> (i32, i32, i32) {
    %c0_i32 = arith.constant 0 : i32
    %c0_i32_0 = arith.constant 0 : i32
    %c0_i32_1 = arith.constant 0 : i32
    return %arg0, %c0_i32, %c0_i32_0 : i32, i32, i32
  }
  func.func @transform_3(%arg0: i32, %arg1: i32, %arg2: i32) -> (i32, i32, i32) {
    %c0_i32 = arith.constant 0 : i32
    %c0_i32_0 = arith.constant 0 : i32
    %c0_i32_1 = arith.constant 0 : i32
    %c0_i32_2 = arith.constant 0 : i32
    return %c0_i32, %c0_i32_0, %c0_i32_1 : i32, i32, i32
  }
  func.func @transform_4(%arg0: i32, %arg1: i32, %arg2: i32) -> (i32, i32) {
    %c0_i32 = arith.constant 0 : i32
    %c0_i32_0 = arith.constant 0 : i32
    %c0_i32_1 = arith.constant 0 : i32
    return %c0_i32, %c0_i32_0 : i32, i32
  }
  func.func @transform_5(%arg0: i32, %arg1: i32, %arg2: i32) -> (i32, i32) {
    %c0_i32 = arith.constant 0 : i32
    %c0_i32_0 = arith.constant 0 : i32
    %c0_i32_1 = arith.constant 0 : i32
    return %c0_i32, %c0_i32_0 : i32, i32
  }
  func.func @transform_6(%arg0: i32, %arg1: i32, %arg2: i32) -> (i32, i32, i32) {
    %c0_i32 = arith.constant 0 : i32
    %c0_i32_0 = arith.constant 0 : i32
    return %arg0, %arg1, %c0_i32 : i32, i32, i32
  }
}

</mosaic_0001>

<llo_original>
// kernel: _lambda_.5
$region0: #{_lambda_.5}
  #allocation0 [shape = 'u32[]', space=smem, size = 0x4, offset = 0x4, fixed_abs, tag = 'smem constant byte address 0x4 - core index']
  #allocation1 [shape = 'u32[72,128]{1,0:T(1,128)}', space=vmem, size = 0x9000, scoped, tag = 'internal scratch']
  #allocation2 [shape = 'f32[160,256]{1,0:T(8,128)}', space=vmem, size = 0x28000, scoped, tag = 'scratch operand']
  %s0 = inlined_call_operand.hbm [shape: f32[640,256], index: 0, kind: input, shape index: {}]
  %s1 = inlined_call_operand.hbm [shape: bf16[256,256], index: 1, kind: input, shape index: {}]
  %s2 = inlined_call_operand.vmem [shape: bf16[640,256], index: 2, kind: output, shape index: {}]
  %s3 = sld [smem:[#allocation0]]
  $region57: #{_lambda_.5} parent=0
    _
  %s5 = ssub.s32 1, %s3
  %s6 = scalar_select 0, %s5, %s3
  $region1: #{_lambda_.5} parent=0
    #allocation3 [shape = 'u8[327680]{0}', space=vmem, size = 0x50000, scoped, tag = 'input window, operand 0']
    #allocation4 [shape = 's32[2]{0}', space=sflag, size = 0x8, scoped, tag = 'scoped memory for _lambda_.5']
    #allocation5 [shape = 'u8[131072]{0}', space=vmem, size = 0x20000, scoped, tag = 'input window, operand 1, single buffered']
    #allocation6 [shape = 's32[1]{0}', space=sflag, size = 0x4, scoped, tag = 'scoped memory for _lambda_.5']
    %7 = vsyncpa [#allocation4], 0
    %s8 = scalar_lea.sflag [#allocation4], 1
    %9 = vsyncpa %s8, 0
    %10 = vsyncpa [#allocation6], 0
    loop: start=0, step=1, limit=6
    $region2: #{_lambda_.5} parent=1 // loop_pre_header
      _
    $region3: #{_lambda_.5} parent=1 // loop_header
      %s12 = sphi 0, %s16
      %p13 = scmp.ge.s32.totalorder %s12, 6
      %s19 = sphi 0, %s38
      %s20 = sphi 0, %s34
      %s21 = sphi 0, %s30
      %s22 = sphi 0, %s19
      %s23 = sphi 0, %s20
      %s24 = sphi 0, %s21
      %s25 = sphi 0, %s22
      %s26 = sphi 0, %s23
      %s27 = sphi 0, %s24
      %s43 = sphi 0, %s45
      %s46 = sphi 0, %s43
      %s47 = sphi 0, %s46
      %s63 = sphi 0, %s47
      %s71 = sphi 0, %s73
      %s74 = sphi 0, %s71
      %s75 = sphi 0, %s74
      %s91 = sphi 0, %s75
      %s99 = sphi 0, %s101
      %s102 = sphi 0, %s99
      %s103 = sphi 0, %s102
      %s119 = sphi 0, %s103
    $region4: #{_lambda_.5} parent=1 // loop_header_branch
      %15 = sbr.rel (%p13) target = $region8
    $region5: #{_lambda_.5} parent=1 // loop_body
      %s17 = ssub.s32 %s12, 1
      %s18 = ssub.s32 %s12, 2
      %s28 = sadd.s32 1, %s21
      %p29 = scmp.ge.s32.totalorder %s28, 1
      %s30 = scalar_select %p29, 0, %s28
      %s31 = sadd.s32 1, %s20
      %s32 = scalar_select %p29, %s31, %s20
      %p33 = scmp.ge.s32.totalorder %s32, 1
      %s34 = scalar_select %p33, 0, %s32
      %s35 = sadd.s32 1, %s19
      %s36 = scalar_select %p33, %s35, %s19
      %p37 = scmp.ge.s32.totalorder %s36, 4
      %s38 = scalar_select %p37, 0, %s36
      %s39 = ssub.s32 %s19, %s38
      %s40 = ssub.s32 %s21, %s30
      %s41 = sor.u32 %s39, %s40
      %p42 = scmp.eq.s32.totalorder %s41, 0
      %s44 = sadd.s32 %s43, 1
      %s45 = scalar_select %p42, %s43, %s44
      %p48 = pneg %p42
      %p49 = scmp.eq.s32.totalorder %s12, 3
      %p50 = por %p48, %p49
      %p51 = scmp.ne.s32.totalorder %s43, %s46
      %p52 = scmp.eq.s32.totalorder %s12, 0
      %p53 = por %p51, %p52
      %p54 = scmp.ne.s32.totalorder %s43, %s46
      %p55 = scmp.eq.s32.totalorder %s17, 3
      %p56 = por %p54, %p55
      %p57 = scmp.ne.s32.totalorder %s46, %s47
      %p58 = scmp.eq.s32.totalorder %s17, 0
      %p59 = por %p57, %p58
      %p60 = scmp.ne.s32.totalorder %s46, %s47
      %p61 = scmp.eq.s32.totalorder %s18, 3
      %p62 = por %p60, %p61
      %p64 = scmp.ne.s32.totalorder %s47, %s63
      %p65 = scmp.eq.s32.totalorder %s18, 0
      %p66 = por %p64, %p65
      %s67 = ssub.s32 %s21, %s30
      %s68 = ssub.s32 %s20, %s34
      %s69 = sor.u32 %s67, %s68
      %p70 = scmp.eq.s32.totalorder %s69, 0
      %s72 = sadd.s32 %s71, 1
      %s73 = scalar_select %p70, %s71, %s72
      %p76 = pneg %p70
      %p77 = scmp.eq.s32.totalorder %s12, 3
      %p78 = por %p76, %p77
      %p79 = scmp.ne.s32.totalorder %s71, %s74
      %p80 = scmp.eq.s32.totalorder %s12, 0
      %p81 = por %p79, %p80
      %p82 = scmp.ne.s32.totalorder %s71, %s74
      %p83 = scmp.eq.s32.totalorder %s17, 3
      %p84 = por %p82, %p83
      %p85 = scmp.ne.s32.totalorder %s74, %s75
      %p86 = scmp.eq.s32.totalorder %s17, 0
      %p87 = por %p85, %p86
      %p88 = scmp.ne.s32.totalorder %s74, %s75
      %p89 = scmp.eq.s32.totalorder %s18, 3
      %p90 = por %p88, %p89
      %p92 = scmp.ne.s32.totalorder %s75, %s91
      %p93 = scmp.eq.s32.totalorder %s18, 0
      %p94 = por %p92, %p93
      %s95 = ssub.s32 %s19, %s38
      %s96 = ssub.s32 %s20, %s34
      %s97 = sor.u32 %s95, %s96
      %p98 = scmp.eq.s32.totalorder %s97, 0
      %s100 = sadd.s32 %s99, 1
      %s101 = scalar_select %p98, %s99, %s100
      %p104 = pneg %p98
      %p105 = scmp.eq.s32.totalorder %s12, 3
      %p106 = por %p104, %p105
      %p107 = scmp.ne.s32.totalorder %s99, %s102
      %p108 = scmp.eq.s32.totalorder %s12, 0
      %p109 = por %p107, %p108
      %p110 = scmp.ne.s32.totalorder %s99, %s102
      %p111 = scmp.eq.s32.totalorder %s17, 3
      %p112 = por %p110, %p111
      %p113 = scmp.ne.s32.totalorder %s102, %s103
      %p114 = scmp.eq.s32.totalorder %s17, 0
      %p115 = por %p113, %p114
      %p116 = scmp.ne.s32.totalorder %s102, %s103
      %p117 = scmp.eq.s32.totalorder %s18, 3
      %p118 = por %p116, %p117
      %p120 = scmp.ne.s32.totalorder %s103, %s119
      %p121 = scmp.eq.s32.totalorder %s18, 0
      %p122 = por %p120, %p121
      %p123 = scmp.le.s32.totalorder 1, %s12
      %p124 = scmp.lt.s32.totalorder %s12, 5
      %p125 = pnand %p123, %p124
      %p126 = pneg %p125
      // Predicated region
      $region9: #{_lambda_.5} parent=5 // pred_check
        _
      $region10: #{_lambda_.5} parent=5 // pred_check_branch
        %128 = sbr.rel (%p125) target = $region12
      $region11: #{_lambda_.5} parent=5 // pred_region
        %s129 = ssub.s32 %s12, 1
        // Predicated region
        $region13: #{_lambda_.5} parent=11 // pred_check
          %p130 = pneg %p87
        $region14: #{_lambda_.5} parent=11 // pred_check_branch
          %132 = sbr.rel (%p130) target = $region16
        $region15: #{_lambda_.5} parent=11 // pred_region
          %s133 = smul.u32 32, %s24
          %s134 = smul.u32 2, %s23
          %136 = vsyncadd [#allocation6], 0
          %s137 = smul.addr %s133, 2
          %s138 = sadd.s32 %s134, %s137
          %s139 = smul.addr %s138, 4
          %s140 = scalar_lea.hbm %s1, %s139
          %s141 = sshll.u32 %s140, 4
          %s142 = int_to_ptr.hbm [resolvable:$true] %s141
          %s143 = sshll.u32 [#allocation5], 4
          %s144 = int_to_ptr.vmem [resolvable:$true] %s143
          %149 = dma.hbm_to_vmem [thread:$0]  %s142, 4096, %s144, [#allocation6], 128, 128, 8
        $region16: #{_lambda_.5} parent=11 // pred_fallthru
          _
      $region12: #{_lambda_.5} parent=5 // pred_fallthru
        _
      %p150 = scmp.lt.s32.totalorder %s12, 4
      // Predicated region
      $region17: #{_lambda_.5} parent=5 // pred_check
        %p151 = pneg %p150
      $region18: #{_lambda_.5} parent=5 // pred_check_branch
        %153 = sbr.rel (%p151) target = $region20
      $region19: #{_lambda_.5} parent=5 // pred_region
        // Predicated region
        $region21: #{_lambda_.5} parent=19 // pred_check
          %p154 = pneg %p53
        $region22: #{_lambda_.5} parent=19 // pred_check_branch
          %156 = sbr.rel (%p154) target = $region24
        $region23: #{_lambda_.5} parent=19 // pred_region
          %s157 = sand.u32 %s43, 1
          %s158 = scalar_lea.sflag [#allocation4], %s157
          %s159 = sand.u32 %s43, 1
          %s160 = smul.addr %s159, 320
          %s161 = scalar_lea.vmem [#allocation3], %s160
          %s162 = smul.u32 20, %s19
          %s163 = smul.u32 2, %s21
          %165 = vsyncadd %s158, 0
          %s166 = smul.addr %s162, 2
          %s167 = sadd.s32 %s163, %s166
          %s168 = smul.addr %s167, 8
          %s169 = scalar_lea.hbm %s0, %s168
          %s170 = sshll.u32 %s169, 4
          %s171 = int_to_ptr.hbm [resolvable:$true] %s170
          %s172 = sshll.u32 %s161, 4
          %s173 = int_to_ptr.vmem [resolvable:$true] %s172
          %178 = dma.hbm_to_vmem [thread:$0]  %s171, 5120, %s173, %s158, 256, 256, 16
        $region24: #{_lambda_.5} parent=19 // pred_fallthru
          _
      $region20: #{_lambda_.5} parent=5 // pred_fallthru
        _
      %p179 = scmp.le.s32.totalorder 1, %s12
      %p180 = scmp.lt.s32.totalorder %s12, 5
      %p181 = pnand %p179, %p180
      %p182 = pneg %p181
      // Predicated region
      $region25: #{_lambda_.5} parent=5 // pred_check
        _
      $region26: #{_lambda_.5} parent=5 // pred_check_branch
        %184 = sbr.rel (%p181) target = $region28
      $region27: #{_lambda_.5} parent=5 // pred_region
        %s185 = ssub.s32 %s12, 1
        %s186 = sand.u32 %s46, 1
        %s187 = scalar_lea.sflag [#allocation4], %s186
        %s188 = sand.u32 %s46, 1
        %s189 = smul.addr %s188, 320
        %s190 = scalar_lea.vmem [#allocation3], %s189
        // Predicated region
        $region29: #{_lambda_.5} parent=27 // pred_check
          %p191 = pneg %p59
        $region30: #{_lambda_.5} parent=27 // pred_check_branch
          %193 = sbr.rel (%p191) target = $region32
        $region31: #{_lambda_.5} parent=27 // pred_region
          %195 = dma.done %s187, 5120
        $region32: #{_lambda_.5} parent=27 // pred_fallthru
          _
        // Predicated region
        $region33: #{_lambda_.5} parent=27 // pred_check
          %p196 = pneg %p87
        $region34: #{_lambda_.5} parent=27 // pred_check_branch
          %198 = sbr.rel (%p196) target = $region36
        $region35: #{_lambda_.5} parent=27 // pred_region
          %200 = dma.done [#allocation6], 4096
        $region36: #{_lambda_.5} parent=27 // pred_fallthru
          _
        %s201 = sand.u32 %s46, 1
        %s202 = scalar_lea.sflag [#allocation4], %s201
        %s203 = sand.u32 %s46, 1
        %s204 = smul.addr %s203, 320
        %s205 = scalar_lea.vmem [#allocation3], %s204
        %p206 = pneg %p59
        %p207 = pneg %p56
        %p208 = pneg %p87
        %p209 = pneg %p84
        %p210 = pneg %p115
        %p211 = pneg %p112
        %s212 = smul.u32 20, %s22
        %s213 = smul.u32 2, %s23
        %p214 = scmp.lt.s32.totalorder %s212, 79
        %s215 = scalar_select %p214, %s212, 79
        %p216 = scmp.lt.s32.totalorder %s213, 1
        %s217 = scalar_select %p216, %s213, 1
        %s218 = smul.addr %s215, 2
        %s219 = sadd.s32 %s217, %s218
        %s220 = smul.addr %s219, 4
        %s221 = scalar_lea.vmem %s2, %s220
        %s222 = smul.u32 20, %s22
        %s223 = smul.u32 2, %s24
        %s224 = smul.u32 32, %s24
        %s225 = smul.u32 2, %s23
        %s226 = smul.u32 20, %s22
        %s227 = smul.u32 2, %s23
        %p228 = scmp.lt.s32.totalorder %s226, 79
        %s229 = scalar_select %p228, %s226, 79
        %p230 = scmp.lt.s32.totalorder %s227, 1
        %s231 = scalar_select %p230, %s227, 1
        %s232 = smul.addr %s229, 2
        %s233 = sadd.s32 %s231, %s232
        %s234 = smul.addr %s233, 4
        %s235 = scalar_lea.vmem %s2, %s234
        %s236 = smul.u32 20, %s22
        %s237 = smul.u32 2, %s23
        %p238 = scmp.eq.s32.totalorder %s24, 0
        // Predicated region
        $region37: #{_lambda_.5} parent=27 // pred_check
          %p239 = pneg %p238
        $region38: #{_lambda_.5} parent=27 // pred_check_branch
          %241 = sbr.rel (%p239) target = $region40
        $region39: #{_lambda_.5} parent=27 // pred_region
          %242 = vst [vmem:[#allocation2] sm:$0xff] 0.0
          %243 = vst [vmem:[#allocation2 + $0x8] sm:$0xff] 0.0
          %244 = vst [vmem:[#allocation2 + $0x10] sm:$0xff] 0.0
          %245 = vst [vmem:[#allocation2 + $0x18] sm:$0xff] 0.0
          %246 = vst [vmem:[#allocation2 + $0x20] sm:$0xff] 0.0
          %247 = vst [vmem:[#allocation2 + $0x28] sm:$0xff] 0.0
          %248 = vst [vmem:[#allocation2 + $0x30] sm:$0xff] 0.0
          %249 = vst [vmem:[#allocation2 + $0x38] sm:$0xff] 0.0
          %250 = vst [vmem:[#allocation2 + $0x40] sm:$0xff] 0.0
          %251 = vst [vmem:[#allocation2 + $0x48] sm:$0xff] 0.0
          %252 = vst [vmem:[#allocation2 + $0x50] sm:$0xff] 0.0
          %253 = vst [vmem:[#allocation2 + $0x58] sm:$0xff] 0.0
          %254 = vst [vmem:[#allocation2 + $0x60] sm:$0xff] 0.0
          %255 = vst [vmem:[#allocation2 + $0x68] sm:$0xff] 0.0
          %256 = vst [vmem:[#allocation2 + $0x70] sm:$0xff] 0.0
          %257 = vst [vmem:[#allocation2 + $0x78] sm:$0xff] 0.0
          %258 = vst [vmem:[#allocation2 + $0x80] sm:$0xff] 0.0
          %259 = vst [vmem:[#allocation2 + $0x88] sm:$0xff] 0.0
          %260 = vst [vmem:[#allocation2 + $0x90] sm:$0xff] 0.0
          %261 = vst [vmem:[#allocation2 + $0x98] sm:$0xff] 0.0
          %262 = vst [vmem:[#allocation2 + $0xa0] sm:$0xff] 0.0
          %263 = vst [vmem:[#allocation2 + $0xa8] sm:$0xff] 0.0
          %264 = vst [vmem:[#allocation2 + $0xb0] sm:$0xff] 0.0
          %265 = vst [vmem:[#allocation2 + $0xb8] sm:$0xff] 0.0
          %266 = vst [vmem:[#allocation2 + $0xc0] sm:$0xff] 0.0
          %267 = vst [vmem:[#allocation2 + $0xc8] sm:$0xff] 0.0
          %268 = vst [vmem:[#allocation2 + $0xd0] sm:$0xff] 0.0
          %269 = vst [vmem:[#allocation2 + $0xd8] sm:$0xff] 0.0
          %270 = vst [vmem:[#allocation2 + $0xe0] sm:$0xff] 0.0
          %271 = vst [vmem:[#allocation2 + $0xe8] sm:$0xff] 0.0
          %272 = vst [vmem:[#allocation2 + $0xf0] sm:$0xff] 0.0
          %273 = vst [vmem:[#allocation2 + $0xf8] sm:$0xff] 0.0
          %274 = vst [vmem:[#allocation2 + $0x100] sm:$0xff] 0.0
          %275 = vst [vmem:[#allocation2 + $0x108] sm:$0xff] 0.0
          %276 = vst [vmem:[#allocation2 + $0x110] sm:$0xff] 0.0
          %277 = vst [vmem:[#allocation2 + $0x118] sm:$0xff] 0.0
          %278 = vst [vmem:[#allocation2 + $0x120] sm:$0xff] 0.0
          %279 = vst [vmem:[#allocation2 + $0x128] sm:$0xff] 0.0
          %280 = vst [vmem:[#allocation2 + $0x130] sm:$0xff] 0.0
          %281 = vst [vmem:[#allocation2 + $0x138] sm:$0xff] 0.0
        $region40: #{_lambda_.5} parent=27 // pred_fallthru
          _
        %v282 = vld [vmem:[#allocation2] sm:$0xff]
        %v283 = vld [vmem:[#allocation2 + $0x8] sm:$0xff]
        %v284 = vld [vmem:[#allocation2 + $0x10] sm:$0xff]
        %v285 = vld [vmem:[#allocation2 + $0x18] sm:$0xff]
        %v286 = vld [vmem:[#allocation2 + $0x20] sm:$0xff]
        %v287 = vld [vmem:[#allocation2 + $0x28] sm:$0xff]
        %v288 = vld [vmem:[#allocation2 + $0x30] sm:$0xff]
        %v289 = vld [vmem:[#allocation2 + $0x38] sm:$0xff]
        %v290 = vld [vmem:[#allocation2 + $0x40] sm:$0xff]
        %v291 = vld [vmem:[#allocation2 + $0x48] sm:$0xff]
        %v292 = vld [vmem:[#allocation2 + $0x50] sm:$0xff]
        %v293 = vld [vmem:[#allocation2 + $0x58] sm:$0xff]
        %v294 = vld [vmem:[#allocation2 + $0x60] sm:$0xff]
        %v295 = vld [vmem:[#allocation2 + $0x68] sm:$0xff]
        %v296 = vld [vmem:[#allocation2 + $0x70] sm:$0xff]
        %v297 = vld [vmem:[#allocation2 + $0x78] sm:$0xff]
        %v298 = vld [vmem:[#allocation2 + $0x80] sm:$0xff]
        %v299 = vld [vmem:[#allocation2 + $0x88] sm:$0xff]
        %v300 = vld [vmem:[#allocation2 + $0x90] sm:$0xff]
        %v301 = vld [vmem:[#allocation2 + $0x98] sm:$0xff]
        %v302 = vld [vmem:[#allocation2 + $0xa0] sm:$0xff]
        %v303 = vld [vmem:[#allocation2 + $0xa8] sm:$0xff]
        %v304 = vld [vmem:[#allocation2 + $0xb0] sm:$0xff]
        %v305 = vld [vmem:[#allocation2 + $0xb8] sm:$0xff]
        %v306 = vld [vmem:[#allocation2 + $0xc0] sm:$0xff]
        %v307 = vld [vmem:[#allocation2 + $0xc8] sm:$0xff]
        %v308 = vld [vmem:[#allocation2 + $0xd0] sm:$0xff]
        %v309 = vld [vmem:[#allocation2 + $0xd8] sm:$0xff]
        %v310 = vld [vmem:[#allocation2 + $0xe0] sm:$0xff]
        %v311 = vld [vmem:[#allocation2 + $0xe8] sm:$0xff]
        %v312 = vld [vmem:[#allocation2 + $0xf0] sm:$0xff]
        %v313 = vld [vmem:[#allocation2 + $0xf8] sm:$0xff]
        %v314 = vld [vmem:[#allocation2 + $0x100] sm:$0xff]
        %v315 = vld [vmem:[#allocation2 + $0x108] sm:$0xff]
        %v316 = vld [vmem:[#allocation2 + $0x110] sm:$0xff]
        %v317 = vld [vmem:[#allocation2 + $0x118] sm:$0xff]
        %v318 = vld [vmem:[#allocation2 + $0x120] sm:$0xff]
        %v319 = vld [vmem:[#allocation2 + $0x128] sm:$0xff]
        %v320 = vld [vmem:[#allocation2 + $0x130] sm:$0xff]
        %v321 = vld [vmem:[#allocation2 + $0x138] sm:$0xff]
        %v322 = vld [vmem:[%s190] sm:$0xff]
        %v323 = vld [vmem:[%s190 + $0x8] sm:$0xff]
        %v324 = vld [vmem:[%s190 + $0x10] sm:$0xff]
        %v325 = vld [vmem:[%s190 + $0x18] sm:$0xff]
        %v326 = vld [vmem:[%s190 + $0x20] sm:$0xff]
        %v327 = vld [vmem:[%s190 + $0x28] sm:$0xff]
        %v328 = vld [vmem:[%s190 + $0x30] sm:$0xff]
        %v329 = vld [vmem:[%s190 + $0x38] sm:$0xff]
        %v330 = vld [vmem:[%s190 + $0x40] sm:$0xff]
        %v331 = vld [vmem:[%s190 + $0x48] sm:$0xff]
        %v332 = vld [vmem:[%s190 + $0x50] sm:$0xff]
        %v333 = vld [vmem:[%s190 + $0x58] sm:$0xff]
        %v334 = vld [vmem:[%s190 + $0x60] sm:$0xff]
        %v335 = vld [vmem:[%s190 + $0x68] sm:$0xff]
        %v336 = vld [vmem:[%s190 + $0x70] sm:$0xff]
        %v337 = vld [vmem:[%s190 + $0x78] sm:$0xff]
        %v338 = vld [vmem:[%s190 + $0x80] sm:$0xff]
        %v339 = vld [vmem:[%s190 + $0x88] sm:$0xff]
        %v340 = vld [vmem:[%s190 + $0x90] sm:$0xff]
        %v341 = vld [vmem:[%s190 + $0x98] sm:$0xff]
        %v342 = vld [vmem:[%s190 + $0xa0] sm:$0xff]
        %v343 = vld [vmem:[%s190 + $0xa8] sm:$0xff]
        %v344 = vld [vmem:[%s190 + $0xb0] sm:$0xff]
        %v345 = vld [vmem:[%s190 + $0xb8] sm:$0xff]
        %v346 = vld [vmem:[%s190 + $0xc0] sm:$0xff]
        %v347 = vld [vmem:[%s190 + $0xc8] sm:$0xff]
        %v348 = vld [vmem:[%s190 + $0xd0] sm:$0xff]
        %v349 = vld [vmem:[%s190 + $0xd8] sm:$0xff]
        %v350 = vld [vmem:[%s190 + $0xe0] sm:$0xff]
        %v351 = vld [vmem:[%s190 + $0xe8] sm:$0xff]
        %v352 = vld [vmem:[%s190 + $0xf0] sm:$0xff]
        %v353 = vld [vmem:[%s190 + $0xf8] sm:$0xff]
        %v354 = vld [vmem:[%s190 + $0x100] sm:$0xff]
        %v355 = vld [vmem:[%s190 + $0x108] sm:$0xff]
        %v356 = vld [vmem:[%s190 + $0x110] sm:$0xff]
        %v357 = vld [vmem:[%s190 + $0x118] sm:$0xff]
        %v358 = vld [vmem:[%s190 + $0x120] sm:$0xff]
        %v359 = vld [vmem:[%s190 + $0x128] sm:$0xff]
        %v360 = vld [vmem:[%s190 + $0x130] sm:$0xff]
        %v361 = vld [vmem:[%s190 + $0x138] sm:$0xff]
        %v362 = vpack.c.bf16 %v324, %v322
        %v363 = vpack.c.bf16 %v325, %v323
        %v364 = vpack.c.bf16 %v328, %v326
        %v365 = vpack.c.bf16 %v329, %v327
        %v366 = vpack.c.bf16 %v332, %v330
        %v367 = vpack.c.bf16 %v333, %v331
        %v368 = vpack.c.bf16 %v336, %v334
        %v369 = vpack.c.bf16 %v337, %v335
        %v370 = vpack.c.bf16 %v340, %v338
        %v371 = vpack.c.bf16 %v341, %v339
        %v372 = vpack.c.bf16 %v344, %v342
        %v373 = vpack.c.bf16 %v345, %v343
        %v374 = vpack.c.bf16 %v348, %v346
        %v375 = vpack.c.bf16 %v349, %v347
        %v376 = vpack.c.bf16 %v352, %v350
        %v377 = vpack.c.bf16 %v353, %v351
        %v378 = vpack.c.bf16 %v356, %v354
        %v379 = vpack.c.bf16 %v357, %v355
        %v380 = vpack.c.bf16 %v360, %v358
        %v381 = vpack.c.bf16 %v361, %v359
        %v382 = vld [vmem:[#allocation5] sm:$0xff]
        %v383 = vld [vmem:[#allocation5 + $0x8] sm:$0xff]
        %v384 = vld [vmem:[#allocation5 + $0x10] sm:$0xff]
        %v385 = vld [vmem:[#allocation5 + $0x18] sm:$0xff]
        %v386 = vld [vmem:[#allocation5 + $0x20] sm:$0xff]
        %v387 = vld [vmem:[#allocation5 + $0x28] sm:$0xff]
        %v388 = vld [vmem:[#allocation5 + $0x30] sm:$0xff]
        %v389 = vld [vmem:[#allocation5 + $0x38] sm:$0xff]
        %v390 = vld [vmem:[#allocation5 + $0x40] sm:$0xff]
        %v391 = vld [vmem:[#allocation5 + $0x48] sm:$0xff]
        %v392 = vld [vmem:[#allocation5 + $0x50] sm:$0xff]
        %v393 = vld [vmem:[#allocation5 + $0x58] sm:$0xff]
        %v394 = vld [vmem:[#allocation5 + $0x60] sm:$0xff]
        %v395 = vld [vmem:[#allocation5 + $0x68] sm:$0xff]
        %v396 = vld [vmem:[#allocation5 + $0x70] sm:$0xff]
        %v397 = vld [vmem:[#allocation5 + $0x78] sm:$0xff]
        %v398 = vld [vmem:[#allocation5 + $0x80] sm:$0xff]
        %v399 = vld [vmem:[#allocation5 + $0x88] sm:$0xff]
        %v400 = vld [vmem:[#allocation5 + $0x90] sm:$0xff]
        %v401 = vld [vmem:[#allocation5 + $0x98] sm:$0xff]
        %v402 = vld [vmem:[#allocation5 + $0xa0] sm:$0xff]
        %v403 = vld [vmem:[#allocation5 + $0xa8] sm:$0xff]
        %v404 = vld [vmem:[#allocation5 + $0xb0] sm:$0xff]
        %v405 = vld [vmem:[#allocation5 + $0xb8] sm:$0xff]
        %v406 = vld [vmem:[#allocation5 + $0xc0] sm:$0xff]
        %v407 = vld [vmem:[#allocation5 + $0xc8] sm:$0xff]
        %v408 = vld [vmem:[#allocation5 + $0xd0] sm:$0xff]
        %v409 = vld [vmem:[#allocation5 + $0xd8] sm:$0xff]
        %v410 = vld [vmem:[#allocation5 + $0xe0] sm:$0xff]
        %v411 = vld [vmem:[#allocation5 + $0xe8] sm:$0xff]
        %v412 = vld [vmem:[#allocation5 + $0xf0] sm:$0xff]
        %v413 = vld [vmem:[#allocation5 + $0xf8] sm:$0xff]
        %v446 = vunpack.c.l.b16 %v382
        %v447 = vunpack.c.h.b16 %v382
        %v448 = vunpack.c.l.b16 %v383
        %v449 = vunpack.c.h.b16 %v383
        %v450 = vunpack.c.l.b16 %v384
        %v451 = vunpack.c.h.b16 %v384
        %v452 = vunpack.c.l.b16 %v385
        %v453 = vunpack.c.h.b16 %v385
        %v454 = vunpack.c.l.b16 %v386
        %v455 = vunpack.c.h.b16 %v386
        %v456 = vunpack.c.l.b16 %v387
        %v457 = vunpack.c.h.b16 %v387
        %v458 = vunpack.c.l.b16 %v388
        %v459 = vunpack.c.h.b16 %v388
        %v460 = vunpack.c.l.b16 %v389
        %v461 = vunpack.c.h.b16 %v389
        %v462 = vunpack.c.l.b16 %v390
        %v463 = vunpack.c.h.b16 %v390
        %v464 = vunpack.c.l.b16 %v391
        %v465 = vunpack.c.h.b16 %v391
        %v466 = vunpack.c.l.b16 %v392
        %v467 = vunpack.c.h.b16 %v392
        %v468 = vunpack.c.l.b16 %v393
        %v469 = vunpack.c.h.b16 %v393
        %v470 = vunpack.c.l.b16 %v394
        %v471 = vunpack.c.h.b16 %v394
        %v472 = vunpack.c.l.b16 %v395
        %v473 = vunpack.c.h.b16 %v395
        %v474 = vunpack.c.l.b16 %v396
        %v475 = vunpack.c.h.b16 %v396
        %v476 = vunpack.c.l.b16 %v397
        %v477 = vunpack.c.h.b16 %v397
        %v478 = vunpack.c.l.b16 %v398
        %v479 = vunpack.c.h.b16 %v398
        %v480 = vunpack.c.l.b16 %v399
        %v481 = vunpack.c.h.b16 %v399
        %v482 = vunpack.c.l.b16 %v400
        %v483 = vunpack.c.h.b16 %v400
        %v484 = vunpack.c.l.b16 %v401
        %v485 = vunpack.c.h.b16 %v401
        %v486 = vunpack.c.l.b16 %v402
        %v487 = vunpack.c.h.b16 %v402
        %v488 = vunpack.c.l.b16 %v403
        %v489 = vunpack.c.h.b16 %v403
        %v490 = vunpack.c.l.b16 %v404
        %v491 = vunpack.c.h.b16 %v404
        %v492 = vunpack.c.l.b16 %v405
        %v493 = vunpack.c.h.b16 %v405
        %v494 = vunpack.c.l.b16 %v406
        %v495 = vunpack.c.h.b16 %v406
        %v496 = vunpack.c.l.b16 %v407
        %v497 = vunpack.c.h.b16 %v407
        %v498 = vunpack.c.l.b16 %v408
        %v499 = vunpack.c.h.b16 %v408
        %v500 = vunpack.c.l.b16 %v409
        %v501 = vunpack.c.h.b16 %v409
        %v502 = vunpack.c.l.b16 %v410
        %v503 = vunpack.c.h.b16 %v410
        %v504 = vunpack.c.l.b16 %v411
        %v505 = vunpack.c.h.b16 %v411
        %v506 = vunpack.c.l.b16 %v412
        %v507 = vunpack.c.h.b16 %v412
        %v508 = vunpack.c.l.b16 %v413
        %v509 = vunpack.c.h.b16 %v413
        %v510 = vpack.c.b16 %v448, %v446
        %v511 = vpack.c.b16 %v449, %v447
        %v512 = vpack.c.b16 %v452, %v450
        %v513 = vpack.c.b16 %v453, %v451
        %v514 = vpack.c.b16 %v456, %v454
        %v515 = vpack.c.b16 %v457, %v455
        %v516 = vpack.c.b16 %v460, %v458
        %v517 = vpack.c.b16 %v461, %v459
        %v518 = vpack.c.b16 %v464, %v462
        %v519 = vpack.c.b16 %v465, %v463
        %v520 = vpack.c.b16 %v468, %v466
        %v521 = vpack.c.b16 %v469, %v467
        %v522 = vpack.c.b16 %v472, %v470
        %v523 = vpack.c.b16 %v473, %v471
        %v524 = vpack.c.b16 %v476, %v474
        %v525 = vpack.c.b16 %v477, %v475
        %v526 = vpack.c.b16 %v480, %v478
        %v527 = vpack.c.b16 %v481, %v479
        %v528 = vpack.c.b16 %v484, %v482
        %v529 = vpack.c.b16 %v485, %v483
        %v530 = vpack.c.b16 %v488, %v486
        %v531 = vpack.c.b16 %v489, %v487
        %v532 = vpack.c.b16 %v492, %v490
        %v533 = vpack.c.b16 %v493, %v491
        %v534 = vpack.c.b16 %v496, %v494
        %v535 = vpack.c.b16 %v497, %v495
        %v536 = vpack.c.b16 %v500, %v498
        %v537 = vpack.c.b16 %v501, %v499
        %v538 = vpack.c.b16 %v504, %v502
        %v539 = vpack.c.b16 %v505, %v503
        %v540 = vpack.c.b16 %v508, %v506
        %v541 = vpack.c.b16 %v509, %v507
        %574 = vmatpush.bf16.msra.mxu0 %v524
        %575 = vmatpush.bf16.msra.mxu0 %v522
        %576 = vmatpush.bf16.msra.mxu0 %v520
        %577 = vmatpush.bf16.msra.mxu0 %v518
        %578 = vmatpush.bf16.msra.mxu0 %v516
        %579 = vmatpush.bf16.msra.mxu0 %v514
        %580 = vmatpush.bf16.msra.mxu0 %v512
        %581 = vmatpush.bf16.msra.mxu0 %v510
        %582 = vmatmul.bf16.gmra.mxu0 %v362
        %v583 = vpop.f32.mrf.mxu0
        %v584 = vadd.f32 0.0, %v583
        %v585 = vpop.f32.mrf.mxu0
        %v586 = vadd.f32 0.0, %v585
        %587 = vmatmul.bf16.gmra.mxu0 %v364
        %v588 = vpop.f32.mrf.mxu0
        %v589 = vadd.f32 0.0, %v588
        %v590 = vpop.f32.mrf.mxu0
        %v591 = vadd.f32 0.0, %v590
        %592 = vmatmul.bf16.gmra.mxu0 %v366
        %v593 = vpop.f32.mrf.mxu0
        %v594 = vadd.f32 0.0, %v593
        %v595 = vpop.f32.mrf.mxu0
        %v596 = vadd.f32 0.0, %v595
        %597 = vmatmul.bf16.gmra.mxu0 %v368
        %v598 = vpop.f32.mrf.mxu0
        %v599 = vadd.f32 0.0, %v598
        %v600 = vpop.f32.mrf.mxu0
        %v601 = vadd.f32 0.0, %v600
        %602 = vmatmul.bf16.gmra.mxu0 %v370
        %v603 = vpop.f32.mrf.mxu0
        %v604 = vadd.f32 0.0, %v603
        %v605 = vpop.f32.mrf.mxu0
        %v606 = vadd.f32 0.0, %v605
        %607 = vmatmul.bf16.gmra.mxu0 %v372
        %v608 = vpop.f32.mrf.mxu0
        %v609 = vadd.f32 0.0, %v608
        %v610 = vpop.f32.mrf.mxu0
        %v611 = vadd.f32 0.0, %v610
        %612 = vmatmul.bf16.gmra.mxu0 %v374
        %v613 = vpop.f32.mrf.mxu0
        %v614 = vadd.f32 0.0, %v613
        %v615 = vpop.f32.mrf.mxu0
        %v616 = vadd.f32 0.0, %v615
        %617 = vmatmul.bf16.gmra.mxu0 %v376
        %v618 = vpop.f32.mrf.mxu0
        %v619 = vadd.f32 0.0, %v618
        %v620 = vpop.f32.mrf.mxu0
        %v621 = vadd.f32 0.0, %v620
        %622 = vmatmul.bf16.gmra.mxu0 %v378
        %v623 = vpop.f32.mrf.mxu0
        %v624 = vadd.f32 0.0, %v623
        %v625 = vpop.f32.mrf.mxu0
        %v626 = vadd.f32 0.0, %v625
        %627 = vmatmul.bf16.gmra.mxu0 %v380
        %v628 = vpop.f32.mrf.mxu0
        %v629 = vadd.f32 0.0, %v628
        %v630 = vpop.f32.mrf.mxu0
        %v631 = vadd.f32 0.0, %v630
        %632 = vdwg.mxu0
        %633 = vmatpush.bf16.msra.mxu0 %v540
        %634 = vmatpush.bf16.msra.mxu0 %v538
        %635 = vmatpush.bf16.msra.mxu0 %v536
        %636 = vmatpush.bf16.msra.mxu0 %v534
        %637 = vmatpush.bf16.msra.mxu0 %v532
        %638 = vmatpush.bf16.msra.mxu0 %v530
        %639 = vmatpush.bf16.msra.mxu0 %v528
        %640 = vmatpush.bf16.msra.mxu0 %v526
        %641 = vmatmul.bf16.gmra.mxu0 %v363
        %v642 = vpop.f32.mrf.mxu0
        %v643 = vadd.f32 %v584, %v642
        %v644 = vpop.f32.mrf.mxu0
        %v645 = vadd.f32 %v586, %v644
        %646 = vmatmul.bf16.gmra.mxu0 %v365
        %v647 = vpop.f32.mrf.mxu0
        %v648 = vadd.f32 %v589, %v647
        %v649 = vpop.f32.mrf.mxu0
        %v650 = vadd.f32 %v591, %v649
        %651 = vmatmul.bf16.gmra.mxu0 %v367
        %v652 = vpop.f32.mrf.mxu0
        %v653 = vadd.f32 %v594, %v652
        %v654 = vpop.f32.mrf.mxu0
        %v655 = vadd.f32 %v596, %v654
        %656 = vmatmul.bf16.gmra.mxu0 %v369
        %v657 = vpop.f32.mrf.mxu0
        %v658 = vadd.f32 %v599, %v657
        %v659 = vpop.f32.mrf.mxu0
        %v660 = vadd.f32 %v601, %v659
        %661 = vmatmul.bf16.gmra.mxu0 %v371
        %v662 = vpop.f32.mrf.mxu0
        %v663 = vadd.f32 %v604, %v662
        %v664 = vpop.f32.mrf.mxu0
        %v665 = vadd.f32 %v606, %v664
        %666 = vmatmul.bf16.gmra.mxu0 %v373
        %v667 = vpop.f32.mrf.mxu0
        %v668 = vadd.f32 %v609, %v667
        %v669 = vpop.f32.mrf.mxu0
        %v670 = vadd.f32 %v611, %v669
        %671 = vmatmul.bf16.gmra.mxu0 %v375
        %v672 = vpop.f32.mrf.mxu0
        %v673 = vadd.f32 %v614, %v672
        %v674 = vpop.f32.mrf.mxu0
        %v675 = vadd.f32 %v616, %v674
        %676 = vmatmul.bf16.gmra.mxu0 %v377
        %v677 = vpop.f32.mrf.mxu0
        %v678 = vadd.f32 %v619, %v677
        %v679 = vpop.f32.mrf.mxu0
        %v680 = vadd.f32 %v621, %v679
        %681 = vmatmul.bf16.gmra.mxu0 %v379
        %v682 = vpop.f32.mrf.mxu0
        %v683 = vadd.f32 %v624, %v682
        %v684 = vpop.f32.mrf.mxu0
        %v685 = vadd.f32 %v626, %v684
        %686 = vmatmul.bf16.gmra.mxu0 %v381
        %v687 = vpop.f32.mrf.mxu0
        %v688 = vadd.f32 %v629, %v687
        %v689 = vpop.f32.mrf.mxu0
        %v690 = vadd.f32 %v631, %v689
        %691 = vdwg.mxu0
        %692 = vmatpush.bf16.msra.mxu0 %v525
        %693 = vmatpush.bf16.msra.mxu0 %v523
        %694 = vmatpush.bf16.msra.mxu0 %v521
        %695 = vmatpush.bf16.msra.mxu0 %v519
        %696 = vmatpush.bf16.msra.mxu0 %v517
        %697 = vmatpush.bf16.msra.mxu0 %v515
        %698 = vmatpush.bf16.msra.mxu0 %v513
        %699 = vmatpush.bf16.msra.mxu0 %v511
        %700 = vmatmul.bf16.gmra.mxu0 %v362
        %v701 = vpop.f32.mrf.mxu0
        %v702 = vadd.f32 0.0, %v701
        %v703 = vpop.f32.mrf.mxu0
        %v704 = vadd.f32 0.0, %v703
        %705 = vmatmul.bf16.gmra.mxu0 %v364
        %v706 = vpop.f32.mrf.mxu0
        %v707 = vadd.f32 0.0, %v706
        %v708 = vpop.f32.mrf.mxu0
        %v709 = vadd.f32 0.0, %v708
        %710 = vmatmul.bf16.gmra.mxu0 %v366
        %v711 = vpop.f32.mrf.mxu0
        %v712 = vadd.f32 0.0, %v711
        %v713 = vpop.f32.mrf.mxu0
        %v714 = vadd.f32 0.0, %v713
        %715 = vmatmul.bf16.gmra.mxu0 %v368
        %v716 = vpop.f32.mrf.mxu0
        %v717 = vadd.f32 0.0, %v716
        %v718 = vpop.f32.mrf.mxu0
        %v719 = vadd.f32 0.0, %v718
        %720 = vmatmul.bf16.gmra.mxu0 %v370
        %v721 = vpop.f32.mrf.mxu0
        %v722 = vadd.f32 0.0, %v721
        %v723 = vpop.f32.mrf.mxu0
        %v724 = vadd.f32 0.0, %v723
        %725 = vmatmul.bf16.gmra.mxu0 %v372
        %v726 = vpop.f32.mrf.mxu0
        %v727 = vadd.f32 0.0, %v726
        %v728 = vpop.f32.mrf.mxu0
        %v729 = vadd.f32 0.0, %v728
        %730 = vmatmul.bf16.gmra.mxu0 %v374
        %v731 = vpop.f32.mrf.mxu0
        %v732 = vadd.f32 0.0, %v731
        %v733 = vpop.f32.mrf.mxu0
        %v734 = vadd.f32 0.0, %v733
        %735 = vmatmul.bf16.gmra.mxu0 %v376
        %v736 = vpop.f32.mrf.mxu0
        %v737 = vadd.f32 0.0, %v736
        %v738 = vpop.f32.mrf.mxu0
        %v739 = vadd.f32 0.0, %v738
        %740 = vmatmul.bf16.gmra.mxu0 %v378
        %v741 = vpop.f32.mrf.mxu0
        %v742 = vadd.f32 0.0, %v741
        %v743 = vpop.f32.mrf.mxu0
        %v744 = vadd.f32 0.0, %v743
        %745 = vmatmul.bf16.gmra.mxu0 %v380
        %v746 = vpop.f32.mrf.mxu0
        %v747 = vadd.f32 0.0, %v746
        %v748 = vpop.f32.mrf.mxu0
        %v749 = vadd.f32 0.0, %v748
        %750 = vdwg.mxu0
        %751 = vmatpush.bf16.msra.mxu0 %v541
        %752 = vmatpush.bf16.msra.mxu0 %v539
        %753 = vmatpush.bf16.msra.mxu0 %v537
        %754 = vmatpush.bf16.msra.mxu0 %v535
        %755 = vmatpush.bf16.msra.mxu0 %v533
        %756 = vmatpush.bf16.msra.mxu0 %v531
        %757 = vmatpush.bf16.msra.mxu0 %v529
        %758 = vmatpush.bf16.msra.mxu0 %v527
        %759 = vmatmul.bf16.gmra.mxu0 %v363
        %v760 = vpop.f32.mrf.mxu0
        %v761 = vadd.f32 %v702, %v760
        %v762 = vpop.f32.mrf.mxu0
        %v763 = vadd.f32 %v704, %v762
        %764 = vmatmul.bf16.gmra.mxu0 %v365
        %v765 = vpop.f32.mrf.mxu0
        %v766 = vadd.f32 %v707, %v765
        %v767 = vpop.f32.mrf.mxu0
        %v768 = vadd.f32 %v709, %v767
        %769 = vmatmul.bf16.gmra.mxu0 %v367
        %v770 = vpop.f32.mrf.mxu0
        %v771 = vadd.f32 %v712, %v770
        %v772 = vpop.f32.mrf.mxu0
        %v773 = vadd.f32 %v714, %v772
        %774 = vmatmul.bf16.gmra.mxu0 %v369
        %v775 = vpop.f32.mrf.mxu0
        %v776 = vadd.f32 %v717, %v775
        %v777 = vpop.f32.mrf.mxu0
        %v778 = vadd.f32 %v719, %v777
        %779 = vmatmul.bf16.gmra.mxu0 %v371
        %v780 = vpop.f32.mrf.mxu0
        %v781 = vadd.f32 %v722, %v780
        %v782 = vpop.f32.mrf.mxu0
        %v783 = vadd.f32 %v724, %v782
        %784 = vmatmul.bf16.gmra.mxu0 %v373
        %v785 = vpop.f32.mrf.mxu0
        %v786 = vadd.f32 %v727, %v785
        %v787 = vpop.f32.mrf.mxu0
        %v788 = vadd.f32 %v729, %v787
        %789 = vmatmul.bf16.gmra.mxu0 %v375
        %v790 = vpop.f32.mrf.mxu0
        %v791 = vadd.f32 %v732, %v790
        %v792 = vpop.f32.mrf.mxu0
        %v793 = vadd.f32 %v734, %v792
        %794 = vmatmul.bf16.gmra.mxu0 %v377
        %v795 = vpop.f32.mrf.mxu0
        %v796 = vadd.f32 %v737, %v795
        %v797 = vpop.f32.mrf.mxu0
        %v798 = vadd.f32 %v739, %v797
        %799 = vmatmul.bf16.gmra.mxu0 %v379
        %v800 = vpop.f32.mrf.mxu0
        %v801 = vadd.f32 %v742, %v800
        %v802 = vpop.f32.mrf.mxu0
        %v803 = vadd.f32 %v744, %v802
        %804 = vmatmul.bf16.gmra.mxu0 %v381
        %v805 = vpop.f32.mrf.mxu0
        %v806 = vadd.f32 %v747, %v805
        %v807 = vpop.f32.mrf.mxu0
        %v808 = vadd.f32 %v749, %v807
        %809 = vdwg.mxu0
        %v810 = vadd.f32 %v282, %v643
        %v811 = vadd.f32 %v283, %v761
        %v812 = vadd.f32 %v284, %v645
        %v813 = vadd.f32 %v285, %v763
        %v814 = vadd.f32 %v286, %v648
        %v815 = vadd.f32 %v287, %v766
        %v816 = vadd.f32 %v288, %v650
        %v817 = vadd.f32 %v289, %v768
        %v818 = vadd.f32 %v290, %v653
        %v819 = vadd.f32 %v291, %v771
        %v820 = vadd.f32 %v292, %v655
        %v821 = vadd.f32 %v293, %v773
        %v822 = vadd.f32 %v294, %v658
        %v823 = vadd.f32 %v295, %v776
        %v824 = vadd.f32 %v296, %v660
        %v825 = vadd.f32 %v297, %v778
        %v826 = vadd.f32 %v298, %v663
        %v827 = vadd.f32 %v299, %v781
        %v828 = vadd.f32 %v300, %v665
        %v829 = vadd.f32 %v301, %v783
        %v830 = vadd.f32 %v302, %v668
        %v831 = vadd.f32 %v303, %v786
        %v832 = vadd.f32 %v304, %v670
        %v833 = vadd.f32 %v305, %v788
        %v834 = vadd.f32 %v306, %v673
        %v835 = vadd.f32 %v307, %v791
        %v836 = vadd.f32 %v308, %v675
        %v837 = vadd.f32 %v309, %v793
        %v838 = vadd.f32 %v310, %v678
        %v839 = vadd.f32 %v311, %v796
        %v840 = vadd.f32 %v312, %v680
        %v841 = vadd.f32 %v313, %v798
        %v842 = vadd.f32 %v314, %v683
        %v843 = vadd.f32 %v315, %v801
        %v844 = vadd.f32 %v316, %v685
        %v845 = vadd.f32 %v317, %v803
        %v846 = vadd.f32 %v318, %v688
        %v847 = vadd.f32 %v319, %v806
        %v848 = vadd.f32 %v320, %v690
        %v849 = vadd.f32 %v321, %v808
        %850 = vst [vmem:[#allocation2] sm:$0xff] %v810
        %851 = vst [vmem:[#allocation2 + $0x8] sm:$0xff] %v811
        %852 = vst [vmem:[#allocation2 + $0x10] sm:$0xff] %v812
        %853 = vst [vmem:[#allocation2 + $0x18] sm:$0xff] %v813
        %854 = vst [vmem:[#allocation2 + $0x20] sm:$0xff] %v814
        %855 = vst [vmem:[#allocation2 + $0x28] sm:$0xff] %v815
        %856 = vst [vmem:[#allocation2 + $0x30] sm:$0xff] %v816
        %857 = vst [vmem:[#allocation2 + $0x38] sm:$0xff] %v817
        %858 = vst [vmem:[#allocation2 + $0x40] sm:$0xff] %v818
        %859 = vst [vmem:[#allocation2 + $0x48] sm:$0xff] %v819
        %860 = vst [vmem:[#allocation2 + $0x50] sm:$0xff] %v820
        %861 = vst [vmem:[#allocation2 + $0x58] sm:$0xff] %v821
        %862 = vst [vmem:[#allocation2 + $0x60] sm:$0xff] %v822
        %863 = vst [vmem:[#allocation2 + $0x68] sm:$0xff] %v823
        %864 = vst [vmem:[#allocation2 + $0x70] sm:$0xff] %v824
        %865 = vst [vmem:[#allocation2 + $0x78] sm:$0xff] %v825
        %866 = vst [vmem:[#allocation2 + $0x80] sm:$0xff] %v826
        %867 = vst [vmem:[#allocation2 + $0x88] sm:$0xff] %v827
        %868 = vst [vmem:[#allocation2 + $0x90] sm:$0xff] %v828
        %869 = vst [vmem:[#allocation2 + $0x98] sm:$0xff] %v829
        %870 = vst [vmem:[#allocation2 + $0xa0] sm:$0xff] %v830
        %871 = vst [vmem:[#allocation2 + $0xa8] sm:$0xff] %v831
        %872 = vst [vmem:[#allocation2 + $0xb0] sm:$0xff] %v832
        %873 = vst [vmem:[#allocation2 + $0xb8] sm:$0xff] %v833
        %874 = vst [vmem:[#allocation2 + $0xc0] sm:$0xff] %v834
        %875 = vst [vmem:[#allocation2 + $0xc8] sm:$0xff] %v835
        %876 = vst [vmem:[#allocation2 + $0xd0] sm:$0xff] %v836
        %877 = vst [vmem:[#allocation2 + $0xd8] sm:$0xff] %v837
        %878 = vst [vmem:[#allocation2 + $0xe0] sm:$0xff] %v838
        %879 = vst [vmem:[#allocation2 + $0xe8] sm:$0xff] %v839
        %880 = vst [vmem:[#allocation2 + $0xf0] sm:$0xff] %v840
        %881 = vst [vmem:[#allocation2 + $0xf8] sm:$0xff] %v841
        %882 = vst [vmem:[#allocation2 + $0x100] sm:$0xff] %v842
        %883 = vst [vmem:[#allocation2 + $0x108] sm:$0xff] %v843
        %884 = vst [vmem:[#allocation2 + $0x110] sm:$0xff] %v844
        %885 = vst [vmem:[#allocation2 + $0x118] sm:$0xff] %v845
        %886 = vst [vmem:[#allocation2 + $0x120] sm:$0xff] %v846
        %887 = vst [vmem:[#allocation2 + $0x128] sm:$0xff] %v847
        %888 = vst [vmem:[#allocation2 + $0x130] sm:$0xff] %v848
        %889 = vst [vmem:[#allocation2 + $0x138] sm:$0xff] %v849
        // Predicated region
        $region41: #{_lambda_.5} parent=27 // pred_check
          %p890 = pneg %p238
        $region42: #{_lambda_.5} parent=27 // pred_check_branch
          %892 = sbr.rel (%p890) target = $region44
        $region43: #{_lambda_.5} parent=27 // pred_region
          %v893 = vld [vmem:[#allocation2] sm:$0xff]
          %v894 = vld [vmem:[#allocation2 + $0x8] sm:$0xff]
          %v895 = vld [vmem:[#allocation2 + $0x10] sm:$0xff]
          %v896 = vld [vmem:[#allocation2 + $0x18] sm:$0xff]
          %v897 = vld [vmem:[#allocation2 + $0x20] sm:$0xff]
          %v898 = vld [vmem:[#allocation2 + $0x28] sm:$0xff]
          %v899 = vld [vmem:[#allocation2 + $0x30] sm:$0xff]
          %v900 = vld [vmem:[#allocation2 + $0x38] sm:$0xff]
          %v901 = vld [vmem:[#allocation2 + $0x40] sm:$0xff]
          %v902 = vld [vmem:[#allocation2 + $0x48] sm:$0xff]
          %v903 = vld [vmem:[#allocation2 + $0x50] sm:$0xff]
          %v904 = vld [vmem:[#allocation2 + $0x58] sm:$0xff]
          %v905 = vld [vmem:[#allocation2 + $0x60] sm:$0xff]
          %v906 = vld [vmem:[#allocation2 + $0x68] sm:$0xff]
          %v907 = vld [vmem:[#allocation2 + $0x70] sm:$0xff]
          %v908 = vld [vmem:[#allocation2 + $0x78] sm:$0xff]
          %v909 = vld [vmem:[#allocation2 + $0x80] sm:$0xff]
          %v910 = vld [vmem:[#allocation2 + $0x88] sm:$0xff]
          %v911 = vld [vmem:[#allocation2 + $0x90] sm:$0xff]
          %v912 = vld [vmem:[#allocation2 + $0x98] sm:$0xff]
          %v913 = vld [vmem:[#allocation2 + $0xa0] sm:$0xff]
          %v914 = vld [vmem:[#allocation2 + $0xa8] sm:$0xff]
          %v915 = vld [vmem:[#allocation2 + $0xb0] sm:$0xff]
          %v916 = vld [vmem:[#allocation2 + $0xb8] sm:$0xff]
          %v917 = vld [vmem:[#allocation2 + $0xc0] sm:$0xff]
          %v918 = vld [vmem:[#allocation2 + $0xc8] sm:$0xff]
          %v919 = vld [vmem:[#allocation2 + $0xd0] sm:$0xff]
          %v920 = vld [vmem:[#allocation2 + $0xd8] sm:$0xff]
          %v921 = vld [vmem:[#allocation2 + $0xe0] sm:$0xff]
          %v922 = vld [vmem:[#allocation2 + $0xe8] sm:$0xff]
          %v923 = vld [vmem:[#allocation2 + $0xf0] sm:$0xff]
          %v924 = vld [vmem:[#allocation2 + $0xf8] sm:$0xff]
          %v925 = vld [vmem:[#allocation2 + $0x100] sm:$0xff]
          %v926 = vld [vmem:[#allocation2 + $0x108] sm:$0xff]
          %v927 = vld [vmem:[#allocation2 + $0x110] sm:$0xff]
          %v928 = vld [vmem:[#allocation2 + $0x118] sm:$0xff]
          %v929 = vld [vmem:[#allocation2 + $0x120] sm:$0xff]
          %v930 = vld [vmem:[#allocation2 + $0x128] sm:$0xff]
          %v931 = vld [vmem:[#allocation2 + $0x130] sm:$0xff]
          %v932 = vld [vmem:[#allocation2 + $0x138] sm:$0xff]
          %v933 = vpack.c.bf16 %v894, %v893
          %v934 = vpack.c.bf16 %v896, %v895
          %v935 = vpack.c.bf16 %v898, %v897
          %v936 = vpack.c.bf16 %v900, %v899
          %v937 = vpack.c.bf16 %v902, %v901
          %v938 = vpack.c.bf16 %v904, %v903
          %v939 = vpack.c.bf16 %v906, %v905
          %v940 = vpack.c.bf16 %v908, %v907
          %v941 = vpack.c.bf16 %v910, %v909
          %v942 = vpack.c.bf16 %v912, %v911
          %v943 = vpack.c.bf16 %v914, %v913
          %v944 = vpack.c.bf16 %v916, %v915
          %v945 = vpack.c.bf16 %v918, %v917
          %v946 = vpack.c.bf16 %v920, %v919
          %v947 = vpack.c.bf16 %v922, %v921
          %v948 = vpack.c.bf16 %v924, %v923
          %v949 = vpack.c.bf16 %v926, %v925
          %v950 = vpack.c.bf16 %v928, %v927
          %v951 = vpack.c.bf16 %v930, %v929
          %v952 = vpack.c.bf16 %v932, %v931
          %953 = vst [vmem:[%s235] sm:$0xff] %v933
          %954 = vst [vmem:[%s235 + $0x8] sm:$0xff] %v934
          %955 = vst [vmem:[%s235 + $0x10] sm:$0xff] %v935
          %956 = vst [vmem:[%s235 + $0x18] sm:$0xff] %v936
          %957 = vst [vmem:[%s235 + $0x20] sm:$0xff] %v937
          %958 = vst [vmem:[%s235 + $0x28] sm:$0xff] %v938
          %959 = vst [vmem:[%s235 + $0x30] sm:$0xff] %v939
          %960 = vst [vmem:[%s235 + $0x38] sm:$0xff] %v940
          %961 = vst [vmem:[%s235 + $0x40] sm:$0xff] %v941
          %962 = vst [vmem:[%s235 + $0x48] sm:$0xff] %v942
          %963 = vst [vmem:[%s235 + $0x50] sm:$0xff] %v943
          %964 = vst [vmem:[%s235 + $0x58] sm:$0xff] %v944
          %965 = vst [vmem:[%s235 + $0x60] sm:$0xff] %v945
          %966 = vst [vmem:[%s235 + $0x68] sm:$0xff] %v946
          %967 = vst [vmem:[%s235 + $0x70] sm:$0xff] %v947
          %968 = vst [vmem:[%s235 + $0x78] sm:$0xff] %v948
          %969 = vst [vmem:[%s235 + $0x80] sm:$0xff] %v949
          %970 = vst [vmem:[%s235 + $0x88] sm:$0xff] %v950
          %971 = vst [vmem:[%s235 + $0x90] sm:$0xff] %v951
          %972 = vst [vmem:[%s235 + $0x98] sm:$0xff] %v952
        $region44: #{_lambda_.5} parent=27 // pred_fallthru
          _
        %s973 = smul.u32 20, %s22
        %s974 = smul.u32 2, %s23
        %p975 = scmp.lt.s32.totalorder %s973, 79
        %s976 = scalar_select %p975, %s973, 79
        %p977 = scmp.lt.s32.totalorder %s974, 1
        %s978 = scalar_select %p977, %s974, 1
        %s979 = smul.addr %s976, 2
        %s980 = sadd.s32 %s978, %s979
        %s981 = smul.addr %s980, 4
        %s982 = scalar_lea.vmem %s2, %s981
        // Predicated region
        $region45: #{_lambda_.5} parent=27 // pred_check
          %p983 = pneg %p112
        $region46: #{_lambda_.5} parent=27 // pred_check_branch
          %985 = sbr.rel (%p983) target = $region48
        $region47: #{_lambda_.5} parent=27 // pred_region
          %s986 = smul.u32 20, %s22
          %s987 = smul.u32 2, %s23
        $region48: #{_lambda_.5} parent=27 // pred_fallthru
          _
      $region28: #{_lambda_.5} parent=5 // pred_fallthru
        _
      %p988 = scmp.le.s32.totalorder 2, %s12
      // Predicated region
      $region49: #{_lambda_.5} parent=5 // pred_check
        %p989 = pneg %p988
      $region50: #{_lambda_.5} parent=5 // pred_check_branch
        %991 = sbr.rel (%p989) target = $region52
      $region51: #{_lambda_.5} parent=5 // pred_region
        %s992 = ssub.s32 %s12, 2
        // Predicated region
        $region53: #{_lambda_.5} parent=51 // pred_check
          %p993 = pneg %p118
        $region54: #{_lambda_.5} parent=51 // pred_check_branch
          %995 = sbr.rel (%p993) target = $region56
        $region55: #{_lambda_.5} parent=51 // pred_region
          %s996 = smul.u32 20, %s25
          %s997 = smul.u32 2, %s26
          %p998 = scmp.lt.s32.totalorder %s996, 79
          %s999 = scalar_select %p998, %s996, 79
          %p1000 = scmp.lt.s32.totalorder %s997, 1
          %s1001 = scalar_select %p1000, %s997, 1
          %s1002 = smul.addr %s999, 2
          %s1003 = sadd.s32 %s1001, %s1002
          %s1004 = smul.addr %s1003, 4
          %s1005 = scalar_lea.vmem %s2, %s1004
        $region56: #{_lambda_.5} parent=51 // pred_fallthru
          _
      $region52: #{_lambda_.5} parent=5 // pred_fallthru
        _
    $region6: #{_lambda_.5} parent=1 // loop_footer
      %s16 = sadd.s32 1, %s12
    $region7: #{_lambda_.5} parent=1 // loop_footer_branch
      %11 = sbr.rel target = $region3
    $region8: #{_lambda_.5} parent=1 // loop_exit
      _
    %1006 = vsyncpa [#allocation4], 1
    %s1007 = scalar_lea.sflag [#allocation4], 1
    %1008 = vsyncpa %s1007, 1
    %1009 = vsyncpa [#allocation6], 1

// kernel: _lambda_.7
$region0: #{_lambda_.7}
  #allocation0 [shape = 'u32[]', space=smem, size = 0x4, offset = 0x4, fixed_abs, tag = 'smem constant byte address 0x4 - core index']
  #allocation1 [shape = 'u32[72,128]{1,0:T(1,128)}', space=vmem, size = 0x9000, scoped, tag = 'internal scratch']
  #allocation2 [shape = 'f32[64,256]{1,0:T(8,128)}', space=vmem, size = 0x10000, scoped, tag = 'scratch operand']
  %s0 = inlined_call_operand.vmem [shape: bf16[2,256,256], index: 0, kind: input, shape index: {}]
  %s1 = inlined_call_operand.vmem [shape: bf16[2,320,256], index: 1, kind: input, shape index: {}]
  %s2 = inlined_call_operand.vmem [shape: bf16[2,320,256], index: 2, kind: input, shape index: {}]
  %s3 = inlined_call_operand.vmem [shape: bf16[1,128,128], index: 3, kind: input, shape index: {}]
  %s4 = inlined_call_operand.vmem [shape: f32[64,128], index: 4, kind: input, shape index: {}]
  %s5 = inlined_call_operand.vmem [shape: bf16[256,256], index: 5, kind: input, shape index: {}]
  %s6 = inlined_call_operand.hbm [shape: f32[2,256,256], index: 6, kind: output, shape index: {}]
  %s7 = sld [smem:[#allocation0]]
  $region106: #{_lambda_.7} parent=0
    _
  %s9 = ssub.s32 1, %s7
  %s10 = scalar_select 0, %s9, %s7
  $region1: #{_lambda_.7} parent=0
    #allocation3 [shape = 'u8[32768]{0}', space=vmem, size = 0x8000, scoped, tag = 'input window, operand 0']
    #allocation4 [shape = 'u8[131072]{0}', space=vmem, size = 0x20000, scoped, tag = 'output window, operand 0']
    #allocation5 [shape = 's32[2]{0}', space=sflag, size = 0x8, scoped, tag = 'scoped memory for _lambda_.7']
    %11 = vsyncpa [#allocation5], 0
    %s12 = scalar_lea.sflag [#allocation5], 1
    %13 = vsyncpa %s12, 0
    loop: start=0, step=1, limit=18
    $region2: #{_lambda_.7} parent=1 // loop_pre_header
      _
    $region3: #{_lambda_.7} parent=1 // loop_header
      %s15 = sphi 0, %s19
      %p16 = scmp.ge.s32.totalorder %s15, 18
      %s22 = sphi 0, %s41
      %s23 = sphi 0, %s37
      %s24 = sphi 0, %s33
      %s25 = sphi 0, %s22
      %s26 = sphi 0, %s23
      %s27 = sphi 0, %s24
      %s28 = sphi 0, %s25
      %s29 = sphi 0, %s26
      %s30 = sphi 0, %s27
      %s48 = sphi 0, %s50
      %s51 = sphi 0, %s48
      %s52 = sphi 0, %s51
      %s68 = sphi 0, %s52
      %s74 = sphi 0, %s76
      %s77 = sphi 0, %s74
      %s78 = sphi 0, %s77
      %s94 = sphi 0, %s78
      %s100 = sphi 0, %s102
      %s103 = sphi 0, %s100
      %s104 = sphi 0, %s103
      %s120 = sphi 0, %s104
      %s124 = sphi 0, %s124
      %s126 = sphi 0, %s124
      %s127 = sphi 0, %s126
      %s141 = sphi 0, %s127
      %s145 = sphi 0, %s145
      %s147 = sphi 0, %s145
      %s148 = sphi 0, %s147
      %s162 = sphi 0, %s148
      %s166 = sphi 0, %s166
      %s168 = sphi 0, %s166
      %s169 = sphi 0, %s168
      %s183 = sphi 0, %s169
      %s191 = sphi 0, %s193
      %s194 = sphi 0, %s191
      %s195 = sphi 0, %s194
      %s211 = sphi 0, %s195
    $region4: #{_lambda_.7} parent=1 // loop_header_branch
      %18 = sbr.rel (%p16) target = $region8
    $region5: #{_lambda_.7} parent=1 // loop_body
      %s20 = ssub.s32 %s15, 1
      %s21 = ssub.s32 %s15, 2
      %s31 = sadd.s32 1, %s24
      %p32 = scmp.ge.s32.totalorder %s31, 2
      %s33 = scalar_select %p32, 0, %s31
      %s34 = sadd.s32 1, %s23
      %s35 = scalar_select %p32, %s34, %s23
      %p36 = scmp.ge.s32.totalorder %s35, 4
      %s37 = scalar_select %p36, 0, %s35
      %s38 = sadd.s32 1, %s22
      %s39 = scalar_select %p36, %s38, %s22
      %p40 = scmp.ge.s32.totalorder %s39, 2
      %s41 = scalar_select %p40, 0, %s39
      %s42 = ssub.s32 %s22, %s41
      %s43 = ssub.s32 %s23, %s37
      %s44 = sor.u32 %s42, %s43
      %s45 = ssub.s32 %s24, %s33
      %s46 = sor.u32 %s44, %s45
      %p47 = scmp.eq.s32.totalorder %s46, 0
      %s49 = sadd.s32 %s48, 1
      %s50 = scalar_select %p47, %s48, %s49
      %p53 = pneg %p47
      %p54 = scmp.eq.s32.totalorder %s15, 15
      %p55 = por %p53, %p54
      %p56 = scmp.ne.s32.totalorder %s48, %s51
      %p57 = scmp.eq.s32.totalorder %s15, 0
      %p58 = por %p56, %p57
      %p59 = scmp.ne.s32.totalorder %s48, %s51
      %p60 = scmp.eq.s32.totalorder %s20, 15
      %p61 = por %p59, %p60
      %p62 = scmp.ne.s32.totalorder %s51, %s52
      %p63 = scmp.eq.s32.totalorder %s20, 0
      %p64 = por %p62, %p63
      %p65 = scmp.ne.s32.totalorder %s51, %s52
      %p66 = scmp.eq.s32.totalorder %s21, 15
      %p67 = por %p65, %p66
      %p69 = scmp.ne.s32.totalorder %s52, %s68
      %p70 = scmp.eq.s32.totalorder %s21, 0
      %p71 = por %p69, %p70
      %s72 = ssub.s32 %s22, %s41
      %p73 = scmp.eq.s32.totalorder %s72, 0
      %s75 = sadd.s32 %s74, 1
      %s76 = scalar_select %p73, %s74, %s75
      %p79 = pneg %p73
      %p80 = scmp.eq.s32.totalorder %s15, 15
      %p81 = por %p79, %p80
      %p82 = scmp.ne.s32.totalorder %s74, %s77
      %p83 = scmp.eq.s32.totalorder %s15, 0
      %p84 = por %p82, %p83
      %p85 = scmp.ne.s32.totalorder %s74, %s77
      %p86 = scmp.eq.s32.totalorder %s20, 15
      %p87 = por %p85, %p86
      %p88 = scmp.ne.s32.totalorder %s77, %s78
      %p89 = scmp.eq.s32.totalorder %s20, 0
      %p90 = por %p88, %p89
      %p91 = scmp.ne.s32.totalorder %s77, %s78
      %p92 = scmp.eq.s32.totalorder %s21, 15
      %p93 = por %p91, %p92
      %p95 = scmp.ne.s32.totalorder %s78, %s94
      %p96 = scmp.eq.s32.totalorder %s21, 0
      %p97 = por %p95, %p96
      %s98 = ssub.s32 %s22, %s41
      %p99 = scmp.eq.s32.totalorder %s98, 0
      %s101 = sadd.s32 %s100, 1
      %s102 = scalar_select %p99, %s100, %s101
      %p105 = pneg %p99
      %p106 = scmp.eq.s32.totalorder %s15, 15
      %p107 = por %p105, %p106
      %p108 = scmp.ne.s32.totalorder %s100, %s103
      %p109 = scmp.eq.s32.totalorder %s15, 0
      %p110 = por %p108, %p109
      %p111 = scmp.ne.s32.totalorder %s100, %s103
      %p112 = scmp.eq.s32.totalorder %s20, 15
      %p113 = por %p111, %p112
      %p114 = scmp.ne.s32.totalorder %s103, %s104
      %p115 = scmp.eq.s32.totalorder %s20, 0
      %p116 = por %p114, %p115
      %p117 = scmp.ne.s32.totalorder %s103, %s104
      %p118 = scmp.eq.s32.totalorder %s21, 15
      %p119 = por %p117, %p118
      %p121 = scmp.ne.s32.totalorder %s104, %s120
      %p122 = scmp.eq.s32.totalorder %s21, 0
      %p123 = por %p121, %p122
      %s125 = sadd.s32 %s124, 1
      %p128 = scmp.eq.s32.totalorder %s15, 15
      %p129 = scmp.ne.s32.totalorder %s124, %s126
      %p130 = scmp.eq.s32.totalorder %s15, 0
      %p131 = por %p129, %p130
      %p132 = scmp.ne.s32.totalorder %s124, %s126
      %p133 = scmp.eq.s32.totalorder %s20, 15
      %p134 = por %p132, %p133
      %p135 = scmp.ne.s32.totalorder %s126, %s127
      %p136 = scmp.eq.s32.totalorder %s20, 0
      %p137 = por %p135, %p136
      %p138 = scmp.ne.s32.totalorder %s126, %s127
      %p139 = scmp.eq.s32.totalorder %s21, 15
      %p140 = por %p138, %p139
      %p142 = scmp.ne.s32.totalorder %s127, %s141
      %p143 = scmp.eq.s32.totalorder %s21, 0
      %p144 = por %p142, %p143
      %s146 = sadd.s32 %s145, 1
      %p149 = scmp.eq.s32.totalorder %s15, 15
      %p150 = scmp.ne.s32.totalorder %s145, %s147
      %p151 = scmp.eq.s32.totalorder %s15, 0
      %p152 = por %p150, %p151
      %p153 = scmp.ne.s32.totalorder %s145, %s147
      %p154 = scmp.eq.s32.totalorder %s20, 15
      %p155 = por %p153, %p154
      %p156 = scmp.ne.s32.totalorder %s147, %s148
      %p157 = scmp.eq.s32.totalorder %s20, 0
      %p158 = por %p156, %p157
      %p159 = scmp.ne.s32.totalorder %s147, %s148
      %p160 = scmp.eq.s32.totalorder %s21, 15
      %p161 = por %p159, %p160
      %p163 = scmp.ne.s32.totalorder %s148, %s162
      %p164 = scmp.eq.s32.totalorder %s21, 0
      %p165 = por %p163, %p164
      %s167 = sadd.s32 %s166, 1
      %p170 = scmp.eq.s32.totalorder %s15, 15
      %p171 = scmp.ne.s32.totalorder %s166, %s168
      %p172 = scmp.eq.s32.totalorder %s15, 0
      %p173 = por %p171, %p172
      %p174 = scmp.ne.s32.totalorder %s166, %s168
      %p175 = scmp.eq.s32.totalorder %s20, 15
      %p176 = por %p174, %p175
      %p177 = scmp.ne.s32.totalorder %s168, %s169
      %p178 = scmp.eq.s32.totalorder %s20, 0
      %p179 = por %p177, %p178
      %p180 = scmp.ne.s32.totalorder %s168, %s169
      %p181 = scmp.eq.s32.totalorder %s21, 15
      %p182 = por %p180, %p181
      %p184 = scmp.ne.s32.totalorder %s169, %s183
      %p185 = scmp.eq.s32.totalorder %s21, 0
      %p186 = por %p184, %p185
      %s187 = ssub.s32 %s22, %s41
      %s188 = ssub.s32 %s23, %s37
      %s189 = sor.u32 %s187, %s188
      %p190 = scmp.eq.s32.totalorder %s189, 0
      %s192 = sadd.s32 %s191, 1
      %s193 = scalar_select %p190, %s191, %s192
      %p196 = pneg %p190
      %p197 = scmp.eq.s32.totalorder %s15, 15
      %p198 = por %p196, %p197
      %p199 = scmp.ne.s32.totalorder %s191, %s194
      %p200 = scmp.eq.s32.totalorder %s15, 0
      %p201 = por %p199, %p200
      %p202 = scmp.ne.s32.totalorder %s191, %s194
      %p203 = scmp.eq.s32.totalorder %s20, 15
      %p204 = por %p202, %p203
      %p205 = scmp.ne.s32.totalorder %s194, %s195
      %p206 = scmp.eq.s32.totalorder %s20, 0
      %p207 = por %p205, %p206
      %p208 = scmp.ne.s32.totalorder %s194, %s195
      %p209 = scmp.eq.s32.totalorder %s21, 15
      %p210 = por %p208, %p209
      %p212 = scmp.ne.s32.totalorder %s195, %s211
      %p213 = scmp.eq.s32.totalorder %s21, 0
      %p214 = por %p212, %p213
      %p215 = scmp.le.s32.totalorder 1, %s15
      %p216 = scmp.lt.s32.totalorder %s15, 17
      %p217 = pnand %p215, %p216
      %p218 = pneg %p217
      // Predicated region
      $region9: #{_lambda_.7} parent=5 // pred_check
        _
      $region10: #{_lambda_.7} parent=5 // pred_check_branch
        %220 = sbr.rel (%p217) target = $region12
      $region11: #{_lambda_.7} parent=5 // pred_region
        %s221 = ssub.s32 %s15, 1
        // Predicated region
        $region13: #{_lambda_.7} parent=11 // pred_check
          %p222 = pneg %p137
        $region14: #{_lambda_.7} parent=11 // pred_check_branch
          %224 = sbr.rel (%p222) target = $region16
        $region15: #{_lambda_.7} parent=11 // pred_region
          _
        $region16: #{_lambda_.7} parent=11 // pred_fallthru
          _
        // Predicated region
        $region17: #{_lambda_.7} parent=11 // pred_check
          %p225 = pneg %p158
        $region18: #{_lambda_.7} parent=11 // pred_check_branch
          %227 = sbr.rel (%p225) target = $region20
        $region19: #{_lambda_.7} parent=11 // pred_region
          _
        $region20: #{_lambda_.7} parent=11 // pred_fallthru
          _
        // Predicated region
        $region21: #{_lambda_.7} parent=11 // pred_check
          %p228 = pneg %p179
        $region22: #{_lambda_.7} parent=11 // pred_check_branch
          %230 = sbr.rel (%p228) target = $region24
        $region23: #{_lambda_.7} parent=11 // pred_region
          _
        $region24: #{_lambda_.7} parent=11 // pred_fallthru
          _
      $region12: #{_lambda_.7} parent=5 // pred_fallthru
        _
      %p231 = scmp.lt.s32.totalorder %s15, 16
      // Predicated region
      $region25: #{_lambda_.7} parent=5 // pred_check
        %p232 = pneg %p231
      $region26: #{_lambda_.7} parent=5 // pred_check_branch
        %234 = sbr.rel (%p232) target = $region28
      $region27: #{_lambda_.7} parent=5 // pred_region
        // Predicated region
        $region29: #{_lambda_.7} parent=27 // pred_check
          %p235 = pneg %p58
        $region30: #{_lambda_.7} parent=27 // pred_check_branch
          %237 = sbr.rel (%p235) target = $region32
        $region31: #{_lambda_.7} parent=27 // pred_region
          %s238 = sand.u32 %s48, 1
          %s239 = sand.u32 %s48, 1
          %s240 = smul.addr %s239, 32
          %s241 = scalar_lea.vmem [#allocation3], %s240
          %s242 = smul.u32 8, %s23
          %s243 = smul.addr %s242, 2
          %s244 = sadd.s32 %s24, %s243
          %s245 = smul.addr %s22, 64
          %s246 = sadd.s32 %s244, %s245
          %s247 = smul.addr %s246, 4
          %s248 = scalar_lea.vmem %s0, %s247
          // Predicated region
          $region33: #{_lambda_.7} parent=31 // pred_check
            _
          $region34: #{_lambda_.7} parent=31 // pred_check_branch
            %250 = sbr.rel (0) target = $region36
          $region35: #{_lambda_.7} parent=31 // pred_region
            // Predicated region
            $region37: #{_lambda_.7} parent=35 // pred_check
              _
            $region38: #{_lambda_.7} parent=35 // pred_check_branch
              %252 = sbr.rel target = $region40
            $region39: #{_lambda_.7} parent=35 // pred_region
              // Predicated region
              $region52: #{_lambda_.7} parent=39 // pred_check
                _
              $region53: #{_lambda_.7} parent=39 // pred_check_branch
                %282 = sbr.rel (0) target = $region55
              $region54: #{_lambda_.7} parent=39 // pred_region
                loop: start=0, step=1, limit=1
                $region56: #{_lambda_.7} parent=54 // loop_pre_header
                  _
                $region57: #{_lambda_.7} parent=54 // loop_header
                  %s284 = sphi 0, %s288
                  %p285 = scmp.ge.s32.totalorder %s284, 1
                  %s289 = sphi %s248, %s248
                  %s290 = sphi %s241, %s241
                $region58: #{_lambda_.7} parent=54 // loop_header_branch
                  %287 = sbr.rel (%p285) target = $region62
                $region59: #{_lambda_.7} parent=54 // loop_body
                  _
                $region60: #{_lambda_.7} parent=54 // loop_footer
                  %s288 = sadd.s32 1, %s284
                $region61: #{_lambda_.7} parent=54 // loop_footer_branch
                  %283 = sbr.rel target = $region57
                $region62: #{_lambda_.7} parent=54 // loop_exit
                  _
                %s292 = ssub.s32 16, 1
                loop: start=0, step=1, limit=1
                $region63: #{_lambda_.7} parent=54 // loop_pre_header
                  _
                $region64: #{_lambda_.7} parent=54 // loop_header
                  %s294 = sphi 0, %s298
                  %p295 = scmp.ge.s32.totalorder %s294, 1
                  %s299 = sphi %s248, %s248
                  %s300 = sphi %s241, %s241
                $region65: #{_lambda_.7} parent=54 // loop_header_branch
                  %297 = sbr.rel (%p295) target = $region69
                $region66: #{_lambda_.7} parent=54 // loop_body
                  %v301 = vld [vmem:[%s299] sm:%s292]
                  %302 = vst [vmem:[%s300] sm:%s292] %v301
                  %v303 = vld [vmem:[%s299 + $0x8] sm:%s292]
                  %304 = vst [vmem:[%s300 + $0x4] sm:%s292] %v303
                  %v305 = vld [vmem:[%s299 + $0x10] sm:%s292]
                  %306 = vst [vmem:[%s300 + $0x8] sm:%s292] %v305
                  %v307 = vld [vmem:[%s299 + $0x18] sm:%s292]
                  %308 = vst [vmem:[%s300 + $0xc] sm:%s292] %v307
                  %v309 = vld [vmem:[%s299 + $0x20] sm:%s292]
                  %310 = vst [vmem:[%s300 + $0x10] sm:%s292] %v309
                  %v311 = vld [vmem:[%s299 + $0x28] sm:%s292]
                  %312 = vst [vmem:[%s300 + $0x14] sm:%s292] %v311
                  %v313 = vld [vmem:[%s299 + $0x30] sm:%s292]
                  %314 = vst [vmem:[%s300 + $0x18] sm:%s292] %v313
                  %v315 = vld [vmem:[%s299 + $0x38] sm:%s292]
                  %316 = vst [vmem:[%s300 + $0x1c] sm:%s292] %v315
                $region67: #{_lambda_.7} parent=54 // loop_footer
                  %s298 = sadd.s32 1, %s294
                $region68: #{_lambda_.7} parent=54 // loop_footer_branch
                  %293 = sbr.rel target = $region64
                $region69: #{_lambda_.7} parent=54 // loop_exit
                  _
              $region55: #{_lambda_.7} parent=39 // pred_fallthru
                _
            $region40: #{_lambda_.7} parent=35 // pred_fallthru
              _
            // Predicated region
            $region41: #{_lambda_.7} parent=35 // pred_check
              _
            $region42: #{_lambda_.7} parent=35 // pred_check_branch
              %254 = sbr.rel (0) target = $region44
            $region43: #{_lambda_.7} parent=35 // pred_region
              %s256 = ssub.s32 16, 1
              loop: start=0, step=1, limit=1
              $region45: #{_lambda_.7} parent=43 // loop_pre_header
                _
              $region46: #{_lambda_.7} parent=43 // loop_header
                %s258 = sphi 0, %s262
                %p259 = scmp.ge.s32.totalorder %s258, 1
                %s263 = sphi %s248, %s248
                %s264 = sphi %s241, %s241
              $region47: #{_lambda_.7} parent=43 // loop_header_branch
                %261 = sbr.rel (%p259) target = $region51
              $region48: #{_lambda_.7} parent=43 // loop_body
                %v265 = vld [vmem:[%s263] sm:%s256]
                %266 = vst [vmem:[%s264] sm:%s256] %v265
                %v267 = vld [vmem:[%s263 + $0x8] sm:%s256]
                %268 = vst [vmem:[%s264 + $0x4] sm:%s256] %v267
                %v269 = vld [vmem:[%s263 + $0x10] sm:%s256]
                %270 = vst [vmem:[%s264 + $0x8] sm:%s256] %v269
                %v271 = vld [vmem:[%s263 + $0x18] sm:%s256]
                %272 = vst [vmem:[%s264 + $0xc] sm:%s256] %v271
                %v273 = vld [vmem:[%s263 + $0x20] sm:%s256]
                %274 = vst [vmem:[%s264 + $0x10] sm:%s256] %v273
                %v275 = vld [vmem:[%s263 + $0x28] sm:%s256]
                %276 = vst [vmem:[%s264 + $0x14] sm:%s256] %v275
                %v277 = vld [vmem:[%s263 + $0x30] sm:%s256]
                %278 = vst [vmem:[%s264 + $0x18] sm:%s256] %v277
                %v279 = vld [vmem:[%s263 + $0x38] sm:%s256]
                %280 = vst [vmem:[%s264 + $0x1c] sm:%s256] %v279
              $region49: #{_lambda_.7} parent=43 // loop_footer
                %s262 = sadd.s32 1, %s258
              $region50: #{_lambda_.7} parent=43 // loop_footer_branch
                %257 = sbr.rel target = $region46
              $region51: #{_lambda_.7} parent=43 // loop_exit
                _
            $region44: #{_lambda_.7} parent=35 // pred_fallthru
              _
          $region36: #{_lambda_.7} parent=31 // pred_fallthru
            _
          %317 = vnop
        $region32: #{_lambda_.7} parent=27 // pred_fallthru
          _
        // Predicated region
        $region70: #{_lambda_.7} parent=27 // pred_check
          %p318 = pneg %p84
        $region71: #{_lambda_.7} parent=27 // pred_check_branch
          %320 = sbr.rel (%p318) target = $region73
        $region72: #{_lambda_.7} parent=27 // pred_region
          %p321 = scmp.lt.s32.totalorder %s22, 1
          %s322 = scalar_select %p321, %s22, 1
          %s323 = smul.addr %s322, 80
          %s324 = smul.addr %s323, 4
          %s325 = scalar_lea.vmem %s1, %s324
        $region73: #{_lambda_.7} parent=27 // pred_fallthru
          _
        // Predicated region
        $region74: #{_lambda_.7} parent=27 // pred_check
          %p326 = pneg %p110
        $region75: #{_lambda_.7} parent=27 // pred_check_branch
          %328 = sbr.rel (%p326) target = $region77
        $region76: #{_lambda_.7} parent=27 // pred_region
          %p329 = scmp.lt.s32.totalorder %s22, 1
          %s330 = scalar_select %p329, %s22, 1
          %s331 = smul.addr %s330, 80
          %s332 = smul.addr %s331, 4
          %s333 = scalar_lea.vmem %s2, %s332
        $region77: #{_lambda_.7} parent=27 // pred_fallthru
          _
      $region28: #{_lambda_.7} parent=5 // pred_fallthru
        _
      %p334 = scmp.le.s32.totalorder 1, %s15
      %p335 = scmp.lt.s32.totalorder %s15, 17
      %p336 = pnand %p334, %p335
      %p337 = pneg %p336
      // Predicated region
      $region78: #{_lambda_.7} parent=5 // pred_check
        _
      $region79: #{_lambda_.7} parent=5 // pred_check_branch
        %339 = sbr.rel (%p336) target = $region81
      $region80: #{_lambda_.7} parent=5 // pred_region
        %s340 = ssub.s32 %s15, 1
        %s341 = sand.u32 %s51, 1
        %s342 = sand.u32 %s51, 1
        %s343 = smul.addr %s342, 32
        %s344 = scalar_lea.vmem [#allocation3], %s343
        // Predicated region
        $region82: #{_lambda_.7} parent=80 // pred_check
          %p345 = pneg %p64
        $region83: #{_lambda_.7} parent=80 // pred_check_branch
          %347 = sbr.rel (%p345) target = $region85
        $region84: #{_lambda_.7} parent=80 // pred_region
          _
        $region85: #{_lambda_.7} parent=80 // pred_fallthru
          _
        %s348 = sand.u32 %s51, 1
        %s349 = sand.u32 %s51, 1
        %s350 = smul.addr %s349, 32
        %s351 = scalar_lea.vmem [#allocation3], %s350
        %p352 = pneg %p64
        %p353 = pneg %p61
        %p354 = scmp.lt.s32.totalorder %s25, 1
        %s355 = scalar_select %p354, %s25, 1
        %s356 = smul.addr %s355, 80
        %s357 = smul.addr %s356, 4
        %s358 = scalar_lea.vmem %s1, %s357
        %p359 = pneg %p90
        %p360 = pneg %p87
        %p361 = scmp.lt.s32.totalorder %s25, 1
        %s362 = scalar_select %p361, %s25, 1
        %s363 = smul.addr %s362, 80
        %s364 = smul.addr %s363, 4
        %s365 = scalar_lea.vmem %s2, %s364
        %p366 = pneg %p116
        %p367 = pneg %p113
        %p368 = pneg %p137
        %p369 = pneg %p134
        %p370 = pneg %p158
        %p371 = pneg %p155
        %p372 = pneg %p179
        %p373 = pneg %p176
        %p374 = pneg %p207
        %p375 = pneg %p204
        %s376 = sand.u32 %s194, 1
        %s377 = scalar_lea.sflag [#allocation5], %s376
        %s378 = sand.u32 %s194, 1
        %s379 = smul.addr %s378, 128
        %s380 = scalar_lea.vmem [#allocation4], %s379
        %s381 = smul.u32 8, %s26
        %p382 = scmp.lt.s32.totalorder %s25, 1
        %s383 = scalar_select %p382, %s25, 1
        %s384 = smul.addr %s383, 80
        %s385 = smul.addr %s384, 4
        %s386 = scalar_lea.vmem %s1, %s385
        %p387 = scmp.lt.s32.totalorder %s25, 1
        %s388 = scalar_select %p387, %s25, 1
        %s389 = smul.addr %s388, 80
        %s390 = smul.addr %s389, 4
        %s391 = scalar_lea.vmem %s2, %s390
        %s392 = smul.u32 8, %s26
        %p393 = scmp.eq.s32.totalorder %s27, 0
        // Predicated region
        $region86: #{_lambda_.7} parent=80 // pred_check
          %p394 = pneg %p393
        $region87: #{_lambda_.7} parent=80 // pred_check_branch
          %396 = sbr.rel (%p394) target = $region89
        $region88: #{_lambda_.7} parent=80 // pred_region
          %397 = vst [vmem:[#allocation2] sm:$0xff] 0.0
          %398 = vst [vmem:[#allocation2 + $0x8] sm:$0xff] 0.0
          %399 = vst [vmem:[#allocation2 + $0x10] sm:$0xff] 0.0
          %400 = vst [vmem:[#allocation2 + $0x18] sm:$0xff] 0.0
          %401 = vst [vmem:[#allocation2 + $0x20] sm:$0xff] 0.0
          %402 = vst [vmem:[#allocation2 + $0x28] sm:$0xff] 0.0
          %403 = vst [vmem:[#allocation2 + $0x30] sm:$0xff] 0.0
          %404 = vst [vmem:[#allocation2 + $0x38] sm:$0xff] 0.0
          %405 = vst [vmem:[#allocation2 + $0x40] sm:$0xff] 0.0
          %406 = vst [vmem:[#allocation2 + $0x48] sm:$0xff] 0.0
          %407 = vst [vmem:[#allocation2 + $0x50] sm:$0xff] 0.0
          %408 = vst [vmem:[#allocation2 + $0x58] sm:$0xff] 0.0
          %409 = vst [vmem:[#allocation2 + $0x60] sm:$0xff] 0.0
          %410 = vst [vmem:[#allocation2 + $0x68] sm:$0xff] 0.0
          %411 = vst [vmem:[#allocation2 + $0x70] sm:$0xff] 0.0
          %412 = vst [vmem:[#allocation2 + $0x78] sm:$0xff] 0.0
        $region89: #{_lambda_.7} parent=80 // pred_fallthru
          _
        %v413 = vld [vmem:[%s344] sm:$0xf]
        %v414 = vld [vmem:[%s344 + $0x4] sm:$0xf]
        %v415 = vld [vmem:[%s344 + $0x8] sm:$0xf]
        %v416 = vld [vmem:[%s344 + $0xc] sm:$0xf]
        %v417 = vld [vmem:[%s344 + $0x10] sm:$0xf]
        %v418 = vld [vmem:[%s344 + $0x14] sm:$0xf]
        %v419 = vld [vmem:[%s344 + $0x18] sm:$0xf]
        %v420 = vld [vmem:[%s344 + $0x1c] sm:$0xf]
        %s421 = smul.u32 %s26, 64
        %s422 = smul.u32 %s27, 128
        %s423 = sshra.s32 %s422, 7
        %s424 = sand.u32 %s422, 127
        %s425 = sshra.s32 %s421, 3
        %s426 = sand.u32 %s421, 7
        %s427 = smul.u32 %s425, 2
        %s428 = sadd.s32 %s423, %s427
        %s429 = smul.addr %s428, 4
        %s430 = scalar_lea.vmem %s386, %s429
        %v431 = vld [vmem:[%s430] sm:$0xf]
        %v432 = vld [vmem:[%s430 + $0x8] sm:$0xf]
        %v433 = vld [vmem:[%s430 + $0x10] sm:$0xf]
        %v434 = vld [vmem:[%s430 + $0x18] sm:$0xf]
        %v435 = vld [vmem:[%s430 + $0x20] sm:$0xf]
        %v436 = vld [vmem:[%s430 + $0x28] sm:$0xf]
        %v437 = vld [vmem:[%s430 + $0x30] sm:$0xf]
        %v438 = vld [vmem:[%s430 + $0x38] sm:$0xf]
        %v439 = vld [vmem:[%s430 + $0x40] sm:$0xf]
        %v440 = vld [vmem:[%s430 + $0x48] sm:$0xf]
        %v441 = vld [vmem:[%s430 + $0x50] sm:$0xf]
        %v442 = vld [vmem:[%s430 + $0x58] sm:$0xf]
        %v443 = vld [vmem:[%s430 + $0x60] sm:$0xf]
        %v444 = vld [vmem:[%s430 + $0x68] sm:$0xf]
        %v445 = vld [vmem:[%s430 + $0x70] sm:$0xf]
        %v446 = vld [vmem:[%s430 + $0x78] sm:$0xf]
        %s447 = smul.addr %s428, 4
        %s448 = scalar_lea.vmem %s391, %s447
        %v449 = vld [vmem:[%s448] sm:$0xf]
        %v450 = vld [vmem:[%s448 + $0x8] sm:$0xf]
        %v451 = vld [vmem:[%s448 + $0x10] sm:$0xf]
        %v452 = vld [vmem:[%s448 + $0x18] sm:$0xf]
        %v453 = vld [vmem:[%s448 + $0x20] sm:$0xf]
        %v454 = vld [vmem:[%s448 + $0x28] sm:$0xf]
        %v455 = vld [vmem:[%s448 + $0x30] sm:$0xf]
        %v456 = vld [vmem:[%s448 + $0x38] sm:$0xf]
        %v457 = vld [vmem:[%s448 + $0x40] sm:$0xf]
        %v458 = vld [vmem:[%s448 + $0x48] sm:$0xf]
        %v459 = vld [vmem:[%s448 + $0x50] sm:$0xf]
        %v460 = vld [vmem:[%s448 + $0x58] sm:$0xf]
        %v461 = vld [vmem:[%s448 + $0x60] sm:$0xf]
        %v462 = vld [vmem:[%s448 + $0x68] sm:$0xf]
        %v463 = vld [vmem:[%s448 + $0x70] sm:$0xf]
        %v464 = vld [vmem:[%s448 + $0x78] sm:$0xf]
        %v465 = vld [vmem:[%s3] sm:$0xf]
        %v466 = vld [vmem:[%s3 + $0x4] sm:$0xf]
        %v467 = vld [vmem:[%s3 + $0x8] sm:$0xf]
        %v468 = vld [vmem:[%s3 + $0xc] sm:$0xf]
        %v469 = vld [vmem:[%s3 + $0x10] sm:$0xf]
        %v470 = vld [vmem:[%s3 + $0x14] sm:$0xf]
        %v471 = vld [vmem:[%s3 + $0x18] sm:$0xf]
        %v472 = vld [vmem:[%s3 + $0x1c] sm:$0xf]
        %v473 = vld [vmem:[%s3 + $0x20] sm:$0xf]
        %v474 = vld [vmem:[%s3 + $0x24] sm:$0xf]
        %v475 = vld [vmem:[%s3 + $0x28] sm:$0xf]
        %v476 = vld [vmem:[%s3 + $0x2c] sm:$0xf]
        %v477 = vld [vmem:[%s3 + $0x30] sm:$0xf]
        %v478 = vld [vmem:[%s3 + $0x34] sm:$0xf]
        %v479 = vld [vmem:[%s3 + $0x38] sm:$0xf]
        %v480 = vld [vmem:[%s3 + $0x3c] sm:$0xf]
        %v489 = vunpack.c.l.b16 %v413
        %v490 = vunpack.c.l.b16 %v414
        %v491 = vunpack.c.l.b16 %v415
        %v492 = vunpack.c.l.b16 %v416
        %v493 = vunpack.c.l.b16 %v417
        %v494 = vunpack.c.l.b16 %v418
        %v495 = vunpack.c.l.b16 %v419
        %v496 = vunpack.c.l.b16 %v420
        %v497 = vpack.c.b16 %v490, %v489
        %v498 = vpack.c.b16 %v492, %v491
        %v499 = vpack.c.b16 %v494, %v493
        %v500 = vpack.c.b16 %v496, %v495
        %v521 = vunpack.c.l.b16 %v465
        %v522 = vunpack.c.l.b16 %v466
        %v523 = vunpack.c.l.b16 %v467
        %v524 = vunpack.c.l.b16 %v468
        %v525 = vunpack.c.l.b16 %v469
        %v526 = vunpack.c.l.b16 %v470
        %v527 = vunpack.c.l.b16 %v471
        %v528 = vunpack.c.l.b16 %v472
        %v529 = vunpack.c.l.b16 %v473
        %v530 = vunpack.c.l.b16 %v474
        %v531 = vunpack.c.l.b16 %v475
        %v532 = vunpack.c.l.b16 %v476
        %v533 = vunpack.c.l.b16 %v477
        %v534 = vunpack.c.l.b16 %v478
        %v535 = vunpack.c.l.b16 %v479
        %v536 = vunpack.c.l.b16 %v480
        %v537 = vpack.c.b16 %v522, %v521
        %v538 = vpack.c.b16 %v524, %v523
        %v539 = vpack.c.b16 %v526, %v525
        %v540 = vpack.c.b16 %v528, %v527
        %v541 = vpack.c.b16 %v530, %v529
        %v542 = vpack.c.b16 %v532, %v531
        %v543 = vpack.c.b16 %v534, %v533
        %v544 = vpack.c.b16 %v536, %v535
        %553 = vmatpush.bf16.msra.mxu0 %v544
        %554 = vmatpush.bf16.msra.mxu0 %v543
        %555 = vmatpush.bf16.msra.mxu0 %v542
        %556 = vmatpush.bf16.msra.mxu0 %v541
        %557 = vmatpush.bf16.msra.mxu0 %v540
        %558 = vmatpush.bf16.msra.mxu0 %v539
        %559 = vmatpush.bf16.msra.mxu0 %v538
        %560 = vmatpush.bf16.msra.mxu0 %v537
        %561 = vmatmul.bf16.gmra.mxu0 %v497
        %v562 = vpop.f32.mrf.mxu0
        %v563 = vadd.f32 0.0, %v562
        %v564 = vpop.f32.mrf.mxu0
        %v565 = vadd.f32 0.0, %v564
        %566 = vmatmul.bf16.gmra.mxu0 %v498
        %v567 = vpop.f32.mrf.mxu0
        %v568 = vadd.f32 0.0, %v567
        %v569 = vpop.f32.mrf.mxu0
        %v570 = vadd.f32 0.0, %v569
        %571 = vmatmul.bf16.gmra.mxu0 %v499
        %v572 = vpop.f32.mrf.mxu0
        %v573 = vadd.f32 0.0, %v572
        %v574 = vpop.f32.mrf.mxu0
        %v575 = vadd.f32 0.0, %v574
        %576 = vmatmul.bf16.gmra.mxu0 %v500
        %v577 = vpop.f32.mrf.mxu0
        %v578 = vadd.f32 0.0, %v577
        %v579 = vpop.f32.mrf.mxu0
        %v580 = vadd.f32 0.0, %v579
        %581 = vdwg.mxu0
        %583 = vrot.lane.b32.xlu0 %v563, 256
        %v584 = vpop.permute.xlu0 %583
        %s586 = sor.u32 256, 8
        %587 = vrot.lane.b32.xlu0 %v565, %s586
        %v588 = vpop.permute.xlu0 %587
        %s590 = sor.u32 256, 16
        %591 = vrot.lane.b32.xlu0 %v568, %s590
        %v592 = vpop.permute.xlu0 %591
        %s594 = sor.u32 256, 24
        %595 = vrot.lane.b32.xlu0 %v570, %s594
        %v596 = vpop.permute.xlu0 %595
        %s598 = sor.u32 256, 32
        %599 = vrot.lane.b32.xlu0 %v573, %s598
        %v600 = vpop.permute.xlu0 %599
        %s602 = sor.u32 256, 40
        %603 = vrot.lane.b32.xlu0 %v575, %s602
        %v604 = vpop.permute.xlu0 %603
        %s606 = sor.u32 256, 48
        %607 = vrot.lane.b32.xlu0 %v578, %s606
        %v608 = vpop.permute.xlu0 %607
        %s610 = sor.u32 256, 56
        %611 = vrot.lane.b32.xlu0 %v580, %s610
        %v612 = vpop.permute.xlu0 %611
        %v629 = vunpack.c.l.b16 %v431
        %v630 = vunpack.c.l.b16 %v432
        %v631 = vunpack.c.l.b16 %v433
        %v632 = vunpack.c.l.b16 %v434
        %v633 = vunpack.c.l.b16 %v435
        %v634 = vunpack.c.l.b16 %v436
        %v635 = vunpack.c.l.b16 %v437
        %v636 = vunpack.c.l.b16 %v438
        %v637 = vunpack.c.l.b16 %v439
        %v638 = vunpack.c.l.b16 %v440
        %v639 = vunpack.c.l.b16 %v441
        %v640 = vunpack.c.l.b16 %v442
        %v641 = vunpack.c.l.b16 %v443
        %v642 = vunpack.c.l.b16 %v444
        %v643 = vunpack.c.l.b16 %v445
        %v644 = vunpack.c.l.b16 %v446
        %v645 = vpack.c.b16 %v630, %v629
        %v646 = vpack.c.b16 %v632, %v631
        %v647 = vpack.c.b16 %v634, %v633
        %v648 = vpack.c.b16 %v636, %v635
        %v649 = vpack.c.b16 %v638, %v637
        %v650 = vpack.c.b16 %v640, %v639
        %v651 = vpack.c.b16 %v642, %v641
        %v652 = vpack.c.b16 %v644, %v643
        %661 = vmatpush.bf16.xpose.msra.mxu0 %v652
        %662 = vmatpush.bf16.xpose.msra.mxu0 %v651
        %663 = vmatpush.bf16.xpose.msra.mxu0 %v650
        %664 = vmatpush.bf16.xpose.msra.mxu0 %v649
        %665 = vmatpush.bf16.xpose.msra.mxu0 %v648
        %666 = vmatpush.bf16.xpose.msra.mxu0 %v647
        %667 = vmatpush.bf16.xpose.msra.mxu0 %v646
        %668 = vmatpush.bf16.xpose.msra.mxu0 %v645
        %669 = vmatmul.bf16.gmra.mxu0 %v497
        %v670 = vpop.f32.mrf.mxu0
        %v671 = vadd.f32 %v584, %v670
        %v672 = vpop.f32.mrf.mxu0
        %v673 = vadd.f32 %v588, %v672
        %674 = vmatmul.bf16.gmra.mxu0 %v498
        %v675 = vpop.f32.mrf.mxu0
        %v676 = vadd.f32 %v592, %v675
        %v677 = vpop.f32.mrf.mxu0
        %v678 = vadd.f32 %v596, %v677
        %679 = vmatmul.bf16.gmra.mxu0 %v499
        %v680 = vpop.f32.mrf.mxu0
        %v681 = vadd.f32 %v600, %v680
        %v682 = vpop.f32.mrf.mxu0
        %v683 = vadd.f32 %v604, %v682
        %684 = vmatmul.bf16.gmra.mxu0 %v500
        %v685 = vpop.f32.mrf.mxu0
        %v686 = vadd.f32 %v608, %v685
        %v687 = vpop.f32.mrf.mxu0
        %v688 = vadd.f32 %v612, %v687
        %689 = vdwg.mxu0
        %v690 = vld [vmem:[%s4] sm:$0xff]
        %v691 = vld [vmem:[%s4 + $0x8] sm:$0xff]
        %v692 = vld [vmem:[%s4 + $0x10] sm:$0xff]
        %v693 = vld [vmem:[%s4 + $0x18] sm:$0xff]
        %v694 = vld [vmem:[%s4 + $0x20] sm:$0xff]
        %v695 = vld [vmem:[%s4 + $0x28] sm:$0xff]
        %v696 = vld [vmem:[%s4 + $0x30] sm:$0xff]
        %v697 = vld [vmem:[%s4 + $0x38] sm:$0xff]
        %v698 = vadd.f32 %v671, %v690
        %v699 = vadd.f32 %v673, %v691
        %v700 = vadd.f32 %v676, %v692
        %v701 = vadd.f32 %v678, %v693
        %v702 = vadd.f32 %v681, %v694
        %v703 = vadd.f32 %v683, %v695
        %v704 = vadd.f32 %v686, %v696
        %v705 = vadd.f32 %v688, %v697
        %706 = vmax.xlane.f32.xlu0 %v698
        %v707 = vpop.xlane.xlu0 %706
        %708 = vmax.xlane.f32.xlu0 %v699
        %v709 = vpop.xlane.xlu0 %708
        %710 = vmax.xlane.f32.xlu0 %v700
        %v711 = vpop.xlane.xlu0 %710
        %712 = vmax.xlane.f32.xlu0 %v701
        %v713 = vpop.xlane.xlu0 %712
        %714 = vmax.xlane.f32.xlu0 %v702
        %v715 = vpop.xlane.xlu0 %714
        %716 = vmax.xlane.f32.xlu0 %v703
        %v717 = vpop.xlane.xlu0 %716
        %718 = vmax.xlane.f32.xlu0 %v704
        %v719 = vpop.xlane.xlu0 %718
        %720 = vmax.xlane.f32.xlu0 %v705
        %v721 = vpop.xlane.xlu0 %720
        %v722 = vsub.f32 %v698, %v707
        %v723 = vsub.f32 %v699, %v709
        %v724 = vsub.f32 %v700, %v711
        %v725 = vsub.f32 %v701, %v713
        %v726 = vsub.f32 %v702, %v715
        %v727 = vsub.f32 %v703, %v717
        %v728 = vsub.f32 %v704, %v719
        %v729 = vsub.f32 %v705, %v721
        %v730 = vmul.f32 %v722, 1.442695
        %v731 = vpow.pop %v730
        %v732 = vmul.f32 %v723, 1.442695
        %v733 = vpow.pop %v732
        %v734 = vmul.f32 %v724, 1.442695
        %v735 = vpow.pop %v734
        %v736 = vmul.f32 %v725, 1.442695
        %v737 = vpow.pop %v736
        %v738 = vmul.f32 %v726, 1.442695
        %v739 = vpow.pop %v738
        %v740 = vmul.f32 %v727, 1.442695
        %v741 = vpow.pop %v740
        %v742 = vmul.f32 %v728, 1.442695
        %v743 = vpow.pop %v742
        %v744 = vmul.f32 %v729, 1.442695
        %v745 = vpow.pop %v744
        %746 = vadd.xlane.f32.xlu0 %v731
        %v747 = vpop.xlane.xlu0 %746
        %748 = vadd.xlane.f32.xlu0 %v733
        %v749 = vpop.xlane.xlu0 %748
        %750 = vadd.xlane.f32.xlu0 %v735
        %v751 = vpop.xlane.xlu0 %750
        %752 = vadd.xlane.f32.xlu0 %v737
        %v753 = vpop.xlane.xlu0 %752
        %754 = vadd.xlane.f32.xlu0 %v739
        %v755 = vpop.xlane.xlu0 %754
        %756 = vadd.xlane.f32.xlu0 %v741
        %v757 = vpop.xlane.xlu0 %756
        %758 = vadd.xlane.f32.xlu0 %v743
        %v759 = vpop.xlane.xlu0 %758
        %760 = vadd.xlane.f32.xlu0 %v745
        %v761 = vpop.xlane.xlu0 %760
        %v762 = vrcp.pop %v747
        %v763 = vrcp.pop %v749
        %v764 = vrcp.pop %v751
        %v765 = vrcp.pop %v753
        %v766 = vrcp.pop %v755
        %v767 = vrcp.pop %v757
        %v768 = vrcp.pop %v759
        %v769 = vrcp.pop %v761
        %v770 = vmul.f32 %v731, %v762
        %v771 = vmul.f32 %v733, %v763
        %v772 = vmul.f32 %v735, %v764
        %v773 = vmul.f32 %v737, %v765
        %v774 = vmul.f32 %v739, %v766
        %v775 = vmul.f32 %v741, %v767
        %v776 = vmul.f32 %v743, %v768
        %v777 = vmul.f32 %v745, %v769
        %v778 = vpack.c.bf16 %v771, %v770
        %v779 = vpack.c.bf16 %v773, %v772
        %v780 = vpack.c.bf16 %v775, %v774
        %v781 = vpack.c.bf16 %v777, %v776
        %v798 = vunpack.c.l.b16 %v449
        %v799 = vunpack.c.l.b16 %v450
        %v800 = vunpack.c.l.b16 %v451
        %v801 = vunpack.c.l.b16 %v452
        %v802 = vunpack.c.l.b16 %v453
        %v803 = vunpack.c.l.b16 %v454
        %v804 = vunpack.c.l.b16 %v455
        %v805 = vunpack.c.l.b16 %v456
        %v806 = vunpack.c.l.b16 %v457
        %v807 = vunpack.c.l.b16 %v458
        %v808 = vunpack.c.l.b16 %v459
        %v809 = vunpack.c.l.b16 %v460
        %v810 = vunpack.c.l.b16 %v461
        %v811 = vunpack.c.l.b16 %v462
        %v812 = vunpack.c.l.b16 %v463
        %v813 = vunpack.c.l.b16 %v464
        %v814 = vpack.c.b16 %v799, %v798
        %v815 = vpack.c.b16 %v801, %v800
        %v816 = vpack.c.b16 %v803, %v802
        %v817 = vpack.c.b16 %v805, %v804
        %v818 = vpack.c.b16 %v807, %v806
        %v819 = vpack.c.b16 %v809, %v808
        %v820 = vpack.c.b16 %v811, %v810
        %v821 = vpack.c.b16 %v813, %v812
        %830 = vmatpush.bf16.msra.mxu0 %v821
        %831 = vmatpush.bf16.msra.mxu0 %v820
        %832 = vmatpush.bf16.msra.mxu0 %v819
        %833 = vmatpush.bf16.msra.mxu0 %v818
        %834 = vmatpush.bf16.msra.mxu0 %v817
        %835 = vmatpush.bf16.msra.mxu0 %v816
        %836 = vmatpush.bf16.msra.mxu0 %v815
        %837 = vmatpush.bf16.msra.mxu0 %v814
        %838 = vmatmul.bf16.gmra.mxu0 %v778
        %v839 = vpop.f32.mrf.mxu0
        %v840 = vadd.f32 0.0, %v839
        %v841 = vpop.f32.mrf.mxu0
        %v842 = vadd.f32 0.0, %v841
        %843 = vmatmul.bf16.gmra.mxu0 %v779
        %v844 = vpop.f32.mrf.mxu0
        %v845 = vadd.f32 0.0, %v844
        %v846 = vpop.f32.mrf.mxu0
        %v847 = vadd.f32 0.0, %v846
        %848 = vmatmul.bf16.gmra.mxu0 %v780
        %v849 = vpop.f32.mrf.mxu0
        %v850 = vadd.f32 0.0, %v849
        %v851 = vpop.f32.mrf.mxu0
        %v852 = vadd.f32 0.0, %v851
        %853 = vmatmul.bf16.gmra.mxu0 %v781
        %v854 = vpop.f32.mrf.mxu0
        %v855 = vadd.f32 0.0, %v854
        %v856 = vpop.f32.mrf.mxu0
        %v857 = vadd.f32 0.0, %v856
        %858 = vdwg.mxu0
        %s859 = sshra.s32 %s422, 3
        %s860 = sand.u32 %s422, 7
        %s861 = smul.u32 %s859, 2
        %s862 = smul.addr %s861, 4
        %s863 = scalar_lea.vmem %s5, %s862
        %v864 = vld [vmem:[%s863] sm:$0xff]
        %v865 = vld [vmem:[%s863 + $0x8] sm:$0xff]
        %v866 = vld [vmem:[%s863 + $0x10] sm:$0xff]
        %v867 = vld [vmem:[%s863 + $0x18] sm:$0xff]
        %v868 = vld [vmem:[%s863 + $0x20] sm:$0xff]
        %v869 = vld [vmem:[%s863 + $0x28] sm:$0xff]
        %v870 = vld [vmem:[%s863 + $0x30] sm:$0xff]
        %v871 = vld [vmem:[%s863 + $0x38] sm:$0xff]
        %v872 = vld [vmem:[%s863 + $0x40] sm:$0xff]
        %v873 = vld [vmem:[%s863 + $0x48] sm:$0xff]
        %v874 = vld [vmem:[%s863 + $0x50] sm:$0xff]
        %v875 = vld [vmem:[%s863 + $0x58] sm:$0xff]
        %v876 = vld [vmem:[%s863 + $0x60] sm:$0xff]
        %v877 = vld [vmem:[%s863 + $0x68] sm:$0xff]
        %v878 = vld [vmem:[%s863 + $0x70] sm:$0xff]
        %v879 = vld [vmem:[%s863 + $0x78] sm:$0xff]
        %v880 = vld [vmem:[#allocation2] sm:$0xff]
        %v881 = vld [vmem:[#allocation2 + $0x8] sm:$0xff]
        %v882 = vld [vmem:[#allocation2 + $0x10] sm:$0xff]
        %v883 = vld [vmem:[#allocation2 + $0x18] sm:$0xff]
        %v884 = vld [vmem:[#allocation2 + $0x20] sm:$0xff]
        %v885 = vld [vmem:[#allocation2 + $0x28] sm:$0xff]
        %v886 = vld [vmem:[#allocation2 + $0x30] sm:$0xff]
        %v887 = vld [vmem:[#allocation2 + $0x38] sm:$0xff]
        %v888 = vld [vmem:[#allocation2 + $0x40] sm:$0xff]
        %v889 = vld [vmem:[#allocation2 + $0x48] sm:$0xff]
        %v890 = vld [vmem:[#allocation2 + $0x50] sm:$0xff]
        %v891 = vld [vmem:[#allocation2 + $0x58] sm:$0xff]
        %v892 = vld [vmem:[#allocation2 + $0x60] sm:$0xff]
        %v893 = vld [vmem:[#allocation2 + $0x68] sm:$0xff]
        %v894 = vld [vmem:[#allocation2 + $0x70] sm:$0xff]
        %v895 = vld [vmem:[#allocation2 + $0x78] sm:$0xff]
        %v896 = vpack.c.bf16 %v842, %v840
        %v897 = vpack.c.bf16 %v847, %v845
        %v898 = vpack.c.bf16 %v852, %v850
        %v899 = vpack.c.bf16 %v857, %v855
        %v916 = vunpack.c.l.b16 %v864
        %v917 = vunpack.c.h.b16 %v864
        %v918 = vunpack.c.l.b16 %v865
        %v919 = vunpack.c.h.b16 %v865
        %v920 = vunpack.c.l.b16 %v866
        %v921 = vunpack.c.h.b16 %v866
        %v922 = vunpack.c.l.b16 %v867
        %v923 = vunpack.c.h.b16 %v867
        %v924 = vunpack.c.l.b16 %v868
        %v925 = vunpack.c.h.b16 %v868
        %v926 = vunpack.c.l.b16 %v869
        %v927 = vunpack.c.h.b16 %v869
        %v928 = vunpack.c.l.b16 %v870
        %v929 = vunpack.c.h.b16 %v870
        %v930 = vunpack.c.l.b16 %v871
        %v931 = vunpack.c.h.b16 %v871
        %v932 = vunpack.c.l.b16 %v872
        %v933 = vunpack.c.h.b16 %v872
        %v934 = vunpack.c.l.b16 %v873
        %v935 = vunpack.c.h.b16 %v873
        %v936 = vunpack.c.l.b16 %v874
        %v937 = vunpack.c.h.b16 %v874
        %v938 = vunpack.c.l.b16 %v875
        %v939 = vunpack.c.h.b16 %v875
        %v940 = vunpack.c.l.b16 %v876
        %v941 = vunpack.c.h.b16 %v876
        %v942 = vunpack.c.l.b16 %v877
        %v943 = vunpack.c.h.b16 %v877
        %v944 = vunpack.c.l.b16 %v878
        %v945 = vunpack.c.h.b16 %v878
        %v946 = vunpack.c.l.b16 %v879
        %v947 = vunpack.c.h.b16 %v879
        %v948 = vpack.c.b16 %v918, %v916
        %v949 = vpack.c.b16 %v919, %v917
        %v950 = vpack.c.b16 %v922, %v920
        %v951 = vpack.c.b16 %v923, %v921
        %v952 = vpack.c.b16 %v926, %v924
        %v953 = vpack.c.b16 %v927, %v925
        %v954 = vpack.c.b16 %v930, %v928
        %v955 = vpack.c.b16 %v931, %v929
        %v956 = vpack.c.b16 %v934, %v932
        %v957 = vpack.c.b16 %v935, %v933
        %v958 = vpack.c.b16 %v938, %v936
        %v959 = vpack.c.b16 %v939, %v937
        %v960 = vpack.c.b16 %v942, %v940
        %v961 = vpack.c.b16 %v943, %v941
        %v962 = vpack.c.b16 %v946, %v944
        %v963 = vpack.c.b16 %v947, %v945
        %980 = vmatpush.bf16.msra.mxu0 %v962
        %981 = vmatpush.bf16.msra.mxu0 %v960
        %982 = vmatpush.bf16.msra.mxu0 %v958
        %983 = vmatpush.bf16.msra.mxu0 %v956
        %984 = vmatpush.bf16.msra.mxu0 %v954
        %985 = vmatpush.bf16.msra.mxu0 %v952
        %986 = vmatpush.bf16.msra.mxu0 %v950
        %987 = vmatpush.bf16.msra.mxu0 %v948
        %988 = vmatmul.bf16.gmra.mxu0 %v896
        %v989 = vpop.f32.mrf.mxu0
        %v990 = vadd.f32 0.0, %v989
        %v991 = vpop.f32.mrf.mxu0
        %v992 = vadd.f32 0.0, %v991
        %993 = vmatmul.bf16.gmra.mxu0 %v897
        %v994 = vpop.f32.mrf.mxu0
        %v995 = vadd.f32 0.0, %v994
        %v996 = vpop.f32.mrf.mxu0
        %v997 = vadd.f32 0.0, %v996
        %998 = vmatmul.bf16.gmra.mxu0 %v898
        %v999 = vpop.f32.mrf.mxu0
        %v1000 = vadd.f32 0.0, %v999
        %v1001 = vpop.f32.mrf.mxu0
        %v1002 = vadd.f32 0.0, %v1001
        %1003 = vmatmul.bf16.gmra.mxu0 %v899
        %v1004 = vpop.f32.mrf.mxu0
        %v1005 = vadd.f32 0.0, %v1004
        %v1006 = vpop.f32.mrf.mxu0
        %v1007 = vadd.f32 0.0, %v1006
        %1008 = vdwg.mxu0
        %1009 = vmatpush.bf16.msra.mxu0 %v963
        %1010 = vmatpush.bf16.msra.mxu0 %v961
        %1011 = vmatpush.bf16.msra.mxu0 %v959
        %1012 = vmatpush.bf16.msra.mxu0 %v957
        %1013 = vmatpush.bf16.msra.mxu0 %v955
        %1014 = vmatpush.bf16.msra.mxu0 %v953
        %1015 = vmatpush.bf16.msra.mxu0 %v951
        %1016 = vmatpush.bf16.msra.mxu0 %v949
        %1017 = vmatmul.bf16.gmra.mxu0 %v896
        %v1018 = vpop.f32.mrf.mxu0
        %v1019 = vadd.f32 0.0, %v1018
        %v1020 = vpop.f32.mrf.mxu0
        %v1021 = vadd.f32 0.0, %v1020
        %1022 = vmatmul.bf16.gmra.mxu0 %v897
        %v1023 = vpop.f32.mrf.mxu0
        %v1024 = vadd.f32 0.0, %v1023
        %v1025 = vpop.f32.mrf.mxu0
        %v1026 = vadd.f32 0.0, %v1025
        %1027 = vmatmul.bf16.gmra.mxu0 %v898
        %v1028 = vpop.f32.mrf.mxu0
        %v1029 = vadd.f32 0.0, %v1028
        %v1030 = vpop.f32.mrf.mxu0
        %v1031 = vadd.f32 0.0, %v1030
        %1032 = vmatmul.bf16.gmra.mxu0 %v899
        %v1033 = vpop.f32.mrf.mxu0
        %v1034 = vadd.f32 0.0, %v1033
        %v1035 = vpop.f32.mrf.mxu0
        %v1036 = vadd.f32 0.0, %v1035
        %1037 = vdwg.mxu0
        %v1038 = vadd.f32 %v880, %v990
        %v1039 = vadd.f32 %v881, %v1019
        %v1040 = vadd.f32 %v882, %v992
        %v1041 = vadd.f32 %v883, %v1021
        %v1042 = vadd.f32 %v884, %v995
        %v1043 = vadd.f32 %v885, %v1024
        %v1044 = vadd.f32 %v886, %v997
        %v1045 = vadd.f32 %v887, %v1026
        %v1046 = vadd.f32 %v888, %v1000
        %v1047 = vadd.f32 %v889, %v1029
        %v1048 = vadd.f32 %v890, %v1002
        %v1049 = vadd.f32 %v891, %v1031
        %v1050 = vadd.f32 %v892, %v1005
        %v1051 = vadd.f32 %v893, %v1034
        %v1052 = vadd.f32 %v894, %v1007
        %v1053 = vadd.f32 %v895, %v1036
        %1054 = vst [vmem:[#allocation2] sm:$0xff] %v1038
        %1055 = vst [vmem:[#allocation2 + $0x8] sm:$0xff] %v1039
        %1056 = vst [vmem:[#allocation2 + $0x10] sm:$0xff] %v1040
        %1057 = vst [vmem:[#allocation2 + $0x18] sm:$0xff] %v1041
        %1058 = vst [vmem:[#allocation2 + $0x20] sm:$0xff] %v1042
        %1059 = vst [vmem:[#allocation2 + $0x28] sm:$0xff] %v1043
        %1060 = vst [vmem:[#allocation2 + $0x30] sm:$0xff] %v1044
        %1061 = vst [vmem:[#allocation2 + $0x38] sm:$0xff] %v1045
        %1062 = vst [vmem:[#allocation2 + $0x40] sm:$0xff] %v1046
        %1063 = vst [vmem:[#allocation2 + $0x48] sm:$0xff] %v1047
        %1064 = vst [vmem:[#allocation2 + $0x50] sm:$0xff] %v1048
        %1065 = vst [vmem:[#allocation2 + $0x58] sm:$0xff] %v1049
        %1066 = vst [vmem:[#allocation2 + $0x60] sm:$0xff] %v1050
        %1067 = vst [vmem:[#allocation2 + $0x68] sm:$0xff] %v1051
        %1068 = vst [vmem:[#allocation2 + $0x70] sm:$0xff] %v1052
        %1069 = vst [vmem:[#allocation2 + $0x78] sm:$0xff] %v1053
        %p1070 = scmp.eq.s32.totalorder %s27, 1
        // Predicated region
        $region90: #{_lambda_.7} parent=80 // pred_check
          %p1071 = pneg %p1070
        $region91: #{_lambda_.7} parent=80 // pred_check_branch
          %1073 = sbr.rel (%p1071) target = $region93
        $region92: #{_lambda_.7} parent=80 // pred_region
          %v1074 = vld [vmem:[#allocation2] sm:$0xff]
          %v1075 = vld [vmem:[#allocation2 + $0x8] sm:$0xff]
          %v1076 = vld [vmem:[#allocation2 + $0x10] sm:$0xff]
          %v1077 = vld [vmem:[#allocation2 + $0x18] sm:$0xff]
          %v1078 = vld [vmem:[#allocation2 + $0x20] sm:$0xff]
          %v1079 = vld [vmem:[#allocation2 + $0x28] sm:$0xff]
          %v1080 = vld [vmem:[#allocation2 + $0x30] sm:$0xff]
          %v1081 = vld [vmem:[#allocation2 + $0x38] sm:$0xff]
          %v1082 = vld [vmem:[#allocation2 + $0x40] sm:$0xff]
          %v1083 = vld [vmem:[#allocation2 + $0x48] sm:$0xff]
          %v1084 = vld [vmem:[#allocation2 + $0x50] sm:$0xff]
          %v1085 = vld [vmem:[#allocation2 + $0x58] sm:$0xff]
          %v1086 = vld [vmem:[#allocation2 + $0x60] sm:$0xff]
          %v1087 = vld [vmem:[#allocation2 + $0x68] sm:$0xff]
          %v1088 = vld [vmem:[#allocation2 + $0x70] sm:$0xff]
          %v1089 = vld [vmem:[#allocation2 + $0x78] sm:$0xff]
          %1090 = vst [vmem:[%s380] sm:$0xff] %v1074
          %1091 = vst [vmem:[%s380 + $0x8] sm:$0xff] %v1075
          %1092 = vst [vmem:[%s380 + $0x10] sm:$0xff] %v1076
          %1093 = vst [vmem:[%s380 + $0x18] sm:$0xff] %v1077
          %1094 = vst [vmem:[%s380 + $0x20] sm:$0xff] %v1078
          %1095 = vst [vmem:[%s380 + $0x28] sm:$0xff] %v1079
          %1096 = vst [vmem:[%s380 + $0x30] sm:$0xff] %v1080
          %1097 = vst [vmem:[%s380 + $0x38] sm:$0xff] %v1081
          %1098 = vst [vmem:[%s380 + $0x40] sm:$0xff] %v1082
          %1099 = vst [vmem:[%s380 + $0x48] sm:$0xff] %v1083
          %1100 = vst [vmem:[%s380 + $0x50] sm:$0xff] %v1084
          %1101 = vst [vmem:[%s380 + $0x58] sm:$0xff] %v1085
          %1102 = vst [vmem:[%s380 + $0x60] sm:$0xff] %v1086
          %1103 = vst [vmem:[%s380 + $0x68] sm:$0xff] %v1087
          %1104 = vst [vmem:[%s380 + $0x70] sm:$0xff] %v1088
          %1105 = vst [vmem:[%s380 + $0x78] sm:$0xff] %v1089
        $region93: #{_lambda_.7} parent=80 // pred_fallthru
          _
        %s1106 = sand.u32 %s194, 1
        %s1107 = scalar_lea.sflag [#allocation5], %s1106
        %s1108 = sand.u32 %s194, 1
        %s1109 = smul.addr %s1108, 128
        %s1110 = scalar_lea.vmem [#allocation4], %s1109
        // Predicated region
        $region94: #{_lambda_.7} parent=80 // pred_check
          %p1111 = pneg %p204
        $region95: #{_lambda_.7} parent=80 // pred_check_branch
          %1113 = sbr.rel (%p1111) target = $region97
        $region96: #{_lambda_.7} parent=80 // pred_region
          %s1114 = smul.u32 8, %s26
          %1116 = vsyncadd %s1107, 0
          %s1117 = smul.addr %s1114, 2
          %s1118 = smul.addr %s25, 64
          %s1119 = sadd.s32 %s1117, %s1118
          %s1120 = smul.addr %s1119, 8
          %s1121 = scalar_lea.hbm %s6, %s1120
          %s1122 = sshll.u32 %s1110, 4
          %s1123 = int_to_ptr.vmem [resolvable:$true] %s1122
          %s1124 = sshll.u32 %s1121, 4
          %s1125 = int_to_ptr.hbm [resolvable:$true] %s1124
          %1130 = dma.vmem_to_hbm [thread:$0]  %s1123, 2048, %s1125, %s1107, 256, 256, 16
        $region97: #{_lambda_.7} parent=80 // pred_fallthru
          _
      $region81: #{_lambda_.7} parent=5 // pred_fallthru
        _
      %p1131 = scmp.le.s32.totalorder 2, %s15
      // Predicated region
      $region98: #{_lambda_.7} parent=5 // pred_check
        %p1132 = pneg %p1131
      $region99: #{_lambda_.7} parent=5 // pred_check_branch
        %1134 = sbr.rel (%p1132) target = $region101
      $region100: #{_lambda_.7} parent=5 // pred_region
        %s1135 = ssub.s32 %s15, 2
        // Predicated region
        $region102: #{_lambda_.7} parent=100 // pred_check
          %p1136 = pneg %p210
        $region103: #{_lambda_.7} parent=100 // pred_check_branch
          %1138 = sbr.rel (%p1136) target = $region105
        $region104: #{_lambda_.7} parent=100 // pred_region
          %s1139 = sand.u32 %s195, 1
          %s1140 = scalar_lea.sflag [#allocation5], %s1139
          %s1141 = sand.u32 %s195, 1
          %s1142 = smul.addr %s1141, 128
          %s1143 = scalar_lea.vmem [#allocation4], %s1142
          %1145 = dma.done %s1140, 2048
        $region105: #{_lambda_.7} parent=100 // pred_fallthru
          _
      $region101: #{_lambda_.7} parent=5 // pred_fallthru
        _
    $region6: #{_lambda_.7} parent=1 // loop_footer
      %s19 = sadd.s32 1, %s15
    $region7: #{_lambda_.7} parent=1 // loop_footer_branch
      %14 = sbr.rel target = $region3
    $region8: #{_lambda_.7} parent=1 // loop_exit
      _
    %1146 = vsyncpa [#allocation5], 1
    %s1147 = scalar_lea.sflag [#allocation5], 1
    %1148 = vsyncpa %s1147, 1

// kernel: _lambda_.4
$region0: #{_lambda_.4}
  #allocation0 [shape = 'u32[]', space=smem, size = 0x4, offset = 0x4, fixed_abs, tag = 'smem constant byte address 0x4 - core index']
  #allocation1 [shape = 'u32[72,128]{1,0:T(1,128)}', space=vmem, size = 0x9000, scoped, tag = 'internal scratch']
  #allocation2 [shape = 'f32[256,256]{1,0:T(8,128)}', space=vmem, size = 0x40000, scoped, tag = 'scratch operand']
  %s0 = inlined_call_operand.hbm [shape: f32[512,256], index: 0, kind: input, shape index: {}]
  %s1 = inlined_call_operand.hbm [shape: bf16[256,256], index: 1, kind: input, shape index: {}]
  %s2 = inlined_call_operand.vmem [shape: bf16[512,256], index: 2, kind: output, shape index: {}]
  %s3 = sld [smem:[#allocation0]]
  $region57: #{_lambda_.4} parent=0
    _
  %s5 = ssub.s32 1, %s3
  %s6 = scalar_select 0, %s5, %s3
  $region1: #{_lambda_.4} parent=0
    #allocation3 [shape = 'u8[524288]{0}', space=vmem, size = 0x80000, scoped, tag = 'input window, operand 0']
    #allocation4 [shape = 's32[2]{0}', space=sflag, size = 0x8, scoped, tag = 'scoped memory for _lambda_.4']
    #allocation5 [shape = 'u8[131072]{0}', space=vmem, size = 0x20000, scoped, tag = 'input window, operand 1, single buffered']
    #allocation6 [shape = 's32[1]{0}', space=sflag, size = 0x4, scoped, tag = 'scoped memory for _lambda_.4']
    %7 = vsyncpa [#allocation4], 0
    %s8 = scalar_lea.sflag [#allocation4], 1
    %9 = vsyncpa %s8, 0
    %10 = vsyncpa [#allocation6], 0
    loop: start=0, step=1, limit=4
    $region2: #{_lambda_.4} parent=1 // loop_pre_header
      _
    $region3: #{_lambda_.4} parent=1 // loop_header
      %s12 = sphi 0, %s16
      %p13 = scmp.ge.s32.totalorder %s12, 4
      %s19 = sphi 0, %s38
      %s20 = sphi 0, %s34
      %s21 = sphi 0, %s30
      %s22 = sphi 0, %s19
      %s23 = sphi 0, %s20
      %s24 = sphi 0, %s21
      %s25 = sphi 0, %s22
      %s26 = sphi 0, %s23
      %s27 = sphi 0, %s24
      %s43 = sphi 0, %s45
      %s46 = sphi 0, %s43
      %s47 = sphi 0, %s46
      %s63 = sphi 0, %s47
      %s71 = sphi 0, %s73
      %s74 = sphi 0, %s71
      %s75 = sphi 0, %s74
      %s91 = sphi 0, %s75
      %s99 = sphi 0, %s101
      %s102 = sphi 0, %s99
      %s103 = sphi 0, %s102
      %s119 = sphi 0, %s103
    $region4: #{_lambda_.4} parent=1 // loop_header_branch
      %15 = sbr.rel (%p13) target = $region8
    $region5: #{_lambda_.4} parent=1 // loop_body
      %s17 = ssub.s32 %s12, 1
      %s18 = ssub.s32 %s12, 2
      %s28 = sadd.s32 1, %s21
      %p29 = scmp.ge.s32.totalorder %s28, 1
      %s30 = scalar_select %p29, 0, %s28
      %s31 = sadd.s32 1, %s20
      %s32 = scalar_select %p29, %s31, %s20
      %p33 = scmp.ge.s32.totalorder %s32, 1
      %s34 = scalar_select %p33, 0, %s32
      %s35 = sadd.s32 1, %s19
      %s36 = scalar_select %p33, %s35, %s19
      %p37 = scmp.ge.s32.totalorder %s36, 2
      %s38 = scalar_select %p37, 0, %s36
      %s39 = ssub.s32 %s19, %s38
      %s40 = ssub.s32 %s21, %s30
      %s41 = sor.u32 %s39, %s40
      %p42 = scmp.eq.s32.totalorder %s41, 0
      %s44 = sadd.s32 %s43, 1
      %s45 = scalar_select %p42, %s43, %s44
      %p48 = pneg %p42
      %p49 = scmp.eq.s32.totalorder %s12, 1
      %p50 = por %p48, %p49
      %p51 = scmp.ne.s32.totalorder %s43, %s46
      %p52 = scmp.eq.s32.totalorder %s12, 0
      %p53 = por %p51, %p52
      %p54 = scmp.ne.s32.totalorder %s43, %s46
      %p55 = scmp.eq.s32.totalorder %s17, 1
      %p56 = por %p54, %p55
      %p57 = scmp.ne.s32.totalorder %s46, %s47
      %p58 = scmp.eq.s32.totalorder %s17, 0
      %p59 = por %p57, %p58
      %p60 = scmp.ne.s32.totalorder %s46, %s47
      %p61 = scmp.eq.s32.totalorder %s18, 1
      %p62 = por %p60, %p61
      %p64 = scmp.ne.s32.totalorder %s47, %s63
      %p65 = scmp.eq.s32.totalorder %s18, 0
      %p66 = por %p64, %p65
      %s67 = ssub.s32 %s21, %s30
      %s68 = ssub.s32 %s20, %s34
      %s69 = sor.u32 %s67, %s68
      %p70 = scmp.eq.s32.totalorder %s69, 0
      %s72 = sadd.s32 %s71, 1
      %s73 = scalar_select %p70, %s71, %s72
      %p76 = pneg %p70
      %p77 = scmp.eq.s32.totalorder %s12, 1
      %p78 = por %p76, %p77
      %p79 = scmp.ne.s32.totalorder %s71, %s74
      %p80 = scmp.eq.s32.totalorder %s12, 0
      %p81 = por %p79, %p80
      %p82 = scmp.ne.s32.totalorder %s71, %s74
      %p83 = scmp.eq.s32.totalorder %s17, 1
      %p84 = por %p82, %p83
      %p85 = scmp.ne.s32.totalorder %s74, %s75
      %p86 = scmp.eq.s32.totalorder %s17, 0
      %p87 = por %p85, %p86
      %p88 = scmp.ne.s32.totalorder %s74, %s75
      %p89 = scmp.eq.s32.totalorder %s18, 1
      %p90 = por %p88, %p89
      %p92 = scmp.ne.s32.totalorder %s75, %s91
      %p93 = scmp.eq.s32.totalorder %s18, 0
      %p94 = por %p92, %p93
      %s95 = ssub.s32 %s19, %s38
      %s96 = ssub.s32 %s20, %s34
      %s97 = sor.u32 %s95, %s96
      %p98 = scmp.eq.s32.totalorder %s97, 0
      %s100 = sadd.s32 %s99, 1
      %s101 = scalar_select %p98, %s99, %s100
      %p104 = pneg %p98
      %p105 = scmp.eq.s32.totalorder %s12, 1
      %p106 = por %p104, %p105
      %p107 = scmp.ne.s32.totalorder %s99, %s102
      %p108 = scmp.eq.s32.totalorder %s12, 0
      %p109 = por %p107, %p108
      %p110 = scmp.ne.s32.totalorder %s99, %s102
      %p111 = scmp.eq.s32.totalorder %s17, 1
      %p112 = por %p110, %p111
      %p113 = scmp.ne.s32.totalorder %s102, %s103
      %p114 = scmp.eq.s32.totalorder %s17, 0
      %p115 = por %p113, %p114
      %p116 = scmp.ne.s32.totalorder %s102, %s103
      %p117 = scmp.eq.s32.totalorder %s18, 1
      %p118 = por %p116, %p117
      %p120 = scmp.ne.s32.totalorder %s103, %s119
      %p121 = scmp.eq.s32.totalorder %s18, 0
      %p122 = por %p120, %p121
      %p123 = scmp.le.s32.totalorder 1, %s12
      %p124 = scmp.lt.s32.totalorder %s12, 3
      %p125 = pnand %p123, %p124
      %p126 = pneg %p125
      // Predicated region
      $region9: #{_lambda_.4} parent=5 // pred_check
        _
      $region10: #{_lambda_.4} parent=5 // pred_check_branch
        %128 = sbr.rel (%p125) target = $region12
      $region11: #{_lambda_.4} parent=5 // pred_region
        %s129 = ssub.s32 %s12, 1
        // Predicated region
        $region13: #{_lambda_.4} parent=11 // pred_check
          %p130 = pneg %p87
        $region14: #{_lambda_.4} parent=11 // pred_check_branch
          %132 = sbr.rel (%p130) target = $region16
        $region15: #{_lambda_.4} parent=11 // pred_region
          %s133 = smul.u32 32, %s24
          %s134 = smul.u32 2, %s23
          %136 = vsyncadd [#allocation6], 0
          %s137 = smul.addr %s133, 2
          %s138 = sadd.s32 %s134, %s137
          %s139 = smul.addr %s138, 4
          %s140 = scalar_lea.hbm %s1, %s139
          %s141 = sshll.u32 %s140, 4
          %s142 = int_to_ptr.hbm [resolvable:$true] %s141
          %s143 = sshll.u32 [#allocation5], 4
          %s144 = int_to_ptr.vmem [resolvable:$true] %s143
          %149 = dma.hbm_to_vmem [thread:$0]  %s142, 4096, %s144, [#allocation6], 128, 128, 8
        $region16: #{_lambda_.4} parent=11 // pred_fallthru
          _
      $region12: #{_lambda_.4} parent=5 // pred_fallthru
        _
      %p150 = scmp.lt.s32.totalorder %s12, 2
      // Predicated region
      $region17: #{_lambda_.4} parent=5 // pred_check
        %p151 = pneg %p150
      $region18: #{_lambda_.4} parent=5 // pred_check_branch
        %153 = sbr.rel (%p151) target = $region20
      $region19: #{_lambda_.4} parent=5 // pred_region
        // Predicated region
        $region21: #{_lambda_.4} parent=19 // pred_check
          %p154 = pneg %p53
        $region22: #{_lambda_.4} parent=19 // pred_check_branch
          %156 = sbr.rel (%p154) target = $region24
        $region23: #{_lambda_.4} parent=19 // pred_region
          %s157 = sand.u32 %s43, 1
          %s158 = scalar_lea.sflag [#allocation4], %s157
          %s159 = sand.u32 %s43, 1
          %s160 = smul.addr %s159, 512
          %s161 = scalar_lea.vmem [#allocation3], %s160
          %s162 = smul.u32 32, %s19
          %s163 = smul.u32 2, %s21
          %165 = vsyncadd %s158, 0
          %s166 = smul.addr %s162, 2
          %s167 = sadd.s32 %s163, %s166
          %s168 = smul.addr %s167, 8
          %s169 = scalar_lea.hbm %s0, %s168
          %s170 = sshll.u32 %s169, 4
          %s171 = int_to_ptr.hbm [resolvable:$true] %s170
          %s172 = sshll.u32 %s161, 4
          %s173 = int_to_ptr.vmem [resolvable:$true] %s172
          %178 = dma.hbm_to_vmem [thread:$0]  %s171, 8192, %s173, %s158, 256, 256, 16
        $region24: #{_lambda_.4} parent=19 // pred_fallthru
          _
      $region20: #{_lambda_.4} parent=5 // pred_fallthru
        _
      %p179 = scmp.le.s32.totalorder 1, %s12
      %p180 = scmp.lt.s32.totalorder %s12, 3
      %p181 = pnand %p179, %p180
      %p182 = pneg %p181
      // Predicated region
      $region25: #{_lambda_.4} parent=5 // pred_check
        _
      $region26: #{_lambda_.4} parent=5 // pred_check_branch
        %184 = sbr.rel (%p181) target = $region28
      $region27: #{_lambda_.4} parent=5 // pred_region
        %s185 = ssub.s32 %s12, 1
        %s186 = sand.u32 %s46, 1
        %s187 = scalar_lea.sflag [#allocation4], %s186
        %s188 = sand.u32 %s46, 1
        %s189 = smul.addr %s188, 512
        %s190 = scalar_lea.vmem [#allocation3], %s189
        // Predicated region
        $region29: #{_lambda_.4} parent=27 // pred_check
          %p191 = pneg %p59
        $region30: #{_lambda_.4} parent=27 // pred_check_branch
          %193 = sbr.rel (%p191) target = $region32
        $region31: #{_lambda_.4} parent=27 // pred_region
          %195 = dma.done %s187, 8192
        $region32: #{_lambda_.4} parent=27 // pred_fallthru
          _
        // Predicated region
        $region33: #{_lambda_.4} parent=27 // pred_check
          %p196 = pneg %p87
        $region34: #{_lambda_.4} parent=27 // pred_check_branch
          %198 = sbr.rel (%p196) target = $region36
        $region35: #{_lambda_.4} parent=27 // pred_region
          %200 = dma.done [#allocation6], 4096
        $region36: #{_lambda_.4} parent=27 // pred_fallthru
          _
        %s201 = sand.u32 %s46, 1
        %s202 = scalar_lea.sflag [#allocation4], %s201
        %s203 = sand.u32 %s46, 1
        %s204 = smul.addr %s203, 512
        %s205 = scalar_lea.vmem [#allocation3], %s204
        %p206 = pneg %p59
        %p207 = pneg %p56
        %p208 = pneg %p87
        %p209 = pneg %p84
        %p210 = pneg %p115
        %p211 = pneg %p112
        %s212 = smul.u32 32, %s22
        %s213 = smul.u32 2, %s23
        %p214 = scmp.lt.s32.totalorder %s212, 63
        %s215 = scalar_select %p214, %s212, 63
        %p216 = scmp.lt.s32.totalorder %s213, 1
        %s217 = scalar_select %p216, %s213, 1
        %s218 = smul.addr %s215, 2
        %s219 = sadd.s32 %s217, %s218
        %s220 = smul.addr %s219, 4
        %s221 = scalar_lea.vmem %s2, %s220
        %s222 = smul.u32 32, %s22
        %s223 = smul.u32 2, %s24
        %s224 = smul.u32 32, %s24
        %s225 = smul.u32 2, %s23
        %s226 = smul.u32 32, %s22
        %s227 = smul.u32 2, %s23
        %p228 = scmp.lt.s32.totalorder %s226, 63
        %s229 = scalar_select %p228, %s226, 63
        %p230 = scmp.lt.s32.totalorder %s227, 1
        %s231 = scalar_select %p230, %s227, 1
        %s232 = smul.addr %s229, 2
        %s233 = sadd.s32 %s231, %s232
        %s234 = smul.addr %s233, 4
        %s235 = scalar_lea.vmem %s2, %s234
        %s236 = smul.u32 32, %s22
        %s237 = smul.u32 2, %s23
        %p238 = scmp.eq.s32.totalorder %s24, 0
        // Predicated region
        $region37: #{_lambda_.4} parent=27 // pred_check
          %p239 = pneg %p238
        $region38: #{_lambda_.4} parent=27 // pred_check_branch
          %241 = sbr.rel (%p239) target = $region40
        $region39: #{_lambda_.4} parent=27 // pred_region
          %242 = vst [vmem:[#allocation2] sm:$0xff] 0.0
          %243 = vst [vmem:[#allocation2 + $0x8] sm:$0xff] 0.0
          %244 = vst [vmem:[#allocation2 + $0x10] sm:$0xff] 0.0
          %245 = vst [vmem:[#allocation2 + $0x18] sm:$0xff] 0.0
          %246 = vst [vmem:[#allocation2 + $0x20] sm:$0xff] 0.0
          %247 = vst [vmem:[#allocation2 + $0x28] sm:$0xff] 0.0
          %248 = vst [vmem:[#allocation2 + $0x30] sm:$0xff] 0.0
          %249 = vst [vmem:[#allocation2 + $0x38] sm:$0xff] 0.0
          %250 = vst [vmem:[#allocation2 + $0x40] sm:$0xff] 0.0
          %251 = vst [vmem:[#allocation2 + $0x48] sm:$0xff] 0.0
          %252 = vst [vmem:[#allocation2 + $0x50] sm:$0xff] 0.0
          %253 = vst [vmem:[#allocation2 + $0x58] sm:$0xff] 0.0
          %254 = vst [vmem:[#allocation2 + $0x60] sm:$0xff] 0.0
          %255 = vst [vmem:[#allocation2 + $0x68] sm:$0xff] 0.0
          %256 = vst [vmem:[#allocation2 + $0x70] sm:$0xff] 0.0
          %257 = vst [vmem:[#allocation2 + $0x78] sm:$0xff] 0.0
          %258 = vst [vmem:[#allocation2 + $0x80] sm:$0xff] 0.0
          %259 = vst [vmem:[#allocation2 + $0x88] sm:$0xff] 0.0
          %260 = vst [vmem:[#allocation2 + $0x90] sm:$0xff] 0.0
          %261 = vst [vmem:[#allocation2 + $0x98] sm:$0xff] 0.0
          %262 = vst [vmem:[#allocation2 + $0xa0] sm:$0xff] 0.0
          %263 = vst [vmem:[#allocation2 + $0xa8] sm:$0xff] 0.0
          %264 = vst [vmem:[#allocation2 + $0xb0] sm:$0xff] 0.0
          %265 = vst [vmem:[#allocation2 + $0xb8] sm:$0xff] 0.0
          %266 = vst [vmem:[#allocation2 + $0xc0] sm:$0xff] 0.0
          %267 = vst [vmem:[#allocation2 + $0xc8] sm:$0xff] 0.0
          %268 = vst [vmem:[#allocation2 + $0xd0] sm:$0xff] 0.0
          %269 = vst [vmem:[#allocation2 + $0xd8] sm:$0xff] 0.0
          %270 = vst [vmem:[#allocation2 + $0xe0] sm:$0xff] 0.0
          %271 = vst [vmem:[#allocation2 + $0xe8] sm:$0xff] 0.0
          %272 = vst [vmem:[#allocation2 + $0xf0] sm:$0xff] 0.0
          %273 = vst [vmem:[#allocation2 + $0xf8] sm:$0xff] 0.0
          %274 = vst [vmem:[#allocation2 + $0x100] sm:$0xff] 0.0
          %275 = vst [vmem:[#allocation2 + $0x108] sm:$0xff] 0.0
          %276 = vst [vmem:[#allocation2 + $0x110] sm:$0xff] 0.0
          %277 = vst [vmem:[#allocation2 + $0x118] sm:$0xff] 0.0
          %278 = vst [vmem:[#allocation2 + $0x120] sm:$0xff] 0.0
          %279 = vst [vmem:[#allocation2 + $0x128] sm:$0xff] 0.0
          %280 = vst [vmem:[#allocation2 + $0x130] sm:$0xff] 0.0
          %281 = vst [vmem:[#allocation2 + $0x138] sm:$0xff] 0.0
          %282 = vst [vmem:[#allocation2 + $0x140] sm:$0xff] 0.0
          %283 = vst [vmem:[#allocation2 + $0x148] sm:$0xff] 0.0
          %284 = vst [vmem:[#allocation2 + $0x150] sm:$0xff] 0.0
          %285 = vst [vmem:[#allocation2 + $0x158] sm:$0xff] 0.0
          %286 = vst [vmem:[#allocation2 + $0x160] sm:$0xff] 0.0
          %287 = vst [vmem:[#allocation2 + $0x168] sm:$0xff] 0.0
          %288 = vst [vmem:[#allocation2 + $0x170] sm:$0xff] 0.0
          %289 = vst [vmem:[#allocation2 + $0x178] sm:$0xff] 0.0
          %290 = vst [vmem:[#allocation2 + $0x180] sm:$0xff] 0.0
          %291 = vst [vmem:[#allocation2 + $0x188] sm:$0xff] 0.0
          %292 = vst [vmem:[#allocation2 + $0x190] sm:$0xff] 0.0
          %293 = vst [vmem:[#allocation2 + $0x198] sm:$0xff] 0.0
          %294 = vst [vmem:[#allocation2 + $0x1a0] sm:$0xff] 0.0
          %295 = vst [vmem:[#allocation2 + $0x1a8] sm:$0xff] 0.0
          %296 = vst [vmem:[#allocation2 + $0x1b0] sm:$0xff] 0.0
          %297 = vst [vmem:[#allocation2 + $0x1b8] sm:$0xff] 0.0
          %298 = vst [vmem:[#allocation2 + $0x1c0] sm:$0xff] 0.0
          %299 = vst [vmem:[#allocation2 + $0x1c8] sm:$0xff] 0.0
          %300 = vst [vmem:[#allocation2 + $0x1d0] sm:$0xff] 0.0
          %301 = vst [vmem:[#allocation2 + $0x1d8] sm:$0xff] 0.0
          %302 = vst [vmem:[#allocation2 + $0x1e0] sm:$0xff] 0.0
          %303 = vst [vmem:[#allocation2 + $0x1e8] sm:$0xff] 0.0
          %304 = vst [vmem:[#allocation2 + $0x1f0] sm:$0xff] 0.0
          %305 = vst [vmem:[#allocation2 + $0x1f8] sm:$0xff] 0.0
        $region40: #{_lambda_.4} parent=27 // pred_fallthru
          _
        %v306 = vld [vmem:[#allocation2] sm:$0xff]
        %v307 = vld [vmem:[#allocation2 + $0x8] sm:$0xff]
        %v308 = vld [vmem:[#allocation2 + $0x10] sm:$0xff]
        %v309 = vld [vmem:[#allocation2 + $0x18] sm:$0xff]
        %v310 = vld [vmem:[#allocation2 + $0x20] sm:$0xff]
        %v311 = vld [vmem:[#allocation2 + $0x28] sm:$0xff]
        %v312 = vld [vmem:[#allocation2 + $0x30] sm:$0xff]
        %v313 = vld [vmem:[#allocation2 + $0x38] sm:$0xff]
        %v314 = vld [vmem:[#allocation2 + $0x40] sm:$0xff]
        %v315 = vld [vmem:[#allocation2 + $0x48] sm:$0xff]
        %v316 = vld [vmem:[#allocation2 + $0x50] sm:$0xff]
        %v317 = vld [vmem:[#allocation2 + $0x58] sm:$0xff]
        %v318 = vld [vmem:[#allocation2 + $0x60] sm:$0xff]
        %v319 = vld [vmem:[#allocation2 + $0x68] sm:$0xff]
        %v320 = vld [vmem:[#allocation2 + $0x70] sm:$0xff]
        %v321 = vld [vmem:[#allocation2 + $0x78] sm:$0xff]
        %v322 = vld [vmem:[#allocation2 + $0x80] sm:$0xff]
        %v323 = vld [vmem:[#allocation2 + $0x88] sm:$0xff]
        %v324 = vld [vmem:[#allocation2 + $0x90] sm:$0xff]
        %v325 = vld [vmem:[#allocation2 + $0x98] sm:$0xff]
        %v326 = vld [vmem:[#allocation2 + $0xa0] sm:$0xff]
        %v327 = vld [vmem:[#allocation2 + $0xa8] sm:$0xff]
        %v328 = vld [vmem:[#allocation2 + $0xb0] sm:$0xff]
        %v329 = vld [vmem:[#allocation2 + $0xb8] sm:$0xff]
        %v330 = vld [vmem:[#allocation2 + $0xc0] sm:$0xff]
        %v331 = vld [vmem:[#allocation2 + $0xc8] sm:$0xff]
        %v332 = vld [vmem:[#allocation2 + $0xd0] sm:$0xff]
        %v333 = vld [vmem:[#allocation2 + $0xd8] sm:$0xff]
        %v334 = vld [vmem:[#allocation2 + $0xe0] sm:$0xff]
        %v335 = vld [vmem:[#allocation2 + $0xe8] sm:$0xff]
        %v336 = vld [vmem:[#allocation2 + $0xf0] sm:$0xff]
        %v337 = vld [vmem:[#allocation2 + $0xf8] sm:$0xff]
        %v338 = vld [vmem:[#allocation2 + $0x100] sm:$0xff]
        %v339 = vld [vmem:[#allocation2 + $0x108] sm:$0xff]
        %v340 = vld [vmem:[#allocation2 + $0x110] sm:$0xff]
        %v341 = vld [vmem:[#allocation2 + $0x118] sm:$0xff]
        %v342 = vld [vmem:[#allocation2 + $0x120] sm:$0xff]
        %v343 = vld [vmem:[#allocation2 + $0x128] sm:$0xff]
        %v344 = vld [vmem:[#allocation2 + $0x130] sm:$0xff]
        %v345 = vld [vmem:[#allocation2 + $0x138] sm:$0xff]
        %v346 = vld [vmem:[#allocation2 + $0x140] sm:$0xff]
        %v347 = vld [vmem:[#allocation2 + $0x148] sm:$0xff]
        %v348 = vld [vmem:[#allocation2 + $0x150] sm:$0xff]
        %v349 = vld [vmem:[#allocation2 + $0x158] sm:$0xff]
        %v350 = vld [vmem:[#allocation2 + $0x160] sm:$0xff]
        %v351 = vld [vmem:[#allocation2 + $0x168] sm:$0xff]
        %v352 = vld [vmem:[#allocation2 + $0x170] sm:$0xff]
        %v353 = vld [vmem:[#allocation2 + $0x178] sm:$0xff]
        %v354 = vld [vmem:[#allocation2 + $0x180] sm:$0xff]
        %v355 = vld [vmem:[#allocation2 + $0x188] sm:$0xff]
        %v356 = vld [vmem:[#allocation2 + $0x190] sm:$0xff]
        %v357 = vld [vmem:[#allocation2 + $0x198] sm:$0xff]
        %v358 = vld [vmem:[#allocation2 + $0x1a0] sm:$0xff]
        %v359 = vld [vmem:[#allocation2 + $0x1a8] sm:$0xff]
        %v360 = vld [vmem:[#allocation2 + $0x1b0] sm:$0xff]
        %v361 = vld [vmem:[#allocation2 + $0x1b8] sm:$0xff]
        %v362 = vld [vmem:[#allocation2 + $0x1c0] sm:$0xff]
        %v363 = vld [vmem:[#allocation2 + $0x1c8] sm:$0xff]
        %v364 = vld [vmem:[#allocation2 + $0x1d0] sm:$0xff]
        %v365 = vld [vmem:[#allocation2 + $0x1d8] sm:$0xff]
        %v366 = vld [vmem:[#allocation2 + $0x1e0] sm:$0xff]
        %v367 = vld [vmem:[#allocation2 + $0x1e8] sm:$0xff]
        %v368 = vld [vmem:[#allocation2 + $0x1f0] sm:$0xff]
        %v369 = vld [vmem:[#allocation2 + $0x1f8] sm:$0xff]
        %v370 = vld [vmem:[%s190] sm:$0xff]
        %v371 = vld [vmem:[%s190 + $0x8] sm:$0xff]
        %v372 = vld [vmem:[%s190 + $0x10] sm:$0xff]
        %v373 = vld [vmem:[%s190 + $0x18] sm:$0xff]
        %v374 = vld [vmem:[%s190 + $0x20] sm:$0xff]
        %v375 = vld [vmem:[%s190 + $0x28] sm:$0xff]
        %v376 = vld [vmem:[%s190 + $0x30] sm:$0xff]
        %v377 = vld [vmem:[%s190 + $0x38] sm:$0xff]
        %v378 = vld [vmem:[%s190 + $0x40] sm:$0xff]
        %v379 = vld [vmem:[%s190 + $0x48] sm:$0xff]
        %v380 = vld [vmem:[%s190 + $0x50] sm:$0xff]
        %v381 = vld [vmem:[%s190 + $0x58] sm:$0xff]
        %v382 = vld [vmem:[%s190 + $0x60] sm:$0xff]
        %v383 = vld [vmem:[%s190 + $0x68] sm:$0xff]
        %v384 = vld [vmem:[%s190 + $0x70] sm:$0xff]
        %v385 = vld [vmem:[%s190 + $0x78] sm:$0xff]
        %v386 = vld [vmem:[%s190 + $0x80] sm:$0xff]
        %v387 = vld [vmem:[%s190 + $0x88] sm:$0xff]
        %v388 = vld [vmem:[%s190 + $0x90] sm:$0xff]
        %v389 = vld [vmem:[%s190 + $0x98] sm:$0xff]
        %v390 = vld [vmem:[%s190 + $0xa0] sm:$0xff]
        %v391 = vld [vmem:[%s190 + $0xa8] sm:$0xff]
        %v392 = vld [vmem:[%s190 + $0xb0] sm:$0xff]
        %v393 = vld [vmem:[%s190 + $0xb8] sm:$0xff]
        %v394 = vld [vmem:[%s190 + $0xc0] sm:$0xff]
        %v395 = vld [vmem:[%s190 + $0xc8] sm:$0xff]
        %v396 = vld [vmem:[%s190 + $0xd0] sm:$0xff]
        %v397 = vld [vmem:[%s190 + $0xd8] sm:$0xff]
        %v398 = vld [vmem:[%s190 + $0xe0] sm:$0xff]
        %v399 = vld [vmem:[%s190 + $0xe8] sm:$0xff]
        %v400 = vld [vmem:[%s190 + $0xf0] sm:$0xff]
        %v401 = vld [vmem:[%s190 + $0xf8] sm:$0xff]
        %v402 = vld [vmem:[%s190 + $0x100] sm:$0xff]
        %v403 = vld [vmem:[%s190 + $0x108] sm:$0xff]
        %v404 = vld [vmem:[%s190 + $0x110] sm:$0xff]
        %v405 = vld [vmem:[%s190 + $0x118] sm:$0xff]
        %v406 = vld [vmem:[%s190 + $0x120] sm:$0xff]
        %v407 = vld [vmem:[%s190 + $0x128] sm:$0xff]
        %v408 = vld [vmem:[%s190 + $0x130] sm:$0xff]
        %v409 = vld [vmem:[%s190 + $0x138] sm:$0xff]
        %v410 = vld [vmem:[%s190 + $0x140] sm:$0xff]
        %v411 = vld [vmem:[%s190 + $0x148] sm:$0xff]
        %v412 = vld [vmem:[%s190 + $0x150] sm:$0xff]
        %v413 = vld [vmem:[%s190 + $0x158] sm:$0xff]
        %v414 = vld [vmem:[%s190 + $0x160] sm:$0xff]
        %v415 = vld [vmem:[%s190 + $0x168] sm:$0xff]
        %v416 = vld [vmem:[%s190 + $0x170] sm:$0xff]
        %v417 = vld [vmem:[%s190 + $0x178] sm:$0xff]
        %v418 = vld [vmem:[%s190 + $0x180] sm:$0xff]
        %v419 = vld [vmem:[%s190 + $0x188] sm:$0xff]
        %v420 = vld [vmem:[%s190 + $0x190] sm:$0xff]
        %v421 = vld [vmem:[%s190 + $0x198] sm:$0xff]
        %v422 = vld [vmem:[%s190 + $0x1a0] sm:$0xff]
        %v423 = vld [vmem:[%s190 + $0x1a8] sm:$0xff]
        %v424 = vld [vmem:[%s190 + $0x1b0] sm:$0xff]
        %v425 = vld [vmem:[%s190 + $0x1b8] sm:$0xff]
        %v426 = vld [vmem:[%s190 + $0x1c0] sm:$0xff]
        %v427 = vld [vmem:[%s190 + $0x1c8] sm:$0xff]
        %v428 = vld [vmem:[%s190 + $0x1d0] sm:$0xff]
        %v429 = vld [vmem:[%s190 + $0x1d8] sm:$0xff]
        %v430 = vld [vmem:[%s190 + $0x1e0] sm:$0xff]
        %v431 = vld [vmem:[%s190 + $0x1e8] sm:$0xff]
        %v432 = vld [vmem:[%s190 + $0x1f0] sm:$0xff]
        %v433 = vld [vmem:[%s190 + $0x1f8] sm:$0xff]
        %v434 = vpack.c.bf16 %v372, %v370
        %v435 = vpack.c.bf16 %v373, %v371
        %v436 = vpack.c.bf16 %v376, %v374
        %v437 = vpack.c.bf16 %v377, %v375
        %v438 = vpack.c.bf16 %v380, %v378
        %v439 = vpack.c.bf16 %v381, %v379
        %v440 = vpack.c.bf16 %v384, %v382
        %v441 = vpack.c.bf16 %v385, %v383
        %v442 = vpack.c.bf16 %v388, %v386
        %v443 = vpack.c.bf16 %v389, %v387
        %v444 = vpack.c.bf16 %v392, %v390
        %v445 = vpack.c.bf16 %v393, %v391
        %v446 = vpack.c.bf16 %v396, %v394
        %v447 = vpack.c.bf16 %v397, %v395
        %v448 = vpack.c.bf16 %v400, %v398
        %v449 = vpack.c.bf16 %v401, %v399
        %v450 = vpack.c.bf16 %v404, %v402
        %v451 = vpack.c.bf16 %v405, %v403
        %v452 = vpack.c.bf16 %v408, %v406
        %v453 = vpack.c.bf16 %v409, %v407
        %v454 = vpack.c.bf16 %v412, %v410
        %v455 = vpack.c.bf16 %v413, %v411
        %v456 = vpack.c.bf16 %v416, %v414
        %v457 = vpack.c.bf16 %v417, %v415
        %v458 = vpack.c.bf16 %v420, %v418
        %v459 = vpack.c.bf16 %v421, %v419
        %v460 = vpack.c.bf16 %v424, %v422
        %v461 = vpack.c.bf16 %v425, %v423
        %v462 = vpack.c.bf16 %v428, %v426
        %v463 = vpack.c.bf16 %v429, %v427
        %v464 = vpack.c.bf16 %v432, %v430
        %v465 = vpack.c.bf16 %v433, %v431
        %v466 = vld [vmem:[#allocation5] sm:$0xff]
        %v467 = vld [vmem:[#allocation5 + $0x8] sm:$0xff]
        %v468 = vld [vmem:[#allocation5 + $0x10] sm:$0xff]
        %v469 = vld [vmem:[#allocation5 + $0x18] sm:$0xff]
        %v470 = vld [vmem:[#allocation5 + $0x20] sm:$0xff]
        %v471 = vld [vmem:[#allocation5 + $0x28] sm:$0xff]
        %v472 = vld [vmem:[#allocation5 + $0x30] sm:$0xff]
        %v473 = vld [vmem:[#allocation5 + $0x38] sm:$0xff]
        %v474 = vld [vmem:[#allocation5 + $0x40] sm:$0xff]
        %v475 = vld [vmem:[#allocation5 + $0x48] sm:$0xff]
        %v476 = vld [vmem:[#allocation5 + $0x50] sm:$0xff]
        %v477 = vld [vmem:[#allocation5 + $0x58] sm:$0xff]
        %v478 = vld [vmem:[#allocation5 + $0x60] sm:$0xff]
        %v479 = vld [vmem:[#allocation5 + $0x68] sm:$0xff]
        %v480 = vld [vmem:[#allocation5 + $0x70] sm:$0xff]
        %v481 = vld [vmem:[#allocation5 + $0x78] sm:$0xff]
        %v482 = vld [vmem:[#allocation5 + $0x80] sm:$0xff]
        %v483 = vld [vmem:[#allocation5 + $0x88] sm:$0xff]
        %v484 = vld [vmem:[#allocation5 + $0x90] sm:$0xff]
        %v485 = vld [vmem:[#allocation5 + $0x98] sm:$0xff]
        %v486 = vld [vmem:[#allocation5 + $0xa0] sm:$0xff]
        %v487 = vld [vmem:[#allocation5 + $0xa8] sm:$0xff]
        %v488 = vld [vmem:[#allocation5 + $0xb0] sm:$0xff]
        %v489 = vld [vmem:[#allocation5 + $0xb8] sm:$0xff]
        %v490 = vld [vmem:[#allocation5 + $0xc0] sm:$0xff]
        %v491 = vld [vmem:[#allocation5 + $0xc8] sm:$0xff]
        %v492 = vld [vmem:[#allocation5 + $0xd0] sm:$0xff]
        %v493 = vld [vmem:[#allocation5 + $0xd8] sm:$0xff]
        %v494 = vld [vmem:[#allocation5 + $0xe0] sm:$0xff]
        %v495 = vld [vmem:[#allocation5 + $0xe8] sm:$0xff]
        %v496 = vld [vmem:[#allocation5 + $0xf0] sm:$0xff]
        %v497 = vld [vmem:[#allocation5 + $0xf8] sm:$0xff]
        %v530 = vunpack.c.l.b16 %v466
        %v531 = vunpack.c.h.b16 %v466
        %v532 = vunpack.c.l.b16 %v467
        %v533 = vunpack.c.h.b16 %v467
        %v534 = vunpack.c.l.b16 %v468
        %v535 = vunpack.c.h.b16 %v468
        %v536 = vunpack.c.l.b16 %v469
        %v537 = vunpack.c.h.b16 %v469
        %v538 = vunpack.c.l.b16 %v470
        %v539 = vunpack.c.h.b16 %v470
        %v540 = vunpack.c.l.b16 %v471
        %v541 = vunpack.c.h.b16 %v471
        %v542 = vunpack.c.l.b16 %v472
        %v543 = vunpack.c.h.b16 %v472
        %v544 = vunpack.c.l.b16 %v473
        %v545 = vunpack.c.h.b16 %v473
        %v546 = vunpack.c.l.b16 %v474
        %v547 = vunpack.c.h.b16 %v474
        %v548 = vunpack.c.l.b16 %v475
        %v549 = vunpack.c.h.b16 %v475
        %v550 = vunpack.c.l.b16 %v476
        %v551 = vunpack.c.h.b16 %v476
        %v552 = vunpack.c.l.b16 %v477
        %v553 = vunpack.c.h.b16 %v477
        %v554 = vunpack.c.l.b16 %v478
        %v555 = vunpack.c.h.b16 %v478
        %v556 = vunpack.c.l.b16 %v479
        %v557 = vunpack.c.h.b16 %v479
        %v558 = vunpack.c.l.b16 %v480
        %v559 = vunpack.c.h.b16 %v480
        %v560 = vunpack.c.l.b16 %v481
        %v561 = vunpack.c.h.b16 %v481
        %v562 = vunpack.c.l.b16 %v482
        %v563 = vunpack.c.h.b16 %v482
        %v564 = vunpack.c.l.b16 %v483
        %v565 = vunpack.c.h.b16 %v483
        %v566 = vunpack.c.l.b16 %v484
        %v567 = vunpack.c.h.b16 %v484
        %v568 = vunpack.c.l.b16 %v485
        %v569 = vunpack.c.h.b16 %v485
        %v570 = vunpack.c.l.b16 %v486
        %v571 = vunpack.c.h.b16 %v486
        %v572 = vunpack.c.l.b16 %v487
        %v573 = vunpack.c.h.b16 %v487
        %v574 = vunpack.c.l.b16 %v488
        %v575 = vunpack.c.h.b16 %v488
        %v576 = vunpack.c.l.b16 %v489
        %v577 = vunpack.c.h.b16 %v489
        %v578 = vunpack.c.l.b16 %v490
        %v579 = vunpack.c.h.b16 %v490
        %v580 = vunpack.c.l.b16 %v491
        %v581 = vunpack.c.h.b16 %v491
        %v582 = vunpack.c.l.b16 %v492
        %v583 = vunpack.c.h.b16 %v492
        %v584 = vunpack.c.l.b16 %v493
        %v585 = vunpack.c.h.b16 %v493
        %v586 = vunpack.c.l.b16 %v494
        %v587 = vunpack.c.h.b16 %v494
        %v588 = vunpack.c.l.b16 %v495
        %v589 = vunpack.c.h.b16 %v495
        %v590 = vunpack.c.l.b16 %v496
        %v591 = vunpack.c.h.b16 %v496
        %v592 = vunpack.c.l.b16 %v497
        %v593 = vunpack.c.h.b16 %v497
        %v594 = vpack.c.b16 %v532, %v530
        %v595 = vpack.c.b16 %v533, %v531
        %v596 = vpack.c.b16 %v536, %v534
        %v597 = vpack.c.b16 %v537, %v535
        %v598 = vpack.c.b16 %v540, %v538
        %v599 = vpack.c.b16 %v541, %v539
        %v600 = vpack.c.b16 %v544, %v542
        %v601 = vpack.c.b16 %v545, %v543
        %v602 = vpack.c.b16 %v548, %v546
        %v603 = vpack.c.b16 %v549, %v547
        %v604 = vpack.c.b16 %v552, %v550
        %v605 = vpack.c.b16 %v553, %v551
        %v606 = vpack.c.b16 %v556, %v554
        %v607 = vpack.c.b16 %v557, %v555
        %v608 = vpack.c.b16 %v560, %v558
        %v609 = vpack.c.b16 %v561, %v559
        %v610 = vpack.c.b16 %v564, %v562
        %v611 = vpack.c.b16 %v565, %v563
        %v612 = vpack.c.b16 %v568, %v566
        %v613 = vpack.c.b16 %v569, %v567
        %v614 = vpack.c.b16 %v572, %v570
        %v615 = vpack.c.b16 %v573, %v571
        %v616 = vpack.c.b16 %v576, %v574
        %v617 = vpack.c.b16 %v577, %v575
        %v618 = vpack.c.b16 %v580, %v578
        %v619 = vpack.c.b16 %v581, %v579
        %v620 = vpack.c.b16 %v584, %v582
        %v621 = vpack.c.b16 %v585, %v583
        %v622 = vpack.c.b16 %v588, %v586
        %v623 = vpack.c.b16 %v589, %v587
        %v624 = vpack.c.b16 %v592, %v590
        %v625 = vpack.c.b16 %v593, %v591
        %658 = vmatpush.bf16.msra.mxu0 %v608
        %659 = vmatpush.bf16.msra.mxu0 %v606
        %660 = vmatpush.bf16.msra.mxu0 %v604
        %661 = vmatpush.bf16.msra.mxu0 %v602
        %662 = vmatpush.bf16.msra.mxu0 %v600
        %663 = vmatpush.bf16.msra.mxu0 %v598
        %664 = vmatpush.bf16.msra.mxu0 %v596
        %665 = vmatpush.bf16.msra.mxu0 %v594
        %666 = vmatmul.bf16.gmra.mxu0 %v434
        %v667 = vpop.f32.mrf.mxu0
        %v668 = vadd.f32 0.0, %v667
        %v669 = vpop.f32.mrf.mxu0
        %v670 = vadd.f32 0.0, %v669
        %671 = vmatmul.bf16.gmra.mxu0 %v436
        %v672 = vpop.f32.mrf.mxu0
        %v673 = vadd.f32 0.0, %v672
        %v674 = vpop.f32.mrf.mxu0
        %v675 = vadd.f32 0.0, %v674
        %676 = vmatmul.bf16.gmra.mxu0 %v438
        %v677 = vpop.f32.mrf.mxu0
        %v678 = vadd.f32 0.0, %v677
        %v679 = vpop.f32.mrf.mxu0
        %v680 = vadd.f32 0.0, %v679
        %681 = vmatmul.bf16.gmra.mxu0 %v440
        %v682 = vpop.f32.mrf.mxu0
        %v683 = vadd.f32 0.0, %v682
        %v684 = vpop.f32.mrf.mxu0
        %v685 = vadd.f32 0.0, %v684
        %686 = vmatmul.bf16.gmra.mxu0 %v442
        %v687 = vpop.f32.mrf.mxu0
        %v688 = vadd.f32 0.0, %v687
        %v689 = vpop.f32.mrf.mxu0
        %v690 = vadd.f32 0.0, %v689
        %691 = vmatmul.bf16.gmra.mxu0 %v444
        %v692 = vpop.f32.mrf.mxu0
        %v693 = vadd.f32 0.0, %v692
        %v694 = vpop.f32.mrf.mxu0
        %v695 = vadd.f32 0.0, %v694
        %696 = vmatmul.bf16.gmra.mxu0 %v446
        %v697 = vpop.f32.mrf.mxu0
        %v698 = vadd.f32 0.0, %v697
        %v699 = vpop.f32.mrf.mxu0
        %v700 = vadd.f32 0.0, %v699
        %701 = vmatmul.bf16.gmra.mxu0 %v448
        %v702 = vpop.f32.mrf.mxu0
        %v703 = vadd.f32 0.0, %v702
        %v704 = vpop.f32.mrf.mxu0
        %v705 = vadd.f32 0.0, %v704
        %706 = vmatmul.bf16.gmra.mxu0 %v450
        %v707 = vpop.f32.mrf.mxu0
        %v708 = vadd.f32 0.0, %v707
        %v709 = vpop.f32.mrf.mxu0
        %v710 = vadd.f32 0.0, %v709
        %711 = vmatmul.bf16.gmra.mxu0 %v452
        %v712 = vpop.f32.mrf.mxu0
        %v713 = vadd.f32 0.0, %v712
        %v714 = vpop.f32.mrf.mxu0
        %v715 = vadd.f32 0.0, %v714
        %716 = vmatmul.bf16.gmra.mxu0 %v454
        %v717 = vpop.f32.mrf.mxu0
        %v718 = vadd.f32 0.0, %v717
        %v719 = vpop.f32.mrf.mxu0
        %v720 = vadd.f32 0.0, %v719
        %721 = vmatmul.bf16.gmra.mxu0 %v456
        %v722 = vpop.f32.mrf.mxu0
        %v723 = vadd.f32 0.0, %v722
        %v724 = vpop.f32.mrf.mxu0
        %v725 = vadd.f32 0.0, %v724
        %726 = vmatmul.bf16.gmra.mxu0 %v458
        %v727 = vpop.f32.mrf.mxu0
        %v728 = vadd.f32 0.0, %v727
        %v729 = vpop.f32.mrf.mxu0
        %v730 = vadd.f32 0.0, %v729
        %731 = vmatmul.bf16.gmra.mxu0 %v460
        %v732 = vpop.f32.mrf.mxu0
        %v733 = vadd.f32 0.0, %v732
        %v734 = vpop.f32.mrf.mxu0
        %v735 = vadd.f32 0.0, %v734
        %736 = vmatmul.bf16.gmra.mxu0 %v462
        %v737 = vpop.f32.mrf.mxu0
        %v738 = vadd.f32 0.0, %v737
        %v739 = vpop.f32.mrf.mxu0
        %v740 = vadd.f32 0.0, %v739
        %741 = vmatmul.bf16.gmra.mxu0 %v464
        %v742 = vpop.f32.mrf.mxu0
        %v743 = vadd.f32 0.0, %v742
        %v744 = vpop.f32.mrf.mxu0
        %v745 = vadd.f32 0.0, %v744
        %746 = vdwg.mxu0
        %747 = vmatpush.bf16.msra.mxu0 %v624
        %748 = vmatpush.bf16.msra.mxu0 %v622
        %749 = vmatpush.bf16.msra.mxu0 %v620
        %750 = vmatpush.bf16.msra.mxu0 %v618
        %751 = vmatpush.bf16.msra.mxu0 %v616
        %752 = vmatpush.bf16.msra.mxu0 %v614
        %753 = vmatpush.bf16.msra.mxu0 %v612
        %754 = vmatpush.bf16.msra.mxu0 %v610
        %755 = vmatmul.bf16.gmra.mxu0 %v435
        %v756 = vpop.f32.mrf.mxu0
        %v757 = vadd.f32 %v668, %v756
        %v758 = vpop.f32.mrf.mxu0
        %v759 = vadd.f32 %v670, %v758
        %760 = vmatmul.bf16.gmra.mxu0 %v437
        %v761 = vpop.f32.mrf.mxu0
        %v762 = vadd.f32 %v673, %v761
        %v763 = vpop.f32.mrf.mxu0
        %v764 = vadd.f32 %v675, %v763
        %765 = vmatmul.bf16.gmra.mxu0 %v439
        %v766 = vpop.f32.mrf.mxu0
        %v767 = vadd.f32 %v678, %v766
        %v768 = vpop.f32.mrf.mxu0
        %v769 = vadd.f32 %v680, %v768
        %770 = vmatmul.bf16.gmra.mxu0 %v441
        %v771 = vpop.f32.mrf.mxu0
        %v772 = vadd.f32 %v683, %v771
        %v773 = vpop.f32.mrf.mxu0
        %v774 = vadd.f32 %v685, %v773
        %775 = vmatmul.bf16.gmra.mxu0 %v443
        %v776 = vpop.f32.mrf.mxu0
        %v777 = vadd.f32 %v688, %v776
        %v778 = vpop.f32.mrf.mxu0
        %v779 = vadd.f32 %v690, %v778
        %780 = vmatmul.bf16.gmra.mxu0 %v445
        %v781 = vpop.f32.mrf.mxu0
        %v782 = vadd.f32 %v693, %v781
        %v783 = vpop.f32.mrf.mxu0
        %v784 = vadd.f32 %v695, %v783
        %785 = vmatmul.bf16.gmra.mxu0 %v447
        %v786 = vpop.f32.mrf.mxu0
        %v787 = vadd.f32 %v698, %v786
        %v788 = vpop.f32.mrf.mxu0
        %v789 = vadd.f32 %v700, %v788
        %790 = vmatmul.bf16.gmra.mxu0 %v449
        %v791 = vpop.f32.mrf.mxu0
        %v792 = vadd.f32 %v703, %v791
        %v793 = vpop.f32.mrf.mxu0
        %v794 = vadd.f32 %v705, %v793
        %795 = vmatmul.bf16.gmra.mxu0 %v451
        %v796 = vpop.f32.mrf.mxu0
        %v797 = vadd.f32 %v708, %v796
        %v798 = vpop.f32.mrf.mxu0
        %v799 = vadd.f32 %v710, %v798
        %800 = vmatmul.bf16.gmra.mxu0 %v453
        %v801 = vpop.f32.mrf.mxu0
        %v802 = vadd.f32 %v713, %v801
        %v803 = vpop.f32.mrf.mxu0
        %v804 = vadd.f32 %v715, %v803
        %805 = vmatmul.bf16.gmra.mxu0 %v455
        %v806 = vpop.f32.mrf.mxu0
        %v807 = vadd.f32 %v718, %v806
        %v808 = vpop.f32.mrf.mxu0
        %v809 = vadd.f32 %v720, %v808
        %810 = vmatmul.bf16.gmra.mxu0 %v457
        %v811 = vpop.f32.mrf.mxu0
        %v812 = vadd.f32 %v723, %v811
        %v813 = vpop.f32.mrf.mxu0
        %v814 = vadd.f32 %v725, %v813
        %815 = vmatmul.bf16.gmra.mxu0 %v459
        %v816 = vpop.f32.mrf.mxu0
        %v817 = vadd.f32 %v728, %v816
        %v818 = vpop.f32.mrf.mxu0
        %v819 = vadd.f32 %v730, %v818
        %820 = vmatmul.bf16.gmra.mxu0 %v461
        %v821 = vpop.f32.mrf.mxu0
        %v822 = vadd.f32 %v733, %v821
        %v823 = vpop.f32.mrf.mxu0
        %v824 = vadd.f32 %v735, %v823
        %825 = vmatmul.bf16.gmra.mxu0 %v463
        %v826 = vpop.f32.mrf.mxu0
        %v827 = vadd.f32 %v738, %v826
        %v828 = vpop.f32.mrf.mxu0
        %v829 = vadd.f32 %v740, %v828
        %830 = vmatmul.bf16.gmra.mxu0 %v465
        %v831 = vpop.f32.mrf.mxu0
        %v832 = vadd.f32 %v743, %v831
        %v833 = vpop.f32.mrf.mxu0
        %v834 = vadd.f32 %v745, %v833
        %835 = vdwg.mxu0
        %836 = vmatpush.bf16.msra.mxu0 %v609
        %837 = vmatpush.bf16.msra.mxu0 %v607
        %838 = vmatpush.bf16.msra.mxu0 %v605
        %839 = vmatpush.bf16.msra.mxu0 %v603
        %840 = vmatpush.bf16.msra.mxu0 %v601
        %841 = vmatpush.bf16.msra.mxu0 %v599
        %842 = vmatpush.bf16.msra.mxu0 %v597
        %843 = vmatpush.bf16.msra.mxu0 %v595
        %844 = vmatmul.bf16.gmra.mxu0 %v434
        %v845 = vpop.f32.mrf.mxu0
        %v846 = vadd.f32 0.0, %v845
        %v847 = vpop.f32.mrf.mxu0
        %v848 = vadd.f32 0.0, %v847
        %849 = vmatmul.bf16.gmra.mxu0 %v436
        %v850 = vpop.f32.mrf.mxu0
        %v851 = vadd.f32 0.0, %v850
        %v852 = vpop.f32.mrf.mxu0
        %v853 = vadd.f32 0.0, %v852
        %854 = vmatmul.bf16.gmra.mxu0 %v438
        %v855 = vpop.f32.mrf.mxu0
        %v856 = vadd.f32 0.0, %v855
        %v857 = vpop.f32.mrf.mxu0
        %v858 = vadd.f32 0.0, %v857
        %859 = vmatmul.bf16.gmra.mxu0 %v440
        %v860 = vpop.f32.mrf.mxu0
        %v861 = vadd.f32 0.0, %v860
        %v862 = vpop.f32.mrf.mxu0
        %v863 = vadd.f32 0.0, %v862
        %864 = vmatmul.bf16.gmra.mxu0 %v442
        %v865 = vpop.f32.mrf.mxu0
        %v866 = vadd.f32 0.0, %v865
        %v867 = vpop.f32.mrf.mxu0
        %v868 = vadd.f32 0.0, %v867
        %869 = vmatmul.bf16.gmra.mxu0 %v444
        %v870 = vpop.f32.mrf.mxu0
        %v871 = vadd.f32 0.0, %v870
        %v872 = vpop.f32.mrf.mxu0
        %v873 = vadd.f32 0.0, %v872
        %874 = vmatmul.bf16.gmra.mxu0 %v446
        %v875 = vpop.f32.mrf.mxu0
        %v876 = vadd.f32 0.0, %v875
        %v877 = vpop.f32.mrf.mxu0
        %v878 = vadd.f32 0.0, %v877
        %879 = vmatmul.bf16.gmra.mxu0 %v448
        %v880 = vpop.f32.mrf.mxu0
        %v881 = vadd.f32 0.0, %v880
        %v882 = vpop.f32.mrf.mxu0
        %v883 = vadd.f32 0.0, %v882
        %884 = vmatmul.bf16.gmra.mxu0 %v450
        %v885 = vpop.f32.mrf.mxu0
        %v886 = vadd.f32 0.0, %v885
        %v887 = vpop.f32.mrf.mxu0
        %v888 = vadd.f32 0.0, %v887
        %889 = vmatmul.bf16.gmra.mxu0 %v452
        %v890 = vpop.f32.mrf.mxu0
        %v891 = vadd.f32 0.0, %v890
        %v892 = vpop.f32.mrf.mxu0
        %v893 = vadd.f32 0.0, %v892
        %894 = vmatmul.bf16.gmra.mxu0 %v454
        %v895 = vpop.f32.mrf.mxu0
        %v896 = vadd.f32 0.0, %v895
        %v897 = vpop.f32.mrf.mxu0
        %v898 = vadd.f32 0.0, %v897
        %899 = vmatmul.bf16.gmra.mxu0 %v456
        %v900 = vpop.f32.mrf.mxu0
        %v901 = vadd.f32 0.0, %v900
        %v902 = vpop.f32.mrf.mxu0
        %v903 = vadd.f32 0.0, %v902
        %904 = vmatmul.bf16.gmra.mxu0 %v458
        %v905 = vpop.f32.mrf.mxu0
        %v906 = vadd.f32 0.0, %v905
        %v907 = vpop.f32.mrf.mxu0
        %v908 = vadd.f32 0.0, %v907
        %909 = vmatmul.bf16.gmra.mxu0 %v460
        %v910 = vpop.f32.mrf.mxu0
        %v911 = vadd.f32 0.0, %v910
        %v912 = vpop.f32.mrf.mxu0
        %v913 = vadd.f32 0.0, %v912
        %914 = vmatmul.bf16.gmra.mxu0 %v462
        %v915 = vpop.f32.mrf.mxu0
        %v916 = vadd.f32 0.0, %v915
        %v917 = vpop.f32.mrf.mxu0
        %v918 = vadd.f32 0.0, %v917
        %919 = vmatmul.bf16.gmra.mxu0 %v464
        %v920 = vpop.f32.mrf.mxu0
        %v921 = vadd.f32 0.0, %v920
        %v922 = vpop.f32.mrf.mxu0
        %v923 = vadd.f32 0.0, %v922
        %924 = vdwg.mxu0
        %925 = vmatpush.bf16.msra.mxu0 %v625
        %926 = vmatpush.bf16.msra.mxu0 %v623
        %927 = vmatpush.bf16.msra.mxu0 %v621
        %928 = vmatpush.bf16.msra.mxu0 %v619
        %929 = vmatpush.bf16.msra.mxu0 %v617
        %930 = vmatpush.bf16.msra.mxu0 %v615
        %931 = vmatpush.bf16.msra.mxu0 %v613
        %932 = vmatpush.bf16.msra.mxu0 %v611
        %933 = vmatmul.bf16.gmra.mxu0 %v435
        %v934 = vpop.f32.mrf.mxu0
        %v935 = vadd.f32 %v846, %v934
        %v936 = vpop.f32.mrf.mxu0
        %v937 = vadd.f32 %v848, %v936
        %938 = vmatmul.bf16.gmra.mxu0 %v437
        %v939 = vpop.f32.mrf.mxu0
        %v940 = vadd.f32 %v851, %v939
        %v941 = vpop.f32.mrf.mxu0
        %v942 = vadd.f32 %v853, %v941
        %943 = vmatmul.bf16.gmra.mxu0 %v439
        %v944 = vpop.f32.mrf.mxu0
        %v945 = vadd.f32 %v856, %v944
        %v946 = vpop.f32.mrf.mxu0
        %v947 = vadd.f32 %v858, %v946
        %948 = vmatmul.bf16.gmra.mxu0 %v441
        %v949 = vpop.f32.mrf.mxu0
        %v950 = vadd.f32 %v861, %v949
        %v951 = vpop.f32.mrf.mxu0
        %v952 = vadd.f32 %v863, %v951
        %953 = vmatmul.bf16.gmra.mxu0 %v443
        %v954 = vpop.f32.mrf.mxu0
        %v955 = vadd.f32 %v866, %v954
        %v956 = vpop.f32.mrf.mxu0
        %v957 = vadd.f32 %v868, %v956
        %958 = vmatmul.bf16.gmra.mxu0 %v445
        %v959 = vpop.f32.mrf.mxu0
        %v960 = vadd.f32 %v871, %v959
        %v961 = vpop.f32.mrf.mxu0
        %v962 = vadd.f32 %v873, %v961
        %963 = vmatmul.bf16.gmra.mxu0 %v447
        %v964 = vpop.f32.mrf.mxu0
        %v965 = vadd.f32 %v876, %v964
        %v966 = vpop.f32.mrf.mxu0
        %v967 = vadd.f32 %v878, %v966
        %968 = vmatmul.bf16.gmra.mxu0 %v449
        %v969 = vpop.f32.mrf.mxu0
        %v970 = vadd.f32 %v881, %v969
        %v971 = vpop.f32.mrf.mxu0
        %v972 = vadd.f32 %v883, %v971
        %973 = vmatmul.bf16.gmra.mxu0 %v451
        %v974 = vpop.f32.mrf.mxu0
        %v975 = vadd.f32 %v886, %v974
        %v976 = vpop.f32.mrf.mxu0
        %v977 = vadd.f32 %v888, %v976
        %978 = vmatmul.bf16.gmra.mxu0 %v453
        %v979 = vpop.f32.mrf.mxu0
        %v980 = vadd.f32 %v891, %v979
        %v981 = vpop.f32.mrf.mxu0
        %v982 = vadd.f32 %v893, %v981
        %983 = vmatmul.bf16.gmra.mxu0 %v455
        %v984 = vpop.f32.mrf.mxu0
        %v985 = vadd.f32 %v896, %v984
        %v986 = vpop.f32.mrf.mxu0
        %v987 = vadd.f32 %v898, %v986
        %988 = vmatmul.bf16.gmra.mxu0 %v457
        %v989 = vpop.f32.mrf.mxu0
        %v990 = vadd.f32 %v901, %v989
        %v991 = vpop.f32.mrf.mxu0
        %v992 = vadd.f32 %v903, %v991
        %993 = vmatmul.bf16.gmra.mxu0 %v459
        %v994 = vpop.f32.mrf.mxu0
        %v995 = vadd.f32 %v906, %v994
        %v996 = vpop.f32.mrf.mxu0
        %v997 = vadd.f32 %v908, %v996
        %998 = vmatmul.bf16.gmra.mxu0 %v461
        %v999 = vpop.f32.mrf.mxu0
        %v1000 = vadd.f32 %v911, %v999
        %v1001 = vpop.f32.mrf.mxu0
        %v1002 = vadd.f32 %v913, %v1001
        %1003 = vmatmul.bf16.gmra.mxu0 %v463
        %v1004 = vpop.f32.mrf.mxu0
        %v1005 = vadd.f32 %v916, %v1004
        %v1006 = vpop.f32.mrf.mxu0
        %v1007 = vadd.f32 %v918, %v1006
        %1008 = vmatmul.bf16.gmra.mxu0 %v465
        %v1009 = vpop.f32.mrf.mxu0
        %v1010 = vadd.f32 %v921, %v1009
        %v1011 = vpop.f32.mrf.mxu0
        %v1012 = vadd.f32 %v923, %v1011
        %1013 = vdwg.mxu0
        %v1014 = vadd.f32 %v306, %v757
        %v1015 = vadd.f32 %v307, %v935
        %v1016 = vadd.f32 %v308, %v759
        %v1017 = vadd.f32 %v309, %v937
        %v1018 = vadd.f32 %v310, %v762
        %v1019 = vadd.f32 %v311, %v940
        %v1020 = vadd.f32 %v312, %v764
        %v1021 = vadd.f32 %v313, %v942
        %v1022 = vadd.f32 %v314, %v767
        %v1023 = vadd.f32 %v315, %v945
        %v1024 = vadd.f32 %v316, %v769
        %v1025 = vadd.f32 %v317, %v947
        %v1026 = vadd.f32 %v318, %v772
        %v1027 = vadd.f32 %v319, %v950
        %v1028 = vadd.f32 %v320, %v774
        %v1029 = vadd.f32 %v321, %v952
        %v1030 = vadd.f32 %v322, %v777
        %v1031 = vadd.f32 %v323, %v955
        %v1032 = vadd.f32 %v324, %v779
        %v1033 = vadd.f32 %v325, %v957
        %v1034 = vadd.f32 %v326, %v782
        %v1035 = vadd.f32 %v327, %v960
        %v1036 = vadd.f32 %v328, %v784
        %v1037 = vadd.f32 %v329, %v962
        %v1038 = vadd.f32 %v330, %v787
        %v1039 = vadd.f32 %v331, %v965
        %v1040 = vadd.f32 %v332, %v789
        %v1041 = vadd.f32 %v333, %v967
        %v1042 = vadd.f32 %v334, %v792
        %v1043 = vadd.f32 %v335, %v970
        %v1044 = vadd.f32 %v336, %v794
        %v1045 = vadd.f32 %v337, %v972
        %v1046 = vadd.f32 %v338, %v797
        %v1047 = vadd.f32 %v339, %v975
        %v1048 = vadd.f32 %v340, %v799
        %v1049 = vadd.f32 %v341, %v977
        %v1050 = vadd.f32 %v342, %v802
        %v1051 = vadd.f32 %v343, %v980
        %v1052 = vadd.f32 %v344, %v804
        %v1053 = vadd.f32 %v345, %v982
        %v1054 = vadd.f32 %v346, %v807
        %v1055 = vadd.f32 %v347, %v985
        %v1056 = vadd.f32 %v348, %v809
        %v1057 = vadd.f32 %v349, %v987
        %v1058 = vadd.f32 %v350, %v812
        %v1059 = vadd.f32 %v351, %v990
        %v1060 = vadd.f32 %v352, %v814
        %v1061 = vadd.f32 %v353, %v992
        %v1062 = vadd.f32 %v354, %v817
        %v1063 = vadd.f32 %v355, %v995
        %v1064 = vadd.f32 %v356, %v819
        %v1065 = vadd.f32 %v357, %v997
        %v1066 = vadd.f32 %v358, %v822
        %v1067 = vadd.f32 %v359, %v1000
        %v1068 = vadd.f32 %v360, %v824
        %v1069 = vadd.f32 %v361, %v1002
        %v1070 = vadd.f32 %v362, %v827
        %v1071 = vadd.f32 %v363, %v1005
        %v1072 = vadd.f32 %v364, %v829
        %v1073 = vadd.f32 %v365, %v1007
        %v1074 = vadd.f32 %v366, %v832
        %v1075 = vadd.f32 %v367, %v1010
        %v1076 = vadd.f32 %v368, %v834
        %v1077 = vadd.f32 %v369, %v1012
        %1078 = vst [vmem:[#allocation2] sm:$0xff] %v1014
        %1079 = vst [vmem:[#allocation2 + $0x8] sm:$0xff] %v1015
        %1080 = vst [vmem:[#allocation2 + $0x10] sm:$0xff] %v1016
        %1081 = vst [vmem:[#allocation2 + $0x18] sm:$0xff] %v1017
        %1082 = vst [vmem:[#allocation2 + $0x20] sm:$0xff] %v1018
        %1083 = vst [vmem:[#allocation2 + $0x28] sm:$0xff] %v1019
        %1084 = vst [vmem:[#allocation2 + $0x30] sm:$0xff] %v1020
        %1085 = vst [vmem:[#allocation2 + $0x38] sm:$0xff] %v1021
        %1086 = vst [vmem:[#allocation2 + $0x40] sm:$0xff] %v1022
        %1087 = vst [vmem:[#allocation2 + $0x48] sm:$0xff] %v1023
        %1088 = vst [vmem:[#allocation2 + $0x50] sm:$0xff] %v1024
        %1089 = vst [vmem:[#allocation2 + $0x58] sm:$0xff] %v1025
        %1090 = vst [vmem:[#allocation2 + $0x60] sm:$0xff] %v1026
        %1091 = vst [vmem:[#allocation2 + $0x68] sm:$0xff] %v1027
        %1092 = vst [vmem:[#allocation2 + $0x70] sm:$0xff] %v1028
        %1093 = vst [vmem:[#allocation2 + $0x78] sm:$0xff] %v1029
        %1094 = vst [vmem:[#allocation2 + $0x80] sm:$0xff] %v1030
        %1095 = vst [vmem:[#allocation2 + $0x88] sm:$0xff] %v1031
        %1096 = vst [vmem:[#allocation2 + $0x90] sm:$0xff] %v1032
        %1097 = vst [vmem:[#allocation2 + $0x98] sm:$0xff] %v1033
        %1098 = vst [vmem:[#allocation2 + $0xa0] sm:$0xff] %v1034
        %1099 = vst [vmem:[#allocation2 + $0xa8] sm:$0xff] %v1035
        %1100 = vst [vmem:[#allocation2 + $0xb0] sm:$0xff] %v1036
        %1101 = vst [vmem:[#allocation2 + $0xb8] sm:$0xff] %v1037
        %1102 = vst [vmem:[#allocation2 + $0xc0] sm:$0xff] %v1038
        %1103 = vst [vmem:[#allocation2 + $0xc8] sm:$0xff] %v1039
        %1104 = vst [vmem:[#allocation2 + $0xd0] sm:$0xff] %v1040
        %1105 = vst [vmem:[#allocation2 + $0xd8] sm:$0xff] %v1041
        %1106 = vst [vmem:[#allocation2 + $0xe0] sm:$0xff] %v1042
        %1107 = vst [vmem:[#allocation2 + $0xe8] sm:$0xff] %v1043
        %1108 = vst [vmem:[#allocation2 + $0xf0] sm:$0xff] %v1044
        %1109 = vst [vmem:[#allocation2 + $0xf8] sm:$0xff] %v1045
        %1110 = vst [vmem:[#allocation2 + $0x100] sm:$0xff] %v1046
        %1111 = vst [vmem:[#allocation2 + $0x108] sm:$0xff] %v1047
        %1112 = vst [vmem:[#allocation2 + $0x110] sm:$0xff] %v1048
        %1113 = vst [vmem:[#allocation2 + $0x118] sm:$0xff] %v1049
        %1114 = vst [vmem:[#allocation2 + $0x120] sm:$0xff] %v1050
        %1115 = vst [vmem:[#allocation2 + $0x128] sm:$0xff] %v1051
        %1116 = vst [vmem:[#allocation2 + $0x130] sm:$0xff] %v1052
        %1117 = vst [vmem:[#allocation2 + $0x138] sm:$0xff] %v1053
        %1118 = vst [vmem:[#allocation2 + $0x140] sm:$0xff] %v1054
        %1119 = vst [vmem:[#allocation2 + $0x148] sm:$0xff] %v1055
        %1120 = vst [vmem:[#allocation2 + $0x150] sm:$0xff] %v1056
        %1121 = vst [vmem:[#allocation2 + $0x158] sm:$0xff] %v1057
        %1122 = vst [vmem:[#allocation2 + $0x160] sm:$0xff] %v1058
        %1123 = vst [vmem:[#allocation2 + $0x168] sm:$0xff] %v1059
        %1124 = vst [vmem:[#allocation2 + $0x170] sm:$0xff] %v1060
        %1125 = vst [vmem:[#allocation2 + $0x178] sm:$0xff] %v1061
        %1126 = vst [vmem:[#allocation2 + $0x180] sm:$0xff] %v1062
        %1127 = vst [vmem:[#allocation2 + $0x188] sm:$0xff] %v1063
        %1128 = vst [vmem:[#allocation2 + $0x190] sm:$0xff] %v1064
        %1129 = vst [vmem:[#allocation2 + $0x198] sm:$0xff] %v1065
        %1130 = vst [vmem:[#allocation2 + $0x1a0] sm:$0xff] %v1066
        %1131 = vst [vmem:[#allocation2 + $0x1a8] sm:$0xff] %v1067
        %1132 = vst [vmem:[#allocation2 + $0x1b0] sm:$0xff] %v1068
        %1133 = vst [vmem:[#allocation2 + $0x1b8] sm:$0xff] %v1069
        %1134 = vst [vmem:[#allocation2 + $0x1c0] sm:$0xff] %v1070
        %1135 = vst [vmem:[#allocation2 + $0x1c8] sm:$0xff] %v1071
        %1136 = vst [vmem:[#allocation2 + $0x1d0] sm:$0xff] %v1072
        %1137 = vst [vmem:[#allocation2 + $0x1d8] sm:$0xff] %v1073
        %1138 = vst [vmem:[#allocation2 + $0x1e0] sm:$0xff] %v1074
        %1139 = vst [vmem:[#allocation2 + $0x1e8] sm:$0xff] %v1075
        %1140 = vst [vmem:[#allocation2 + $0x1f0] sm:$0xff] %v1076
        %1141 = vst [vmem:[#allocation2 + $0x1f8] sm:$0xff] %v1077
        // Predicated region
        $region41: #{_lambda_.4} parent=27 // pred_check
          %p1142 = pneg %p238
        $region42: #{_lambda_.4} parent=27 // pred_check_branch
          %1144 = sbr.rel (%p1142) target = $region44
        $region43: #{_lambda_.4} parent=27 // pred_region
          %v1145 = vld [vmem:[#allocation2] sm:$0xff]
          %v1146 = vld [vmem:[#allocation2 + $0x8] sm:$0xff]
          %v1147 = vld [vmem:[#allocation2 + $0x10] sm:$0xff]
          %v1148 = vld [vmem:[#allocation2 + $0x18] sm:$0xff]
          %v1149 = vld [vmem:[#allocation2 + $0x20] sm:$0xff]
          %v1150 = vld [vmem:[#allocation2 + $0x28] sm:$0xff]
          %v1151 = vld [vmem:[#allocation2 + $0x30] sm:$0xff]
          %v1152 = vld [vmem:[#allocation2 + $0x38] sm:$0xff]
          %v1153 = vld [vmem:[#allocation2 + $0x40] sm:$0xff]
          %v1154 = vld [vmem:[#allocation2 + $0x48] sm:$0xff]
          %v1155 = vld [vmem:[#allocation2 + $0x50] sm:$0xff]
          %v1156 = vld [vmem:[#allocation2 + $0x58] sm:$0xff]
          %v1157 = vld [vmem:[#allocation2 + $0x60] sm:$0xff]
          %v1158 = vld [vmem:[#allocation2 + $0x68] sm:$0xff]
          %v1159 = vld [vmem:[#allocation2 + $0x70] sm:$0xff]
          %v1160 = vld [vmem:[#allocation2 + $0x78] sm:$0xff]
          %v1161 = vld [vmem:[#allocation2 + $0x80] sm:$0xff]
          %v1162 = vld [vmem:[#allocation2 + $0x88] sm:$0xff]
          %v1163 = vld [vmem:[#allocation2 + $0x90] sm:$0xff]
          %v1164 = vld [vmem:[#allocation2 + $0x98] sm:$0xff]
          %v1165 = vld [vmem:[#allocation2 + $0xa0] sm:$0xff]
          %v1166 = vld [vmem:[#allocation2 + $0xa8] sm:$0xff]
          %v1167 = vld [vmem:[#allocation2 + $0xb0] sm:$0xff]
          %v1168 = vld [vmem:[#allocation2 + $0xb8] sm:$0xff]
          %v1169 = vld [vmem:[#allocation2 + $0xc0] sm:$0xff]
          %v1170 = vld [vmem:[#allocation2 + $0xc8] sm:$0xff]
          %v1171 = vld [vmem:[#allocation2 + $0xd0] sm:$0xff]
          %v1172 = vld [vmem:[#allocation2 + $0xd8] sm:$0xff]
          %v1173 = vld [vmem:[#allocation2 + $0xe0] sm:$0xff]
          %v1174 = vld [vmem:[#allocation2 + $0xe8] sm:$0xff]
          %v1175 = vld [vmem:[#allocation2 + $0xf0] sm:$0xff]
          %v1176 = vld [vmem:[#allocation2 + $0xf8] sm:$0xff]
          %v1177 = vld [vmem:[#allocation2 + $0x100] sm:$0xff]
          %v1178 = vld [vmem:[#allocation2 + $0x108] sm:$0xff]
          %v1179 = vld [vmem:[#allocation2 + $0x110] sm:$0xff]
          %v1180 = vld [vmem:[#allocation2 + $0x118] sm:$0xff]
          %v1181 = vld [vmem:[#allocation2 + $0x120] sm:$0xff]
          %v1182 = vld [vmem:[#allocation2 + $0x128] sm:$0xff]
          %v1183 = vld [vmem:[#allocation2 + $0x130] sm:$0xff]
          %v1184 = vld [vmem:[#allocation2 + $0x138] sm:$0xff]
          %v1185 = vld [vmem:[#allocation2 + $0x140] sm:$0xff]
          %v1186 = vld [vmem:[#allocation2 + $0x148] sm:$0xff]
          %v1187 = vld [vmem:[#allocation2 + $0x150] sm:$0xff]
          %v1188 = vld [vmem:[#allocation2 + $0x158] sm:$0xff]
          %v1189 = vld [vmem:[#allocation2 + $0x160] sm:$0xff]
          %v1190 = vld [vmem:[#allocation2 + $0x168] sm:$0xff]
          %v1191 = vld [vmem:[#allocation2 + $0x170] sm:$0xff]
          %v1192 = vld [vmem:[#allocation2 + $0x178] sm:$0xff]
          %v1193 = vld [vmem:[#allocation2 + $0x180] sm:$0xff]
          %v1194 = vld [vmem:[#allocation2 + $0x188] sm:$0xff]
          %v1195 = vld [vmem:[#allocation2 + $0x190] sm:$0xff]
          %v1196 = vld [vmem:[#allocation2 + $0x198] sm:$0xff]
          %v1197 = vld [vmem:[#allocation2 + $0x1a0] sm:$0xff]
          %v1198 = vld [vmem:[#allocation2 + $0x1a8] sm:$0xff]
          %v1199 = vld [vmem:[#allocation2 + $0x1b0] sm:$0xff]
          %v1200 = vld [vmem:[#allocation2 + $0x1b8] sm:$0xff]
          %v1201 = vld [vmem:[#allocation2 + $0x1c0] sm:$0xff]
          %v1202 = vld [vmem:[#allocation2 + $0x1c8] sm:$0xff]
          %v1203 = vld [vmem:[#allocation2 + $0x1d0] sm:$0xff]
          %v1204 = vld [vmem:[#allocation2 + $0x1d8] sm:$0xff]
          %v1205 = vld [vmem:[#allocation2 + $0x1e0] sm:$0xff]
          %v1206 = vld [vmem:[#allocation2 + $0x1e8] sm:$0xff]
          %v1207 = vld [vmem:[#allocation2 + $0x1f0] sm:$0xff]
          %v1208 = vld [vmem:[#allocation2 + $0x1f8] sm:$0xff]
          %v1209 = vpack.c.bf16 %v1146, %v1145
          %v1210 = vpack.c.bf16 %v1148, %v1147
          %v1211 = vpack.c.bf16 %v1150, %v1149
          %v1212 = vpack.c.bf16 %v1152, %v1151
          %v1213 = vpack.c.bf16 %v1154, %v1153
          %v1214 = vpack.c.bf16 %v1156, %v1155
          %v1215 = vpack.c.bf16 %v1158, %v1157
          %v1216 = vpack.c.bf16 %v1160, %v1159
          %v1217 = vpack.c.bf16 %v1162, %v1161
          %v1218 = vpack.c.bf16 %v1164, %v1163
          %v1219 = vpack.c.bf16 %v1166, %v1165
          %v1220 = vpack.c.bf16 %v1168, %v1167
          %v1221 = vpack.c.bf16 %v1170, %v1169
          %v1222 = vpack.c.bf16 %v1172, %v1171
          %v1223 = vpack.c.bf16 %v1174, %v1173
          %v1224 = vpack.c.bf16 %v1176, %v1175
          %v1225 = vpack.c.bf16 %v1178, %v1177
          %v1226 = vpack.c.bf16 %v1180, %v1179
          %v1227 = vpack.c.bf16 %v1182, %v1181
          %v1228 = vpack.c.bf16 %v1184, %v1183
          %v1229 = vpack.c.bf16 %v1186, %v1185
          %v1230 = vpack.c.bf16 %v1188, %v1187
          %v1231 = vpack.c.bf16 %v1190, %v1189
          %v1232 = vpack.c.bf16 %v1192, %v1191
          %v1233 = vpack.c.bf16 %v1194, %v1193
          %v1234 = vpack.c.bf16 %v1196, %v1195
          %v1235 = vpack.c.bf16 %v1198, %v1197
          %v1236 = vpack.c.bf16 %v1200, %v1199
          %v1237 = vpack.c.bf16 %v1202, %v1201
          %v1238 = vpack.c.bf16 %v1204, %v1203
          %v1239 = vpack.c.bf16 %v1206, %v1205
          %v1240 = vpack.c.bf16 %v1208, %v1207
          %1241 = vst [vmem:[%s235] sm:$0xff] %v1209
          %1242 = vst [vmem:[%s235 + $0x8] sm:$0xff] %v1210
          %1243 = vst [vmem:[%s235 + $0x10] sm:$0xff] %v1211
          %1244 = vst [vmem:[%s235 + $0x18] sm:$0xff] %v1212
          %1245 = vst [vmem:[%s235 + $0x20] sm:$0xff] %v1213
          %1246 = vst [vmem:[%s235 + $0x28] sm:$0xff] %v1214
          %1247 = vst [vmem:[%s235 + $0x30] sm:$0xff] %v1215
          %1248 = vst [vmem:[%s235 + $0x38] sm:$0xff] %v1216
          %1249 = vst [vmem:[%s235 + $0x40] sm:$0xff] %v1217
          %1250 = vst [vmem:[%s235 + $0x48] sm:$0xff] %v1218
          %1251 = vst [vmem:[%s235 + $0x50] sm:$0xff] %v1219
          %1252 = vst [vmem:[%s235 + $0x58] sm:$0xff] %v1220
          %1253 = vst [vmem:[%s235 + $0x60] sm:$0xff] %v1221
          %1254 = vst [vmem:[%s235 + $0x68] sm:$0xff] %v1222
          %1255 = vst [vmem:[%s235 + $0x70] sm:$0xff] %v1223
          %1256 = vst [vmem:[%s235 + $0x78] sm:$0xff] %v1224
          %1257 = vst [vmem:[%s235 + $0x80] sm:$0xff] %v1225
          %1258 = vst [vmem:[%s235 + $0x88] sm:$0xff] %v1226
          %1259 = vst [vmem:[%s235 + $0x90] sm:$0xff] %v1227
          %1260 = vst [vmem:[%s235 + $0x98] sm:$0xff] %v1228
          %1261 = vst [vmem:[%s235 + $0xa0] sm:$0xff] %v1229
          %1262 = vst [vmem:[%s235 + $0xa8] sm:$0xff] %v1230
          %1263 = vst [vmem:[%s235 + $0xb0] sm:$0xff] %v1231
          %1264 = vst [vmem:[%s235 + $0xb8] sm:$0xff] %v1232
          %1265 = vst [vmem:[%s235 + $0xc0] sm:$0xff] %v1233
          %1266 = vst [vmem:[%s235 + $0xc8] sm:$0xff] %v1234
          %1267 = vst [vmem:[%s235 + $0xd0] sm:$0xff] %v1235
          %1268 = vst [vmem:[%s235 + $0xd8] sm:$0xff] %v1236
          %1269 = vst [vmem:[%s235 + $0xe0] sm:$0xff] %v1237
          %1270 = vst [vmem:[%s235 + $0xe8] sm:$0xff] %v1238
          %1271 = vst [vmem:[%s235 + $0xf0] sm:$0xff] %v1239
          %1272 = vst [vmem:[%s235 + $0xf8] sm:$0xff] %v1240
        $region44: #{_lambda_.4} parent=27 // pred_fallthru
          _
        %s1273 = smul.u32 32, %s22
        %s1274 = smul.u32 2, %s23
        %p1275 = scmp.lt.s32.totalorder %s1273, 63
        %s1276 = scalar_select %p1275, %s1273, 63
        %p1277 = scmp.lt.s32.totalorder %s1274, 1
        %s1278 = scalar_select %p1277, %s1274, 1
        %s1279 = smul.addr %s1276, 2
        %s1280 = sadd.s32 %s1278, %s1279
        %s1281 = smul.addr %s1280, 4
        %s1282 = scalar_lea.vmem %s2, %s1281
        // Predicated region
        $region45: #{_lambda_.4} parent=27 // pred_check
          %p1283 = pneg %p112
        $region46: #{_lambda_.4} parent=27 // pred_check_branch
          %1285 = sbr.rel (%p1283) target = $region48
        $region47: #{_lambda_.4} parent=27 // pred_region
          %s1286 = smul.u32 32, %s22
          %s1287 = smul.u32 2, %s23
        $region48: #{_lambda_.4} parent=27 // pred_fallthru
          _
      $region28: #{_lambda_.4} parent=5 // pred_fallthru
        _
      %p1288 = scmp.le.s32.totalorder 2, %s12
      // Predicated region
      $region49: #{_lambda_.4} parent=5 // pred_check
        %p1289 = pneg %p1288
      $region50: #{_lambda_.4} parent=5 // pred_check_branch
        %1291 = sbr.rel (%p1289) target = $region52
      $region51: #{_lambda_.4} parent=5 // pred_region
        %s1292 = ssub.s32 %s12, 2
        // Predicated region
        $region53: #{_lambda_.4} parent=51 // pred_check
          %p1293 = pneg %p118
        $region54: #{_lambda_.4} parent=51 // pred_check_branch
          %1295 = sbr.rel (%p1293) target = $region56
        $region55: #{_lambda_.4} parent=51 // pred_region
          %s1296 = smul.u32 32, %s25
          %s1297 = smul.u32 2, %s26
          %p1298 = scmp.lt.s32.totalorder %s1296, 63
          %s1299 = scalar_select %p1298, %s1296, 63
          %p1300 = scmp.lt.s32.totalorder %s1297, 1
          %s1301 = scalar_select %p1300, %s1297, 1
          %s1302 = smul.addr %s1299, 2
          %s1303 = sadd.s32 %s1301, %s1302
          %s1304 = smul.addr %s1303, 4
          %s1305 = scalar_lea.vmem %s2, %s1304
        $region56: #{_lambda_.4} parent=51 // pred_fallthru
          _
      $region52: #{_lambda_.4} parent=5 // pred_fallthru
        _
    $region6: #{_lambda_.4} parent=1 // loop_footer
      %s16 = sadd.s32 1, %s12
    $region7: #{_lambda_.4} parent=1 // loop_footer_branch
      %11 = sbr.rel target = $region3
    $region8: #{_lambda_.4} parent=1 // loop_exit
      _
    %1306 = vsyncpa [#allocation4], 1
    %s1307 = scalar_lea.sflag [#allocation4], 1
    %1308 = vsyncpa %s1307, 1
    %1309 = vsyncpa [#allocation6], 1

</llo_original>
